<compile_context>
chip_gen: v7x
topology: tpu7x:2x2x1
jax: 0.10.0
libtpu: 0.0.40
codegen_flags: <defaults>
</compile_context>

<pallas_src>
import functools

import jax
import jax.numpy as jnp
from jax import lax
from jax.experimental import pallas as pl
from jax.experimental.pallas import tpu as pltpu


# --------------------------------- kernel ------------------------------------


def _fused_kernel(xcol_ref, w1_ref, w2_ref, w3_ref, cvec_ref,
                  wh1_ref, hvec_ref, wh2_ref,
                  act3_ref, reco_ref, logits_ref,
                  *, B, T, K, H, NC, FCH):
    """Whole TempCNNWP2 forward (eval mode); every activation stays in VMEM."""
    pad = K // 2
    BT = B * T
    f32 = jnp.float32
    bf16 = jnp.bfloat16

    # Per-row time index of the folded (B*T, .) activation layout; used to mask
    # the rows that fall into the 'same' zero padding after a roll.
    t_idx = lax.broadcasted_iota(jnp.int32, (BT, 1), 0) % T

    def bn_relu(y, layer):
        s = cvec_ref[2 * layer:2 * layer + 1, :]        # (1, H) folded BN scale
        b = cvec_ref[2 * layer + 1:2 * layer + 2, :]    # (1, H) folded BN shift
        return jnp.maximum(y * s + b, 0.0)

    # ---- conv1: wrapper-built im2col slab -> one MXU matmul.
    a = bn_relu(
        jnp.dot(xcol_ref[...].astype(bf16), w1_ref[...],
                preferred_element_type=f32), 0)                    # (B*T, H)

    # ---- conv2 / conv3: 'same' conv as K masked-roll matmuls (no scatter,
    # no scratch, no masked partial stores).
    def conv_block(h, w_ref, layer):
        acc = None
        for k in range(K):
            d = k - pad                                  # tap offset in time
            if d == 0:
                hk = h
            else:
                # shifted[b*T + t] = h[b*T + t + d] (mod B*T); rows where t + d
                # falls outside [0, T) are zeroed -> 'same' zero padding and
                # no cross-batch wrap-around leakage.
                shifted = pltpu.roll(h, shift=(-d) % BT, axis=0)
                valid = (t_idx + d >= 0) & (t_idx + d < T)
                hk = jnp.where(valid, shifted, 0.0)
            term = jnp.dot(hk.astype(bf16), w_ref[k * H:(k + 1) * H, :],
                           preferred_element_type=f32)
            acc = term if acc is None else acc + term
        return bn_relu(acc, layer)

    a = conv_block(a, w2_ref, 1)
    a = conv_block(a, w3_ref, 2)                                   # (B*T, H)

    # ---- conv3 activation out: ONE full store.  emb (PyTorch flatten order)
    # is a free reshape/transpose of this buffer in the wrapper -- no in-kernel
    # (B*T, H) -> (B, T*H) relayout.
    act3_ref[...] = a

    # ---- fused head stage 1: [cls_fc1 | dis_fc1 | reco] in one logical
    # matmul, evaluated as T accumulated (B, H) x (H, 576) matmuls so the lhs
    # never has to be re-laid-out into a merged (B, T*H) row.  Head-weight ROWS
    # were permuted at init to this t-major order.
    out1 = 2 * FCH + reco_ref.shape[1]
    y1 = jnp.zeros((B, out1), f32)
    for t in range(T):
        lhs = jnp.concatenate(
            [act3_ref[b * T + t:b * T + t + 1, :] for b in range(B)], axis=0)
        y1 = y1 + jnp.dot(lhs.astype(bf16), wh1_ref[t * H:(t + 1) * H, :],
                          preferred_element_type=f32)
    y1 = y1 * hvec_ref[0:1, :] + hvec_ref[1:2, :]                  # (B, 576)

    # ---- stage 2: lane-aligned ReLU boundary (512) and block-diagonal
    # [cls_fc2 | dis_fc2] matmul; each output written with one full store.
    h1 = jnp.maximum(y1[:, :2 * FCH], 0.0)                         # (B, 512)
    reco_ref[...] = y1[:, 2 * FCH:]                                # (B, C*T)
    bias2 = cvec_ref[6:7, :2 * NC]                                 # (1, 2*NC)
    logits_ref[...] = jnp.dot(h1.astype(bf16), wh2_ref[...],
                              preferred_element_type=f32) + bias2


# --------------------------- parameter construction --------------------------


def _fold_bn(bias, gamma, beta, mean, var, eps=1e-5):
    # eval-mode BN applied after (y + bias): gamma*(y+bias-mean)/sqrt(var+eps)+beta
    s = gamma / jnp.sqrt(var + eps)
    return s, beta + s * (bias - mean)


def _bf16_round(w):
    # Quantize once so the bf16 kernel weights and the f32 reference use
    # bit-identical values.
    return w.astype(jnp.bfloat16).astype(jnp.float32)


def init_conv_block(key, cin, cout, ksize):
    k1, k2, k3, k4, k5, k6 = jax.random.split(key, 6)
    w = _bf16_round(0.1 * jax.random.normal(k1, (ksize, cin, cout), jnp.float32))
    b = 0.05 * jax.random.normal(k2, (cout,), jnp.float32)
    gamma = 1.0 + 0.1 * jax.random.normal(k3, (cout,), jnp.float32)
    beta = 0.05 * jax.random.normal(k4, (cout,), jnp.float32)
    mean = 0.05 * jax.random.normal(k5, (cout,), jnp.float32)
    var = 1.0 + 0.1 * jax.random.uniform(k6, (cout,), jnp.float32)
    s, sh = _fold_bn(b, gamma, beta, mean, var)
    # (K, Cin, Cout) -> (K*Cin, Cout); row index k*Cin + c matches the conv1
    # im2col columns and the per-tap row slices used for conv2/conv3.
    return w.reshape(ksize * cin, cout), s, sh


def init_linear_pt(key, din, dout, bn):
    """Linear (+ optional eval-mode BN folded), weight rows in PyTorch order."""
    k1, k2, k3, k4, k5, k6 = jax.random.split(key, 6)
    w = _bf16_round(jax.random.normal(k1, (din, dout), jnp.float32)
                    / jnp.sqrt(float(din)))
    b = 0.05 * jax.random.normal(k2, (dout,), jnp.float32)
    if bn:
        gamma = 1.0 + 0.1 * jax.random.normal(k3, (dout,), jnp.float32)
        beta = 0.05 * jax.random.normal(k4, (dout,), jnp.float32)
        mean = 0.05 * jax.random.normal(k5, (dout,), jnp.float32)
        var = 1.0 + 0.1 * jax.random.uniform(k6, (dout,), jnp.float32)
        s, sh = _fold_bn(b, gamma, beta, mean, var)
    else:
        s, sh = jnp.ones((dout,), jnp.float32), b
    return w, s, sh


def init_params(key, C, T, H, K, n_classes, fc_hidden=256):
    keys = jax.random.split(key, 8)
    w1, s1, b1 = init_conv_block(keys[0], C, H, K)
    w2, s2, b2 = init_conv_block(keys[1], H, H, K)
    w3, s3, b3 = init_conv_block(keys[2], H, H, K)

    din = H * T
    w_reco, _, b_reco = init_linear_pt(keys[3], din, C * T, bn=False)
    w_cls1, s_cls1, sh_cls1 = init_linear_pt(keys[4], din, fc_hidden, bn=True)
    w_dis1, s_dis1, sh_dis1 = init_linear_pt(keys[5], din, fc_hidden, bn=True)
    w_cls2, _, b_cls2 = init_linear_pt(keys[6], fc_hidden, n_classes, bn=False)
    w_dis2, _, b_dis2 = init_linear_pt(keys[7], fc_hidden, n_classes, bn=False)

    def to_natural(w):
        # rows: PyTorch flatten index h*T + t  ->  kernel-natural index t*H + h
        return w.reshape(H, T, -1).transpose(1, 0, 2).reshape(H * T, -1)

    # Packed head stage 1, columns [cls_fc1 | dis_fc1 | reco] so the ReLU /
    # no-ReLU split sits on a lane-aligned boundary (2*fc_hidden = 512).
    w_h1 = jnp.concatenate(
        [to_natural(w_cls1), to_natural(w_dis1), to_natural(w_reco)], axis=1)
    s_h1 = jnp.concatenate([s_cls1, s_dis1, jnp.ones((C * T,), jnp.float32)])
    b_h1 = jnp.concatenate([sh_cls1, sh_dis1, b_reco])
    hvec = jnp.stack([s_h1, b_h1], axis=0)                          # (2, 576)

    # Packed head stage 2: block-diagonal [cls_fc2 | dis_fc2].
    w_h2 = jnp.zeros((2 * fc_hidden, 2 * n_classes), jnp.float32)
    w_h2 = w_h2.at[:fc_hidden, :n_classes].set(w_cls2)
    w_h2 = w_h2.at[fc_hidden:, n_classes:].set(w_dis2)
    b_h2 = jnp.concatenate([b_cls2, b_dis2])                        # (2*NC,)

    # Conv BN scale/shift (+ fc2 bias) packed into one (8, H) slab.
    assert 2 * n_classes <= H
    cvec = jnp.zeros((8, H), jnp.float32)
    for i, v in enumerate((s1, b1, s2, b2, s3, b3)):
        cvec = cvec.at[i, :].set(v)
    cvec = cvec.at[6, :2 * n_classes].set(b_h2)

    bf16 = jnp.bfloat16
    params = {"w1": w1.astype(bf16), "w2": w2.astype(bf16),
              "w3": w3.astype(bf16), "cvec": cvec,
              "wh1": w_h1.astype(bf16), "hvec": hvec,
              "wh2": w_h2.astype(bf16)}
    # Un-fused, PyTorch-layout f32 copies (bf16-representable values) used only
    # by the pure-JAX reference check.
    ref = {"w1": w1, "s1": s1, "b1": b1, "w2": w2, "s2": s2, "b2": b2,
           "w3": w3, "s3": s3, "b3": b3,
           "w_reco": w_reco, "b_reco": b_reco,
           "w_cls1": w_cls1, "s_cls1": s_cls1, "sh_cls1": sh_cls1,
           "w_dis1": w_dis1, "s_dis1": s_dis1, "sh_dis1": sh_dis1,
           "w_cls2": w_cls2, "b_cls2": b_cls2,
           "w_dis2": w_dis2, "b_dis2": b_dis2}
    return params, ref


# ------------------------------- model forward --------------------------------


def tempcnn_wp2_forward(x, params):
    """x: (B, nchannels, nts) (PyTorch NCL). Returns (cls, discr, reco, emb)."""
    B, C, T = x.shape
    K = params["w1"].shape[0] // C
    H = params["w1"].shape[1]
    FCH = params["wh2"].shape[0] // 2
    NC = params["wh2"].shape[1] // 2
    pad = K // 2

    # Layer-1 im2col in XLA straight off the raw input (one tiny fused op): it
    # subsumes the NCL->NLC transpose and the 'same' zero padding, so the
    # kernel gets a matmul-ready (B*T, K*C) slab and never touches HBM again.
    x_tc = jnp.transpose(x, (0, 2, 1))                              # (B, T, C)
    x_p = jnp.pad(x_tc, ((0, 0), (pad, pad), (0, 0)))
    x_col = jnp.concatenate([x_p[:, k:k + T, :] for k in range(K)], axis=2)
    x_col = x_col.reshape(B * T, K * C).astype(jnp.float32)

    flat = (x_col, params["w1"], params["w2"], params["w3"], params["cvec"],
            params["wh1"], params["hvec"], params["wh2"])

    vmem = pl.BlockSpec(memory_space=pltpu.MemorySpace.VMEM)
    act3, reco, logits = pl.pallas_call(
        functools.partial(_fused_kernel, B=B, T=T, K=K, H=H, NC=NC, FCH=FCH),
        out_shape=(jax.ShapeDtypeStruct((B * T, H), jnp.float32),
                   jax.ShapeDtypeStruct((B, C * T), jnp.float32),
                   jax.ShapeDtypeStruct((B, 2 * NC), jnp.float32)),
        in_specs=[vmem] * len(flat),
        out_specs=(vmem, vmem, vmem),
    )(*flat)

    # PyTorch nn.Flatten() order (B, H*T): a free reshape/transpose of the
    # kernel's (B*T, H) activation output, done XLA-side outside the kernel.
    emb = act3.reshape(B, T, H).transpose(0, 2, 1).reshape(B, H * T)
    reco = reco.reshape(B, C, T)
    cls = logits[:, :NC]
    dis = logits[:, NC:]
    return cls, dis, reco, emb


# --------------------------- pure-JAX reference check -------------------------


def reference_forward(x, ref):
    """Straightforward jnp mirror of the PyTorch forward (eval mode)."""
    B, C, T = x.shape
    hi = jax.lax.Precision.HIGHEST

    def conv_block(h, wcol, scale, shift):          # h: (B, Cin, T) NCL
        cin = h.shape[1]
        kk = wcol.shape[0] // cin
        w = wcol.reshape(kk, cin, -1)
        p = kk // 2
        hp = jnp.pad(h, ((0, 0), (0, 0), (p, p)))
        acc = jnp.zeros((B, T, w.shape[2]), jnp.float32)
        for k in range(kk):
            acc = acc + jnp.einsum('bct,cf->btf', hp[:, :, k:k + T], w[k],
                                   precision=hi)
        y = jnp.maximum(acc * scale + shift, 0.0)
        return jnp.transpose(y, (0, 2, 1))          # (B, Cout, T)

    h = conv_block(x, ref["w1"], ref["s1"], ref["b1"])
    h = conv_block(h, ref["w2"], ref["s2"], ref["b2"])
    h = conv_block(h, ref["w3"], ref["s3"], ref["b3"])
    emb = h.reshape(B, -1)                          # nn.Flatten() order

    reco = jnp.dot(emb, ref["w_reco"], precision=hi) + ref["b_reco"]
    reco = reco.reshape(B, C, T)
    c1 = jnp.maximum(jnp.dot(emb, ref["w_cls1"], precision=hi) * ref["s_cls1"]
                     + ref["sh_cls1"], 0.0)
    cls = jnp.dot(c1, ref["w_cls2"], precision=hi) + ref["b_cls2"]
    d1 = jnp.maximum(jnp.dot(emb, ref["w_dis1"], precision=hi) * ref["s_dis1"]
                     + ref["sh_dis1"], 0.0)
    dis = jnp.dot(d1, ref["w_dis2"], precision=hi) + ref["b_dis2"]
    return cls, dis, reco, emb


# ------------------------------------ main ------------------------------------

if __name__ == "__main__":
    B, C, T = 2, 4, 16            # batch, nchannels, nts  (size = (C, T))
    H, NUM_CLASSES, K = 64, 8, 5  # hidden_dims, num_classes, kernel_size

    key = jax.random.PRNGKey(0)
    pkey, xkey = jax.random.split(key)
    params, ref = init_params(pkey, C, T, H, K, NUM_CLASSES)
    x = jax.random.normal(xkey, (B, C, T), jnp.float32)

    cls, dis, reco, emb = jax.jit(tempcnn_wp2_forward)(x, params)
    jax.block_until_ready((cls, dis, reco, emb))

    assert cls.shape == (B, NUM_CLASSES)
    assert dis.shape == (B, NUM_CLASSES)
    assert reco.shape == (B, C, T)
    assert emb.shape == (B, H * T)
    assert all(bool(jnp.all(jnp.isfinite(o))) for o in (cls, dis, reco, emb))

    # Validate the fused bf16-weight kernel against an f32 (precision=HIGHEST)
    # reference that uses the same bf16-rounded weight values.
    r_cls, r_dis, r_reco, r_emb = reference_forward(x, ref)
    for got, want in ((cls, r_cls), (dis, r_dis), (reco, r_reco), (emb, r_emb)):
        assert bool(jnp.allclose(got, want, rtol=2e-2, atol=2e-2))

    print("KERNEL_OK")
</pallas_src>

<mosaic_0001>
module attributes {stable_mosaic.version = 11 : i64} {
  func.func @_fused_kernel(%arg0: memref<32x20xf32, #tpu.memory_space<vmem>>, %arg1: memref<20x64xbf16, #tpu.memory_space<vmem>>, %arg2: memref<320x64xbf16, #tpu.memory_space<vmem>>, %arg3: memref<320x64xbf16, #tpu.memory_space<vmem>>, %arg4: memref<8x64xf32, #tpu.memory_space<vmem>>, %arg5: memref<1024x576xbf16, #tpu.memory_space<vmem>>, %arg6: memref<2x576xf32, #tpu.memory_space<vmem>>, %arg7: memref<512x16xbf16, #tpu.memory_space<vmem>>, %arg8: memref<32x64xf32, #tpu.memory_space<vmem>>, %arg9: memref<2x64xf32, #tpu.memory_space<vmem>>, %arg10: memref<2x16xf32, #tpu.memory_space<vmem>>) attributes {dimension_semantics = [], scalar_prefetch = 0 : i64, scratch_operands = 0 : i64, tpu.core_type = #tpu.core_type<tc>} {
    %0 = tpu.iota {dimensions = array<i32: 0>} : vector<32x1xi32>
    %c16_i32 = arith.constant 16 : i32
    %c0_i32 = arith.constant 0 : i32
    %1 = arith.cmpi eq, %c16_i32, %c0_i32 : i32
    %c1_i32 = arith.constant 1 : i32
    %2 = arith.select %1, %c1_i32, %c16_i32 : i32
    %3 = vector.broadcast %2 : i32 to vector<32x1xi32>
    %4 = arith.remsi %0, %3 : vector<32x1xi32>
    %c0_i32_0 = arith.constant 0 : i32
    %5 = vector.broadcast %c0_i32_0 : i32 to vector<32x1xi32>
    %6 = arith.cmpi ne, %4, %5 : vector<32x1xi32>
    %c0_i32_1 = arith.constant 0 : i32
    %7 = vector.broadcast %c0_i32_1 : i32 to vector<32x1xi32>
    %8 = arith.cmpi slt, %4, %7 : vector<32x1xi32>
    %c0_i32_2 = arith.constant 0 : i32
    %9 = arith.cmpi slt, %2, %c0_i32_2 : i32
    %10 = vector.broadcast %9 : i1 to vector<32x1xi1>
    %11 = vector.broadcast %10 : vector<32x1xi1> to vector<32x1xi1>
    %12 = arith.xori %8, %11 : vector<32x1xi1>
    %13 = arith.andi %12, %6 : vector<32x1xi1>
    %14 = vector.broadcast %2 : i32 to vector<32x1xi32>
    %15 = arith.addi %4, %14 : vector<32x1xi32>
    %16 = arith.select %13, %15, %4 : vector<32x1xi1>, vector<32x1xi32>
    %c0 = arith.constant 0 : index
    %c0_3 = arith.constant 0 : index
    %17 = vector.load %arg0[%c0, %c0_3] : memref<32x20xf32, #tpu.memory_space<vmem>>, vector<32x20xf32>
    %18 = arith.truncf %17 : vector<32x20xf32> to vector<32x20xbf16>
    %c0_4 = arith.constant 0 : index
    %c0_5 = arith.constant 0 : index
    %19 = vector.load %arg1[%c0_4, %c0_5] : memref<20x64xbf16, #tpu.memory_space<vmem>>, vector<20x64xbf16>
    %cst = arith.constant dense<0.000000e+00> : vector<32x64xf32>
    %20 = tpu.matmul %18, %19, %cst {dimension_numbers = #tpu.dot_dimension_numbers<[1], [0], [0], [1], [0, 0, 1, 1], [], []>} : vector<32x20xbf16>, vector<20x64xbf16>, vector<32x64xf32> -> vector<32x64xf32>
    %c0_6 = arith.constant 0 : index
    %c0_7 = arith.constant 0 : index
    %21 = vector.load %arg4[%c0_6, %c0_7] : memref<8x64xf32, #tpu.memory_space<vmem>>, vector<1x64xf32>
    %c1 = arith.constant 1 : index
    %c0_8 = arith.constant 0 : index
    %22 = vector.load %arg4[%c1, %c0_8] : memref<8x64xf32, #tpu.memory_space<vmem>>, vector<1x64xf32>
    %23 = vector.broadcast %21 : vector<1x64xf32> to vector<32x64xf32>
    %24 = arith.mulf %20, %23 : vector<32x64xf32>
    %25 = vector.broadcast %22 : vector<1x64xf32> to vector<32x64xf32>
    %26 = arith.addf %24, %25 : vector<32x64xf32>
    %cst_9 = arith.constant 0.000000e+00 : f32
    %27 = vector.broadcast %cst_9 : f32 to vector<32x64xf32>
    %28 = arith.maximumf %26, %27 : vector<32x64xf32>
    %c2_i32 = arith.constant 2 : i32
    %29 = tpu.dynamic_rotate %28 by %c2_i32 dim 0 : vector<32x64xf32>, i32 -> vector<32x64xf32>
    %c-2_i32 = arith.constant -2 : i32
    %30 = vector.broadcast %c-2_i32 : i32 to vector<32x1xi32>
    %31 = arith.addi %16, %30 : vector<32x1xi32>
    %c0_i32_10 = arith.constant 0 : i32
    %32 = vector.broadcast %c0_i32_10 : i32 to vector<32x1xi32>
    %33 = arith.cmpi sge, %31, %32 : vector<32x1xi32>
    %c-2_i32_11 = arith.constant -2 : i32
    %34 = vector.broadcast %c-2_i32_11 : i32 to vector<32x1xi32>
    %35 = arith.addi %16, %34 : vector<32x1xi32>
    %c16_i32_12 = arith.constant 16 : i32
    %36 = vector.broadcast %c16_i32_12 : i32 to vector<32x1xi32>
    %37 = arith.cmpi slt, %35, %36 : vector<32x1xi32>
    %38 = arith.andi %33, %37 : vector<32x1xi1>
    %cst_13 = arith.constant 0.000000e+00 : f32
    %39 = vector.shape_cast %38 : vector<32x1xi1> to vector<32x1xi1>
    %40 = vector.broadcast %39 : vector<32x1xi1> to vector<32x64xi1>
    %41 = vector.broadcast %cst_13 : f32 to vector<32x64xf32>
    %42 = arith.select %40, %29, %41 : vector<32x64xi1>, vector<32x64xf32>
    %43 = arith.truncf %42 : vector<32x64xf32> to vector<32x64xbf16>
    %c0_14 = arith.constant 0 : index
    %c0_15 = arith.constant 0 : index
    %44 = vector.load %arg2[%c0_14, %c0_15] : memref<320x64xbf16, #tpu.memory_space<vmem>>, vector<64x64xbf16>
    %cst_16 = arith.constant dense<0.000000e+00> : vector<32x64xf32>
    %45 = tpu.matmul %43, %44, %cst_16 {dimension_numbers = #tpu.dot_dimension_numbers<[1], [0], [0], [1], [0, 0, 1, 1], [], []>} : vector<32x64xbf16>, vector<64x64xbf16>, vector<32x64xf32> -> vector<32x64xf32>
    %c1_i32_17 = arith.constant 1 : i32
    %46 = tpu.dynamic_rotate %28 by %c1_i32_17 dim 0 : vector<32x64xf32>, i32 -> vector<32x64xf32>
    %c-1_i32 = arith.constant -1 : i32
    %47 = vector.broadcast %c-1_i32 : i32 to vector<32x1xi32>
    %48 = arith.addi %16, %47 : vector<32x1xi32>
    %c0_i32_18 = arith.constant 0 : i32
    %49 = vector.broadcast %c0_i32_18 : i32 to vector<32x1xi32>
    %50 = arith.cmpi sge, %48, %49 : vector<32x1xi32>
    %c-1_i32_19 = arith.constant -1 : i32
    %51 = vector.broadcast %c-1_i32_19 : i32 to vector<32x1xi32>
    %52 = arith.addi %16, %51 : vector<32x1xi32>
    %c16_i32_20 = arith.constant 16 : i32
    %53 = vector.broadcast %c16_i32_20 : i32 to vector<32x1xi32>
    %54 = arith.cmpi slt, %52, %53 : vector<32x1xi32>
    %55 = arith.andi %50, %54 : vector<32x1xi1>
    %cst_21 = arith.constant 0.000000e+00 : f32
    %56 = vector.shape_cast %55 : vector<32x1xi1> to vector<32x1xi1>
    %57 = vector.broadcast %56 : vector<32x1xi1> to vector<32x64xi1>
    %58 = vector.broadcast %cst_21 : f32 to vector<32x64xf32>
    %59 = arith.select %57, %46, %58 : vector<32x64xi1>, vector<32x64xf32>
    %60 = arith.truncf %59 : vector<32x64xf32> to vector<32x64xbf16>
    %c64 = arith.constant 64 : index
    %c0_22 = arith.constant 0 : index
    %61 = vector.load %arg2[%c64, %c0_22] : memref<320x64xbf16, #tpu.memory_space<vmem>>, vector<64x64xbf16>
    %cst_23 = arith.constant dense<0.000000e+00> : vector<32x64xf32>
    %62 = tpu.matmul %60, %61, %cst_23 {dimension_numbers = #tpu.dot_dimension_numbers<[1], [0], [0], [1], [0, 0, 1, 1], [], []>} : vector<32x64xbf16>, vector<64x64xbf16>, vector<32x64xf32> -> vector<32x64xf32>
    %63 = arith.addf %45, %62 : vector<32x64xf32>
    %64 = arith.truncf %28 : vector<32x64xf32> to vector<32x64xbf16>
    %c128 = arith.constant 128 : index
    %c0_24 = arith.constant 0 : index
    %65 = vector.load %arg2[%c128, %c0_24] : memref<320x64xbf16, #tpu.memory_space<vmem>>, vector<64x64xbf16>
    %cst_25 = arith.constant dense<0.000000e+00> : vector<32x64xf32>
    %66 = tpu.matmul %64, %65, %cst_25 {dimension_numbers = #tpu.dot_dimension_numbers<[1], [0], [0], [1], [0, 0, 1, 1], [], []>} : vector<32x64xbf16>, vector<64x64xbf16>, vector<32x64xf32> -> vector<32x64xf32>
    %67 = arith.addf %63, %66 : vector<32x64xf32>
    %c31_i32 = arith.constant 31 : i32
    %68 = tpu.dynamic_rotate %28 by %c31_i32 dim 0 : vector<32x64xf32>, i32 -> vector<32x64xf32>
    %c1_i32_26 = arith.constant 1 : i32
    %69 = vector.broadcast %c1_i32_26 : i32 to vector<32x1xi32>
    %70 = arith.addi %16, %69 : vector<32x1xi32>
    %c0_i32_27 = arith.constant 0 : i32
    %71 = vector.broadcast %c0_i32_27 : i32 to vector<32x1xi32>
    %72 = arith.cmpi sge, %70, %71 : vector<32x1xi32>
    %c1_i32_28 = arith.constant 1 : i32
    %73 = vector.broadcast %c1_i32_28 : i32 to vector<32x1xi32>
    %74 = arith.addi %16, %73 : vector<32x1xi32>
    %c16_i32_29 = arith.constant 16 : i32
    %75 = vector.broadcast %c16_i32_29 : i32 to vector<32x1xi32>
    %76 = arith.cmpi slt, %74, %75 : vector<32x1xi32>
    %77 = arith.andi %72, %76 : vector<32x1xi1>
    %cst_30 = arith.constant 0.000000e+00 : f32
    %78 = vector.shape_cast %77 : vector<32x1xi1> to vector<32x1xi1>
    %79 = vector.broadcast %78 : vector<32x1xi1> to vector<32x64xi1>
    %80 = vector.broadcast %cst_30 : f32 to vector<32x64xf32>
    %81 = arith.select %79, %68, %80 : vector<32x64xi1>, vector<32x64xf32>
    %82 = arith.truncf %81 : vector<32x64xf32> to vector<32x64xbf16>
    %c192 = arith.constant 192 : index
    %c0_31 = arith.constant 0 : index
    %83 = vector.load %arg2[%c192, %c0_31] : memref<320x64xbf16, #tpu.memory_space<vmem>>, vector<64x64xbf16>
    %cst_32 = arith.constant dense<0.000000e+00> : vector<32x64xf32>
    %84 = tpu.matmul %82, %83, %cst_32 {dimension_numbers = #tpu.dot_dimension_numbers<[1], [0], [0], [1], [0, 0, 1, 1], [], []>} : vector<32x64xbf16>, vector<64x64xbf16>, vector<32x64xf32> -> vector<32x64xf32>
    %85 = arith.addf %67, %84 : vector<32x64xf32>
    %c30_i32 = arith.constant 30 : i32
    %86 = tpu.dynamic_rotate %28 by %c30_i32 dim 0 : vector<32x64xf32>, i32 -> vector<32x64xf32>
    %c2_i32_33 = arith.constant 2 : i32
    %87 = vector.broadcast %c2_i32_33 : i32 to vector<32x1xi32>
    %88 = arith.addi %16, %87 : vector<32x1xi32>
    %c0_i32_34 = arith.constant 0 : i32
    %89 = vector.broadcast %c0_i32_34 : i32 to vector<32x1xi32>
    %90 = arith.cmpi sge, %88, %89 : vector<32x1xi32>
    %c2_i32_35 = arith.constant 2 : i32
    %91 = vector.broadcast %c2_i32_35 : i32 to vector<32x1xi32>
    %92 = arith.addi %16, %91 : vector<32x1xi32>
    %c16_i32_36 = arith.constant 16 : i32
    %93 = vector.broadcast %c16_i32_36 : i32 to vector<32x1xi32>
    %94 = arith.cmpi slt, %92, %93 : vector<32x1xi32>
    %95 = arith.andi %90, %94 : vector<32x1xi1>
    %cst_37 = arith.constant 0.000000e+00 : f32
    %96 = vector.shape_cast %95 : vector<32x1xi1> to vector<32x1xi1>
    %97 = vector.broadcast %96 : vector<32x1xi1> to vector<32x64xi1>
    %98 = vector.broadcast %cst_37 : f32 to vector<32x64xf32>
    %99 = arith.select %97, %86, %98 : vector<32x64xi1>, vector<32x64xf32>
    %100 = arith.truncf %99 : vector<32x64xf32> to vector<32x64xbf16>
    %c256 = arith.constant 256 : index
    %c0_38 = arith.constant 0 : index
    %101 = vector.load %arg2[%c256, %c0_38] : memref<320x64xbf16, #tpu.memory_space<vmem>>, vector<64x64xbf16>
    %cst_39 = arith.constant dense<0.000000e+00> : vector<32x64xf32>
    %102 = tpu.matmul %100, %101, %cst_39 {dimension_numbers = #tpu.dot_dimension_numbers<[1], [0], [0], [1], [0, 0, 1, 1], [], []>} : vector<32x64xbf16>, vector<64x64xbf16>, vector<32x64xf32> -> vector<32x64xf32>
    %103 = arith.addf %85, %102 : vector<32x64xf32>
    %c2 = arith.constant 2 : index
    %c0_40 = arith.constant 0 : index
    %104 = vector.load %arg4[%c2, %c0_40] : memref<8x64xf32, #tpu.memory_space<vmem>>, vector<1x64xf32>
    %c3 = arith.constant 3 : index
    %c0_41 = arith.constant 0 : index
    %105 = vector.load %arg4[%c3, %c0_41] : memref<8x64xf32, #tpu.memory_space<vmem>>, vector<1x64xf32>
    %106 = vector.broadcast %104 : vector<1x64xf32> to vector<32x64xf32>
    %107 = arith.mulf %103, %106 : vector<32x64xf32>
    %108 = vector.broadcast %105 : vector<1x64xf32> to vector<32x64xf32>
    %109 = arith.addf %107, %108 : vector<32x64xf32>
    %cst_42 = arith.constant 0.000000e+00 : f32
    %110 = vector.broadcast %cst_42 : f32 to vector<32x64xf32>
    %111 = arith.maximumf %109, %110 : vector<32x64xf32>
    %c2_i32_43 = arith.constant 2 : i32
    %112 = tpu.dynamic_rotate %111 by %c2_i32_43 dim 0 : vector<32x64xf32>, i32 -> vector<32x64xf32>
    %c-2_i32_44 = arith.constant -2 : i32
    %113 = vector.broadcast %c-2_i32_44 : i32 to vector<32x1xi32>
    %114 = arith.addi %16, %113 : vector<32x1xi32>
    %c0_i32_45 = arith.constant 0 : i32
    %115 = vector.broadcast %c0_i32_45 : i32 to vector<32x1xi32>
    %116 = arith.cmpi sge, %114, %115 : vector<32x1xi32>
    %c-2_i32_46 = arith.constant -2 : i32
    %117 = vector.broadcast %c-2_i32_46 : i32 to vector<32x1xi32>
    %118 = arith.addi %16, %117 : vector<32x1xi32>
    %c16_i32_47 = arith.constant 16 : i32
    %119 = vector.broadcast %c16_i32_47 : i32 to vector<32x1xi32>
    %120 = arith.cmpi slt, %118, %119 : vector<32x1xi32>
    %121 = arith.andi %116, %120 : vector<32x1xi1>
    %cst_48 = arith.constant 0.000000e+00 : f32
    %122 = vector.shape_cast %121 : vector<32x1xi1> to vector<32x1xi1>
    %123 = vector.broadcast %122 : vector<32x1xi1> to vector<32x64xi1>
    %124 = vector.broadcast %cst_48 : f32 to vector<32x64xf32>
    %125 = arith.select %123, %112, %124 : vector<32x64xi1>, vector<32x64xf32>
    %126 = arith.truncf %125 : vector<32x64xf32> to vector<32x64xbf16>
    %c0_49 = arith.constant 0 : index
    %c0_50 = arith.constant 0 : index
    %127 = vector.load %arg3[%c0_49, %c0_50] : memref<320x64xbf16, #tpu.memory_space<vmem>>, vector<64x64xbf16>
    %cst_51 = arith.constant dense<0.000000e+00> : vector<32x64xf32>
    %128 = tpu.matmul %126, %127, %cst_51 {dimension_numbers = #tpu.dot_dimension_numbers<[1], [0], [0], [1], [0, 0, 1, 1], [], []>} : vector<32x64xbf16>, vector<64x64xbf16>, vector<32x64xf32> -> vector<32x64xf32>
    %c1_i32_52 = arith.constant 1 : i32
    %129 = tpu.dynamic_rotate %111 by %c1_i32_52 dim 0 : vector<32x64xf32>, i32 -> vector<32x64xf32>
    %c-1_i32_53 = arith.constant -1 : i32
    %130 = vector.broadcast %c-1_i32_53 : i32 to vector<32x1xi32>
    %131 = arith.addi %16, %130 : vector<32x1xi32>
    %c0_i32_54 = arith.constant 0 : i32
    %132 = vector.broadcast %c0_i32_54 : i32 to vector<32x1xi32>
    %133 = arith.cmpi sge, %131, %132 : vector<32x1xi32>
    %c-1_i32_55 = arith.constant -1 : i32
    %134 = vector.broadcast %c-1_i32_55 : i32 to vector<32x1xi32>
    %135 = arith.addi %16, %134 : vector<32x1xi32>
    %c16_i32_56 = arith.constant 16 : i32
    %136 = vector.broadcast %c16_i32_56 : i32 to vector<32x1xi32>
    %137 = arith.cmpi slt, %135, %136 : vector<32x1xi32>
    %138 = arith.andi %133, %137 : vector<32x1xi1>
    %cst_57 = arith.constant 0.000000e+00 : f32
    %139 = vector.shape_cast %138 : vector<32x1xi1> to vector<32x1xi1>
    %140 = vector.broadcast %139 : vector<32x1xi1> to vector<32x64xi1>
    %141 = vector.broadcast %cst_57 : f32 to vector<32x64xf32>
    %142 = arith.select %140, %129, %141 : vector<32x64xi1>, vector<32x64xf32>
    %143 = arith.truncf %142 : vector<32x64xf32> to vector<32x64xbf16>
    %c64_58 = arith.constant 64 : index
    %c0_59 = arith.constant 0 : index
    %144 = vector.load %arg3[%c64_58, %c0_59] : memref<320x64xbf16, #tpu.memory_space<vmem>>, vector<64x64xbf16>
    %cst_60 = arith.constant dense<0.000000e+00> : vector<32x64xf32>
    %145 = tpu.matmul %143, %144, %cst_60 {dimension_numbers = #tpu.dot_dimension_numbers<[1], [0], [0], [1], [0, 0, 1, 1], [], []>} : vector<32x64xbf16>, vector<64x64xbf16>, vector<32x64xf32> -> vector<32x64xf32>
    %146 = arith.addf %128, %145 : vector<32x64xf32>
    %147 = arith.truncf %111 : vector<32x64xf32> to vector<32x64xbf16>
    %c128_61 = arith.constant 128 : index
    %c0_62 = arith.constant 0 : index
    %148 = vector.load %arg3[%c128_61, %c0_62] : memref<320x64xbf16, #tpu.memory_space<vmem>>, vector<64x64xbf16>
    %cst_63 = arith.constant dense<0.000000e+00> : vector<32x64xf32>
    %149 = tpu.matmul %147, %148, %cst_63 {dimension_numbers = #tpu.dot_dimension_numbers<[1], [0], [0], [1], [0, 0, 1, 1], [], []>} : vector<32x64xbf16>, vector<64x64xbf16>, vector<32x64xf32> -> vector<32x64xf32>
    %150 = arith.addf %146, %149 : vector<32x64xf32>
    %c31_i32_64 = arith.constant 31 : i32
    %151 = tpu.dynamic_rotate %111 by %c31_i32_64 dim 0 : vector<32x64xf32>, i32 -> vector<32x64xf32>
    %c1_i32_65 = arith.constant 1 : i32
    %152 = vector.broadcast %c1_i32_65 : i32 to vector<32x1xi32>
    %153 = arith.addi %16, %152 : vector<32x1xi32>
    %c0_i32_66 = arith.constant 0 : i32
    %154 = vector.broadcast %c0_i32_66 : i32 to vector<32x1xi32>
    %155 = arith.cmpi sge, %153, %154 : vector<32x1xi32>
    %c1_i32_67 = arith.constant 1 : i32
    %156 = vector.broadcast %c1_i32_67 : i32 to vector<32x1xi32>
    %157 = arith.addi %16, %156 : vector<32x1xi32>
    %c16_i32_68 = arith.constant 16 : i32
    %158 = vector.broadcast %c16_i32_68 : i32 to vector<32x1xi32>
    %159 = arith.cmpi slt, %157, %158 : vector<32x1xi32>
    %160 = arith.andi %155, %159 : vector<32x1xi1>
    %cst_69 = arith.constant 0.000000e+00 : f32
    %161 = vector.shape_cast %160 : vector<32x1xi1> to vector<32x1xi1>
    %162 = vector.broadcast %161 : vector<32x1xi1> to vector<32x64xi1>
    %163 = vector.broadcast %cst_69 : f32 to vector<32x64xf32>
    %164 = arith.select %162, %151, %163 : vector<32x64xi1>, vector<32x64xf32>
    %165 = arith.truncf %164 : vector<32x64xf32> to vector<32x64xbf16>
    %c192_70 = arith.constant 192 : index
    %c0_71 = arith.constant 0 : index
    %166 = vector.load %arg3[%c192_70, %c0_71] : memref<320x64xbf16, #tpu.memory_space<vmem>>, vector<64x64xbf16>
    %cst_72 = arith.constant dense<0.000000e+00> : vector<32x64xf32>
    %167 = tpu.matmul %165, %166, %cst_72 {dimension_numbers = #tpu.dot_dimension_numbers<[1], [0], [0], [1], [0, 0, 1, 1], [], []>} : vector<32x64xbf16>, vector<64x64xbf16>, vector<32x64xf32> -> vector<32x64xf32>
    %168 = arith.addf %150, %167 : vector<32x64xf32>
    %c30_i32_73 = arith.constant 30 : i32
    %169 = tpu.dynamic_rotate %111 by %c30_i32_73 dim 0 : vector<32x64xf32>, i32 -> vector<32x64xf32>
    %c2_i32_74 = arith.constant 2 : i32
    %170 = vector.broadcast %c2_i32_74 : i32 to vector<32x1xi32>
    %171 = arith.addi %16, %170 : vector<32x1xi32>
    %c0_i32_75 = arith.constant 0 : i32
    %172 = vector.broadcast %c0_i32_75 : i32 to vector<32x1xi32>
    %173 = arith.cmpi sge, %171, %172 : vector<32x1xi32>
    %c2_i32_76 = arith.constant 2 : i32
    %174 = vector.broadcast %c2_i32_76 : i32 to vector<32x1xi32>
    %175 = arith.addi %16, %174 : vector<32x1xi32>
    %c16_i32_77 = arith.constant 16 : i32
    %176 = vector.broadcast %c16_i32_77 : i32 to vector<32x1xi32>
    %177 = arith.cmpi slt, %175, %176 : vector<32x1xi32>
    %178 = arith.andi %173, %177 : vector<32x1xi1>
    %cst_78 = arith.constant 0.000000e+00 : f32
    %179 = vector.shape_cast %178 : vector<32x1xi1> to vector<32x1xi1>
    %180 = vector.broadcast %179 : vector<32x1xi1> to vector<32x64xi1>
    %181 = vector.broadcast %cst_78 : f32 to vector<32x64xf32>
    %182 = arith.select %180, %169, %181 : vector<32x64xi1>, vector<32x64xf32>
    %183 = arith.truncf %182 : vector<32x64xf32> to vector<32x64xbf16>
    %c256_79 = arith.constant 256 : index
    %c0_80 = arith.constant 0 : index
    %184 = vector.load %arg3[%c256_79, %c0_80] : memref<320x64xbf16, #tpu.memory_space<vmem>>, vector<64x64xbf16>
    %cst_81 = arith.constant dense<0.000000e+00> : vector<32x64xf32>
    %185 = tpu.matmul %183, %184, %cst_81 {dimension_numbers = #tpu.dot_dimension_numbers<[1], [0], [0], [1], [0, 0, 1, 1], [], []>} : vector<32x64xbf16>, vector<64x64xbf16>, vector<32x64xf32> -> vector<32x64xf32>
    %186 = arith.addf %168, %185 : vector<32x64xf32>
    %c4 = arith.constant 4 : index
    %c0_82 = arith.constant 0 : index
    %187 = vector.load %arg4[%c4, %c0_82] : memref<8x64xf32, #tpu.memory_space<vmem>>, vector<1x64xf32>
    %c5 = arith.constant 5 : index
    %c0_83 = arith.constant 0 : index
    %188 = vector.load %arg4[%c5, %c0_83] : memref<8x64xf32, #tpu.memory_space<vmem>>, vector<1x64xf32>
    %189 = vector.broadcast %187 : vector<1x64xf32> to vector<32x64xf32>
    %190 = arith.mulf %186, %189 : vector<32x64xf32>
    %191 = vector.broadcast %188 : vector<1x64xf32> to vector<32x64xf32>
    %192 = arith.addf %190, %191 : vector<32x64xf32>
    %cst_84 = arith.constant 0.000000e+00 : f32
    %193 = vector.broadcast %cst_84 : f32 to vector<32x64xf32>
    %194 = arith.maximumf %192, %193 : vector<32x64xf32>
    %c0_85 = arith.constant 0 : index
    %c0_86 = arith.constant 0 : index
    %195 = vector.load %arg8[%c0_85, %c0_86] : memref<32x64xf32, #tpu.memory_space<vmem>>, vector<32x64xf32>
    tpu.vector_store %arg8[%c0_85, %c0_86], %194 {strides = array<i32>} : memref<32x64xf32, #tpu.memory_space<vmem>>, vector<32x64xf32>,
    %cst_87 = arith.constant 0.000000e+00 : f32
    %196 = vector.broadcast %cst_87 : f32 to vector<2x576xf32>
    %c0_88 = arith.constant 0 : index
    %c0_89 = arith.constant 0 : index
    %197 = vector.load %arg8[%c0_88, %c0_89] : memref<32x64xf32, #tpu.memory_space<vmem>>, vector<1x64xf32>
    %c16 = arith.constant 16 : index
    %c0_90 = arith.constant 0 : index
    %198 = vector.load %arg8[%c16, %c0_90] : memref<32x64xf32, #tpu.memory_space<vmem>>, vector<1x64xf32>
    %199 = tpu.concatenate %197, %198 in 0 : vector<1x64xf32>, vector<1x64xf32> -> vector<2x64xf32>
    %200 = arith.truncf %199 : vector<2x64xf32> to vector<2x64xbf16>
    %c0_91 = arith.constant 0 : index
    %c0_92 = arith.constant 0 : index
    %201 = vector.load %arg5[%c0_91, %c0_92] : memref<1024x576xbf16, #tpu.memory_space<vmem>>, vector<64x576xbf16>
    %cst_93 = arith.constant dense<0.000000e+00> : vector<2x576xf32>
    %202 = tpu.matmul %200, %201, %cst_93 {dimension_numbers = #tpu.dot_dimension_numbers<[1], [0], [0], [1], [0, 0, 1, 1], [], []>} : vector<2x64xbf16>, vector<64x576xbf16>, vector<2x576xf32> -> vector<2x576xf32>
    %203 = arith.addf %196, %202 : vector<2x576xf32>
    %c1_94 = arith.constant 1 : index
    %c0_95 = arith.constant 0 : index
    %204 = vector.load %arg8[%c1_94, %c0_95] : memref<32x64xf32, #tpu.memory_space<vmem>>, vector<1x64xf32>
    %c17 = arith.constant 17 : index
    %c0_96 = arith.constant 0 : index
    %205 = vector.load %arg8[%c17, %c0_96] : memref<32x64xf32, #tpu.memory_space<vmem>>, vector<1x64xf32>
    %206 = tpu.concatenate %204, %205 in 0 : vector<1x64xf32>, vector<1x64xf32> -> vector<2x64xf32>
    %207 = arith.truncf %206 : vector<2x64xf32> to vector<2x64xbf16>
    %c64_97 = arith.constant 64 : index
    %c0_98 = arith.constant 0 : index
    %208 = vector.load %arg5[%c64_97, %c0_98] : memref<1024x576xbf16, #tpu.memory_space<vmem>>, vector<64x576xbf16>
    %cst_99 = arith.constant dense<0.000000e+00> : vector<2x576xf32>
    %209 = tpu.matmul %207, %208, %cst_99 {dimension_numbers = #tpu.dot_dimension_numbers<[1], [0], [0], [1], [0, 0, 1, 1], [], []>} : vector<2x64xbf16>, vector<64x576xbf16>, vector<2x576xf32> -> vector<2x576xf32>
    %210 = arith.addf %203, %209 : vector<2x576xf32>
    %c2_100 = arith.constant 2 : index
    %c0_101 = arith.constant 0 : index
    %211 = vector.load %arg8[%c2_100, %c0_101] : memref<32x64xf32, #tpu.memory_space<vmem>>, vector<1x64xf32>
    %c18 = arith.constant 18 : index
    %c0_102 = arith.constant 0 : index
    %212 = vector.load %arg8[%c18, %c0_102] : memref<32x64xf32, #tpu.memory_space<vmem>>, vector<1x64xf32>
    %213 = tpu.concatenate %211, %212 in 0 : vector<1x64xf32>, vector<1x64xf32> -> vector<2x64xf32>
    %214 = arith.truncf %213 : vector<2x64xf32> to vector<2x64xbf16>
    %c128_103 = arith.constant 128 : index
    %c0_104 = arith.constant 0 : index
    %215 = vector.load %arg5[%c128_103, %c0_104] : memref<1024x576xbf16, #tpu.memory_space<vmem>>, vector<64x576xbf16>
    %cst_105 = arith.constant dense<0.000000e+00> : vector<2x576xf32>
    %216 = tpu.matmul %214, %215, %cst_105 {dimension_numbers = #tpu.dot_dimension_numbers<[1], [0], [0], [1], [0, 0, 1, 1], [], []>} : vector<2x64xbf16>, vector<64x576xbf16>, vector<2x576xf32> -> vector<2x576xf32>
    %217 = arith.addf %210, %216 : vector<2x576xf32>
    %c3_106 = arith.constant 3 : index
    %c0_107 = arith.constant 0 : index
    %218 = vector.load %arg8[%c3_106, %c0_107] : memref<32x64xf32, #tpu.memory_space<vmem>>, vector<1x64xf32>
    %c19 = arith.constant 19 : index
    %c0_108 = arith.constant 0 : index
    %219 = vector.load %arg8[%c19, %c0_108] : memref<32x64xf32, #tpu.memory_space<vmem>>, vector<1x64xf32>
    %220 = tpu.concatenate %218, %219 in 0 : vector<1x64xf32>, vector<1x64xf32> -> vector<2x64xf32>
    %221 = arith.truncf %220 : vector<2x64xf32> to vector<2x64xbf16>
    %c192_109 = arith.constant 192 : index
    %c0_110 = arith.constant 0 : index
    %222 = vector.load %arg5[%c192_109, %c0_110] : memref<1024x576xbf16, #tpu.memory_space<vmem>>, vector<64x576xbf16>
    %cst_111 = arith.constant dense<0.000000e+00> : vector<2x576xf32>
    %223 = tpu.matmul %221, %222, %cst_111 {dimension_numbers = #tpu.dot_dimension_numbers<[1], [0], [0], [1], [0, 0, 1, 1], [], []>} : vector<2x64xbf16>, vector<64x576xbf16>, vector<2x576xf32> -> vector<2x576xf32>
    %224 = arith.addf %217, %223 : vector<2x576xf32>
    %c4_112 = arith.constant 4 : index
    %c0_113 = arith.constant 0 : index
    %225 = vector.load %arg8[%c4_112, %c0_113] : memref<32x64xf32, #tpu.memory_space<vmem>>, vector<1x64xf32>
    %c20 = arith.constant 20 : index
    %c0_114 = arith.constant 0 : index
    %226 = vector.load %arg8[%c20, %c0_114] : memref<32x64xf32, #tpu.memory_space<vmem>>, vector<1x64xf32>
    %227 = tpu.concatenate %225, %226 in 0 : vector<1x64xf32>, vector<1x64xf32> -> vector<2x64xf32>
    %228 = arith.truncf %227 : vector<2x64xf32> to vector<2x64xbf16>
    %c256_115 = arith.constant 256 : index
    %c0_116 = arith.constant 0 : index
    %229 = vector.load %arg5[%c256_115, %c0_116] : memref<1024x576xbf16, #tpu.memory_space<vmem>>, vector<64x576xbf16>
    %cst_117 = arith.constant dense<0.000000e+00> : vector<2x576xf32>
    %230 = tpu.matmul %228, %229, %cst_117 {dimension_numbers = #tpu.dot_dimension_numbers<[1], [0], [0], [1], [0, 0, 1, 1], [], []>} : vector<2x64xbf16>, vector<64x576xbf16>, vector<2x576xf32> -> vector<2x576xf32>
    %231 = arith.addf %224, %230 : vector<2x576xf32>
    %c5_118 = arith.constant 5 : index
    %c0_119 = arith.constant 0 : index
    %232 = vector.load %arg8[%c5_118, %c0_119] : memref<32x64xf32, #tpu.memory_space<vmem>>, vector<1x64xf32>
    %c21 = arith.constant 21 : index
    %c0_120 = arith.constant 0 : index
    %233 = vector.load %arg8[%c21, %c0_120] : memref<32x64xf32, #tpu.memory_space<vmem>>, vector<1x64xf32>
    %234 = tpu.concatenate %232, %233 in 0 : vector<1x64xf32>, vector<1x64xf32> -> vector<2x64xf32>
    %235 = arith.truncf %234 : vector<2x64xf32> to vector<2x64xbf16>
    %c320 = arith.constant 320 : index
    %c0_121 = arith.constant 0 : index
    %236 = vector.load %arg5[%c320, %c0_121] : memref<1024x576xbf16, #tpu.memory_space<vmem>>, vector<64x576xbf16>
    %cst_122 = arith.constant dense<0.000000e+00> : vector<2x576xf32>
    %237 = tpu.matmul %235, %236, %cst_122 {dimension_numbers = #tpu.dot_dimension_numbers<[1], [0], [0], [1], [0, 0, 1, 1], [], []>} : vector<2x64xbf16>, vector<64x576xbf16>, vector<2x576xf32> -> vector<2x576xf32>
    %238 = arith.addf %231, %237 : vector<2x576xf32>
    %c6 = arith.constant 6 : index
    %c0_123 = arith.constant 0 : index
    %239 = vector.load %arg8[%c6, %c0_123] : memref<32x64xf32, #tpu.memory_space<vmem>>, vector<1x64xf32>
    %c22 = arith.constant 22 : index
    %c0_124 = arith.constant 0 : index
    %240 = vector.load %arg8[%c22, %c0_124] : memref<32x64xf32, #tpu.memory_space<vmem>>, vector<1x64xf32>
    %241 = tpu.concatenate %239, %240 in 0 : vector<1x64xf32>, vector<1x64xf32> -> vector<2x64xf32>
    %242 = arith.truncf %241 : vector<2x64xf32> to vector<2x64xbf16>
    %c384 = arith.constant 384 : index
    %c0_125 = arith.constant 0 : index
    %243 = vector.load %arg5[%c384, %c0_125] : memref<1024x576xbf16, #tpu.memory_space<vmem>>, vector<64x576xbf16>
    %cst_126 = arith.constant dense<0.000000e+00> : vector<2x576xf32>
    %244 = tpu.matmul %242, %243, %cst_126 {dimension_numbers = #tpu.dot_dimension_numbers<[1], [0], [0], [1], [0, 0, 1, 1], [], []>} : vector<2x64xbf16>, vector<64x576xbf16>, vector<2x576xf32> -> vector<2x576xf32>
    %245 = arith.addf %238, %244 : vector<2x576xf32>
    %c7 = arith.constant 7 : index
    %c0_127 = arith.constant 0 : index
    %246 = vector.load %arg8[%c7, %c0_127] : memref<32x64xf32, #tpu.memory_space<vmem>>, vector<1x64xf32>
    %c23 = arith.constant 23 : index
    %c0_128 = arith.constant 0 : index
    %247 = vector.load %arg8[%c23, %c0_128] : memref<32x64xf32, #tpu.memory_space<vmem>>, vector<1x64xf32>
    %248 = tpu.concatenate %246, %247 in 0 : vector<1x64xf32>, vector<1x64xf32> -> vector<2x64xf32>
    %249 = arith.truncf %248 : vector<2x64xf32> to vector<2x64xbf16>
    %c448 = arith.constant 448 : index
    %c0_129 = arith.constant 0 : index
    %250 = vector.load %arg5[%c448, %c0_129] : memref<1024x576xbf16, #tpu.memory_space<vmem>>, vector<64x576xbf16>
    %cst_130 = arith.constant dense<0.000000e+00> : vector<2x576xf32>
    %251 = tpu.matmul %249, %250, %cst_130 {dimension_numbers = #tpu.dot_dimension_numbers<[1], [0], [0], [1], [0, 0, 1, 1], [], []>} : vector<2x64xbf16>, vector<64x576xbf16>, vector<2x576xf32> -> vector<2x576xf32>
    %252 = arith.addf %245, %251 : vector<2x576xf32>
    %c8 = arith.constant 8 : index
    %c0_131 = arith.constant 0 : index
    %253 = vector.load %arg8[%c8, %c0_131] : memref<32x64xf32, #tpu.memory_space<vmem>>, vector<1x64xf32>
    %c24 = arith.constant 24 : index
    %c0_132 = arith.constant 0 : index
    %254 = vector.load %arg8[%c24, %c0_132] : memref<32x64xf32, #tpu.memory_space<vmem>>, vector<1x64xf32>
    %255 = tpu.concatenate %253, %254 in 0 : vector<1x64xf32>, vector<1x64xf32> -> vector<2x64xf32>
    %256 = arith.truncf %255 : vector<2x64xf32> to vector<2x64xbf16>
    %c512 = arith.constant 512 : index
    %c0_133 = arith.constant 0 : index
    %257 = vector.load %arg5[%c512, %c0_133] : memref<1024x576xbf16, #tpu.memory_space<vmem>>, vector<64x576xbf16>
    %cst_134 = arith.constant dense<0.000000e+00> : vector<2x576xf32>
    %258 = tpu.matmul %256, %257, %cst_134 {dimension_numbers = #tpu.dot_dimension_numbers<[1], [0], [0], [1], [0, 0, 1, 1], [], []>} : vector<2x64xbf16>, vector<64x576xbf16>, vector<2x576xf32> -> vector<2x576xf32>
    %259 = arith.addf %252, %258 : vector<2x576xf32>
    %c9 = arith.constant 9 : index
    %c0_135 = arith.constant 0 : index
    %260 = vector.load %arg8[%c9, %c0_135] : memref<32x64xf32, #tpu.memory_space<vmem>>, vector<1x64xf32>
    %c25 = arith.constant 25 : index
    %c0_136 = arith.constant 0 : index
    %261 = vector.load %arg8[%c25, %c0_136] : memref<32x64xf32, #tpu.memory_space<vmem>>, vector<1x64xf32>
    %262 = tpu.concatenate %260, %261 in 0 : vector<1x64xf32>, vector<1x64xf32> -> vector<2x64xf32>
    %263 = arith.truncf %262 : vector<2x64xf32> to vector<2x64xbf16>
    %c576 = arith.constant 576 : index
    %c0_137 = arith.constant 0 : index
    %264 = vector.load %arg5[%c576, %c0_137] : memref<1024x576xbf16, #tpu.memory_space<vmem>>, vector<64x576xbf16>
    %cst_138 = arith.constant dense<0.000000e+00> : vector<2x576xf32>
    %265 = tpu.matmul %263, %264, %cst_138 {dimension_numbers = #tpu.dot_dimension_numbers<[1], [0], [0], [1], [0, 0, 1, 1], [], []>} : vector<2x64xbf16>, vector<64x576xbf16>, vector<2x576xf32> -> vector<2x576xf32>
    %266 = arith.addf %259, %265 : vector<2x576xf32>
    %c10 = arith.constant 10 : index
    %c0_139 = arith.constant 0 : index
    %267 = vector.load %arg8[%c10, %c0_139] : memref<32x64xf32, #tpu.memory_space<vmem>>, vector<1x64xf32>
    %c26 = arith.constant 26 : index
    %c0_140 = arith.constant 0 : index
    %268 = vector.load %arg8[%c26, %c0_140] : memref<32x64xf32, #tpu.memory_space<vmem>>, vector<1x64xf32>
    %269 = tpu.concatenate %267, %268 in 0 : vector<1x64xf32>, vector<1x64xf32> -> vector<2x64xf32>
    %270 = arith.truncf %269 : vector<2x64xf32> to vector<2x64xbf16>
    %c640 = arith.constant 640 : index
    %c0_141 = arith.constant 0 : index
    %271 = vector.load %arg5[%c640, %c0_141] : memref<1024x576xbf16, #tpu.memory_space<vmem>>, vector<64x576xbf16>
    %cst_142 = arith.constant dense<0.000000e+00> : vector<2x576xf32>
    %272 = tpu.matmul %270, %271, %cst_142 {dimension_numbers = #tpu.dot_dimension_numbers<[1], [0], [0], [1], [0, 0, 1, 1], [], []>} : vector<2x64xbf16>, vector<64x576xbf16>, vector<2x576xf32> -> vector<2x576xf32>
    %273 = arith.addf %266, %272 : vector<2x576xf32>
    %c11 = arith.constant 11 : index
    %c0_143 = arith.constant 0 : index
    %274 = vector.load %arg8[%c11, %c0_143] : memref<32x64xf32, #tpu.memory_space<vmem>>, vector<1x64xf32>
    %c27 = arith.constant 27 : index
    %c0_144 = arith.constant 0 : index
    %275 = vector.load %arg8[%c27, %c0_144] : memref<32x64xf32, #tpu.memory_space<vmem>>, vector<1x64xf32>
    %276 = tpu.concatenate %274, %275 in 0 : vector<1x64xf32>, vector<1x64xf32> -> vector<2x64xf32>
    %277 = arith.truncf %276 : vector<2x64xf32> to vector<2x64xbf16>
    %c704 = arith.constant 704 : index
    %c0_145 = arith.constant 0 : index
    %278 = vector.load %arg5[%c704, %c0_145] : memref<1024x576xbf16, #tpu.memory_space<vmem>>, vector<64x576xbf16>
    %cst_146 = arith.constant dense<0.000000e+00> : vector<2x576xf32>
    %279 = tpu.matmul %277, %278, %cst_146 {dimension_numbers = #tpu.dot_dimension_numbers<[1], [0], [0], [1], [0, 0, 1, 1], [], []>} : vector<2x64xbf16>, vector<64x576xbf16>, vector<2x576xf32> -> vector<2x576xf32>
    %280 = arith.addf %273, %279 : vector<2x576xf32>
    %c12 = arith.constant 12 : index
    %c0_147 = arith.constant 0 : index
    %281 = vector.load %arg8[%c12, %c0_147] : memref<32x64xf32, #tpu.memory_space<vmem>>, vector<1x64xf32>
    %c28 = arith.constant 28 : index
    %c0_148 = arith.constant 0 : index
    %282 = vector.load %arg8[%c28, %c0_148] : memref<32x64xf32, #tpu.memory_space<vmem>>, vector<1x64xf32>
    %283 = tpu.concatenate %281, %282 in 0 : vector<1x64xf32>, vector<1x64xf32> -> vector<2x64xf32>
    %284 = arith.truncf %283 : vector<2x64xf32> to vector<2x64xbf16>
    %c768 = arith.constant 768 : index
    %c0_149 = arith.constant 0 : index
    %285 = vector.load %arg5[%c768, %c0_149] : memref<1024x576xbf16, #tpu.memory_space<vmem>>, vector<64x576xbf16>
    %cst_150 = arith.constant dense<0.000000e+00> : vector<2x576xf32>
    %286 = tpu.matmul %284, %285, %cst_150 {dimension_numbers = #tpu.dot_dimension_numbers<[1], [0], [0], [1], [0, 0, 1, 1], [], []>} : vector<2x64xbf16>, vector<64x576xbf16>, vector<2x576xf32> -> vector<2x576xf32>
    %287 = arith.addf %280, %286 : vector<2x576xf32>
    %c13 = arith.constant 13 : index
    %c0_151 = arith.constant 0 : index
    %288 = vector.load %arg8[%c13, %c0_151] : memref<32x64xf32, #tpu.memory_space<vmem>>, vector<1x64xf32>
    %c29 = arith.constant 29 : index
    %c0_152 = arith.constant 0 : index
    %289 = vector.load %arg8[%c29, %c0_152] : memref<32x64xf32, #tpu.memory_space<vmem>>, vector<1x64xf32>
    %290 = tpu.concatenate %288, %289 in 0 : vector<1x64xf32>, vector<1x64xf32> -> vector<2x64xf32>
    %291 = arith.truncf %290 : vector<2x64xf32> to vector<2x64xbf16>
    %c832 = arith.constant 832 : index
    %c0_153 = arith.constant 0 : index
    %292 = vector.load %arg5[%c832, %c0_153] : memref<1024x576xbf16, #tpu.memory_space<vmem>>, vector<64x576xbf16>
    %cst_154 = arith.constant dense<0.000000e+00> : vector<2x576xf32>
    %293 = tpu.matmul %291, %292, %cst_154 {dimension_numbers = #tpu.dot_dimension_numbers<[1], [0], [0], [1], [0, 0, 1, 1], [], []>} : vector<2x64xbf16>, vector<64x576xbf16>, vector<2x576xf32> -> vector<2x576xf32>
    %294 = arith.addf %287, %293 : vector<2x576xf32>
    %c14 = arith.constant 14 : index
    %c0_155 = arith.constant 0 : index
    %295 = vector.load %arg8[%c14, %c0_155] : memref<32x64xf32, #tpu.memory_space<vmem>>, vector<1x64xf32>
    %c30 = arith.constant 30 : index
    %c0_156 = arith.constant 0 : index
    %296 = vector.load %arg8[%c30, %c0_156] : memref<32x64xf32, #tpu.memory_space<vmem>>, vector<1x64xf32>
    %297 = tpu.concatenate %295, %296 in 0 : vector<1x64xf32>, vector<1x64xf32> -> vector<2x64xf32>
    %298 = arith.truncf %297 : vector<2x64xf32> to vector<2x64xbf16>
    %c896 = arith.constant 896 : index
    %c0_157 = arith.constant 0 : index
    %299 = vector.load %arg5[%c896, %c0_157] : memref<1024x576xbf16, #tpu.memory_space<vmem>>, vector<64x576xbf16>
    %cst_158 = arith.constant dense<0.000000e+00> : vector<2x576xf32>
    %300 = tpu.matmul %298, %299, %cst_158 {dimension_numbers = #tpu.dot_dimension_numbers<[1], [0], [0], [1], [0, 0, 1, 1], [], []>} : vector<2x64xbf16>, vector<64x576xbf16>, vector<2x576xf32> -> vector<2x576xf32>
    %301 = arith.addf %294, %300 : vector<2x576xf32>
    %c15 = arith.constant 15 : index
    %c0_159 = arith.constant 0 : index
    %302 = vector.load %arg8[%c15, %c0_159] : memref<32x64xf32, #tpu.memory_space<vmem>>, vector<1x64xf32>
    %c31 = arith.constant 31 : index
    %c0_160 = arith.constant 0 : index
    %303 = vector.load %arg8[%c31, %c0_160] : memref<32x64xf32, #tpu.memory_space<vmem>>, vector<1x64xf32>
    %304 = tpu.concatenate %302, %303 in 0 : vector<1x64xf32>, vector<1x64xf32> -> vector<2x64xf32>
    %305 = arith.truncf %304 : vector<2x64xf32> to vector<2x64xbf16>
    %c960 = arith.constant 960 : index
    %c0_161 = arith.constant 0 : index
    %306 = vector.load %arg5[%c960, %c0_161] : memref<1024x576xbf16, #tpu.memory_space<vmem>>, vector<64x576xbf16>
    %cst_162 = arith.constant dense<0.000000e+00> : vector<2x576xf32>
    %307 = tpu.matmul %305, %306, %cst_162 {dimension_numbers = #tpu.dot_dimension_numbers<[1], [0], [0], [1], [0, 0, 1, 1], [], []>} : vector<2x64xbf16>, vector<64x576xbf16>, vector<2x576xf32> -> vector<2x576xf32>
    %308 = arith.addf %301, %307 : vector<2x576xf32>
    %c0_163 = arith.constant 0 : index
    %c0_164 = arith.constant 0 : index
    %309 = vector.load %arg6[%c0_163, %c0_164] : memref<2x576xf32, #tpu.memory_space<vmem>>, vector<1x576xf32>
    %310 = vector.broadcast %309 : vector<1x576xf32> to vector<2x576xf32>
    %311 = arith.mulf %308, %310 : vector<2x576xf32>
    %c1_165 = arith.constant 1 : index
    %c0_166 = arith.constant 0 : index
    %312 = vector.load %arg6[%c1_165, %c0_166] : memref<2x576xf32, #tpu.memory_space<vmem>>, vector<1x576xf32>
    %313 = vector.broadcast %312 : vector<1x576xf32> to vector<2x576xf32>
    %314 = arith.addf %311, %313 : vector<2x576xf32>
    %315 = vector.extract_strided_slice %314 {offsets = [0, 0], sizes = [2, 512], strides = [1, 1]} : vector<2x576xf32> to vector<2x512xf32>
    %cst_167 = arith.constant 0.000000e+00 : f32
    %316 = vector.broadcast %cst_167 : f32 to vector<2x512xf32>
    %317 = arith.maximumf %315, %316 : vector<2x512xf32>
    %318 = vector.extract_strided_slice %314 {offsets = [0, 512], sizes = [2, 64], strides = [1, 1]} : vector<2x576xf32> to vector<2x64xf32>
    %c0_168 = arith.constant 0 : index
    %c0_169 = arith.constant 0 : index
    %319 = vector.load %arg9[%c0_168, %c0_169] : memref<2x64xf32, #tpu.memory_space<vmem>>, vector<2x64xf32>
    tpu.vector_store %arg9[%c0_168, %c0_169], %318 {strides = array<i32>} : memref<2x64xf32, #tpu.memory_space<vmem>>, vector<2x64xf32>,
    %c6_170 = arith.constant 6 : index
    %c0_171 = arith.constant 0 : index
    %320 = vector.load %arg4[%c6_170, %c0_171] : memref<8x64xf32, #tpu.memory_space<vmem>>, vector<1x16xf32>
    %321 = arith.truncf %317 : vector<2x512xf32> to vector<2x512xbf16>
    %c0_172 = arith.constant 0 : index
    %c0_173 = arith.constant 0 : index
    %322 = vector.load %arg7[%c0_172, %c0_173] : memref<512x16xbf16, #tpu.memory_space<vmem>>, vector<512x16xbf16>
    %cst_174 = arith.constant dense<0.000000e+00> : vector<2x16xf32>
    %323 = tpu.matmul %321, %322, %cst_174 {dimension_numbers = #tpu.dot_dimension_numbers<[1], [0], [0], [1], [0, 0, 1, 1], [], []>} : vector<2x512xbf16>, vector<512x16xbf16>, vector<2x16xf32> -> vector<2x16xf32>
    %324 = vector.broadcast %320 : vector<1x16xf32> to vector<2x16xf32>
    %325 = arith.addf %323, %324 : vector<2x16xf32>
    %c0_175 = arith.constant 0 : index
    %c0_176 = arith.constant 0 : index
    %326 = vector.load %arg10[%c0_175, %c0_176] : memref<2x16xf32, #tpu.memory_space<vmem>>, vector<2x16xf32>
    tpu.vector_store %arg10[%c0_175, %c0_176], %325 {strides = array<i32>} : memref<2x16xf32, #tpu.memory_space<vmem>>, vector<2x16xf32>,
    return
  }
}

</mosaic_0001>

<llo_original>
// kernel: tempcnn_wp2_forward.1
$region0: #{tempcnn_wp2_forward.1}
  #allocation0 [shape = 'u32[]', space=smem, size = 0x4, offset = 0x4, fixed_abs, tag = 'smem constant byte address 0x4 - core index']
  #allocation1 [shape = 'u32[144,128]{1,0:T(1,128)}', space=vmem, size = 0x12000, scoped, tag = 'internal scratch']
  %s0 = inlined_call_operand.vmem [shape: f32[32,20], index: 0, kind: input, shape index: {}]
  %s1 = inlined_call_operand.vmem [shape: bf16[20,64], index: 1, kind: input, shape index: {}]
  %s2 = inlined_call_operand.vmem [shape: bf16[320,64], index: 2, kind: input, shape index: {}]
  %s3 = inlined_call_operand.vmem [shape: bf16[320,64], index: 3, kind: input, shape index: {}]
  %s4 = inlined_call_operand.vmem [shape: f32[8,64], index: 4, kind: input, shape index: {}]
  %s5 = inlined_call_operand.vmem [shape: bf16[1024,576], index: 5, kind: input, shape index: {}]
  %s6 = inlined_call_operand.vmem [shape: f32[2,576], index: 6, kind: input, shape index: {}]
  %s7 = inlined_call_operand.vmem [shape: bf16[512,16], index: 7, kind: input, shape index: {}]
  %s8 = inlined_call_operand.vmem [shape: f32[32,64], index: 8, kind: output, shape index: {0}]
  %s9 = inlined_call_operand.vmem [shape: f32[2,64], index: 9, kind: output, shape index: {1}]
  %s10 = inlined_call_operand.vmem [shape: f32[2,16], index: 10, kind: output, shape index: {2}]
  %11 = xla_tuple %s8, %s9, %s10
  %s12 = sld [smem:[#allocation0]]
  $region58: #{tempcnn_wp2_forward.1} parent=0
    _
  %s14 = ssub.s32 1, %s12
  %s15 = scalar_select 0, %s14, %s12
  // Predicated region
  $region2: #{tempcnn_wp2_forward.1} parent=0 // pred_check
    _
  $region3: #{tempcnn_wp2_forward.1} parent=0 // pred_check_branch
    %17 = sbr.rel (0) target = $region5
  $region4: #{tempcnn_wp2_forward.1} parent=0 // pred_region
    _
  $region5: #{tempcnn_wp2_forward.1} parent=0 // pred_fallthru
    _
  // Predicated region
  $region6: #{tempcnn_wp2_forward.1} parent=0 // pred_check
    _
  $region7: #{tempcnn_wp2_forward.1} parent=0 // pred_check_branch
    %19 = sbr.rel (0) target = $region9
  $region8: #{tempcnn_wp2_forward.1} parent=0 // pred_region
    _
  $region9: #{tempcnn_wp2_forward.1} parent=0 // pred_fallthru
    _
  // Predicated region
  $region10: #{tempcnn_wp2_forward.1} parent=0 // pred_check
    _
  $region11: #{tempcnn_wp2_forward.1} parent=0 // pred_check_branch
    %21 = sbr.rel (0) target = $region13
  $region12: #{tempcnn_wp2_forward.1} parent=0 // pred_region
    _
  $region13: #{tempcnn_wp2_forward.1} parent=0 // pred_fallthru
    _
  // Predicated region
  $region14: #{tempcnn_wp2_forward.1} parent=0 // pred_check
    _
  $region15: #{tempcnn_wp2_forward.1} parent=0 // pred_check_branch
    %23 = sbr.rel (0) target = $region17
  $region16: #{tempcnn_wp2_forward.1} parent=0 // pred_region
    _
  $region17: #{tempcnn_wp2_forward.1} parent=0 // pred_fallthru
    _
  // Predicated region
  $region18: #{tempcnn_wp2_forward.1} parent=0 // pred_check
    _
  $region19: #{tempcnn_wp2_forward.1} parent=0 // pred_check_branch
    %25 = sbr.rel (0) target = $region21
  $region20: #{tempcnn_wp2_forward.1} parent=0 // pred_region
    _
  $region21: #{tempcnn_wp2_forward.1} parent=0 // pred_fallthru
    _
  // Predicated region
  $region22: #{tempcnn_wp2_forward.1} parent=0 // pred_check
    _
  $region23: #{tempcnn_wp2_forward.1} parent=0 // pred_check_branch
    %27 = sbr.rel (0) target = $region25
  $region24: #{tempcnn_wp2_forward.1} parent=0 // pred_region
    _
  $region25: #{tempcnn_wp2_forward.1} parent=0 // pred_fallthru
    _
  // Predicated region
  $region26: #{tempcnn_wp2_forward.1} parent=0 // pred_check
    _
  $region27: #{tempcnn_wp2_forward.1} parent=0 // pred_check_branch
    %29 = sbr.rel (0) target = $region29
  $region28: #{tempcnn_wp2_forward.1} parent=0 // pred_region
    _
  $region29: #{tempcnn_wp2_forward.1} parent=0 // pred_fallthru
    _
  // Predicated region
  $region30: #{tempcnn_wp2_forward.1} parent=0 // pred_check
    _
  $region31: #{tempcnn_wp2_forward.1} parent=0 // pred_check_branch
    %31 = sbr.rel (0) target = $region33
  $region32: #{tempcnn_wp2_forward.1} parent=0 // pred_region
    _
  $region33: #{tempcnn_wp2_forward.1} parent=0 // pred_fallthru
    _
  %v33 = vlaneseq
  %v34 = vshrl.u32 %v33, 7
  %v35 = vadd.s32 %v34, 8
  %v36 = vadd.s32 %v34, 16
  %v37 = vadd.s32 %v34, 24
  %vm38 = vcmp.lt.s32.totalorder %v34, 0
  %v39 = vsub.s32 0, %v34
  %v40 = vsel %vm38, %v39, %v34
  %v41 = vshrl.u32 %v40, 4
  %v42 = vand.u32 %v40, 15
  %v43 = vsub.s32 0, %v42
  %v44 = vsel %vm38, %v43, %v42
  %vm45 = vcmp.lt.s32.totalorder %v35, 0
  %v46 = vsub.s32 0, %v35
  %v47 = vsel %vm45, %v46, %v35
  %v48 = vshrl.u32 %v47, 4
  %v49 = vand.u32 %v47, 15
  %v50 = vsub.s32 0, %v49
  %v51 = vsel %vm45, %v50, %v49
  %vm52 = vcmp.lt.s32.totalorder %v36, 0
  %v53 = vsub.s32 0, %v36
  %v54 = vsel %vm52, %v53, %v36
  %v55 = vshrl.u32 %v54, 4
  %v56 = vand.u32 %v54, 15
  %v57 = vsub.s32 0, %v56
  %v58 = vsel %vm52, %v57, %v56
  %vm59 = vcmp.lt.s32.totalorder %v37, 0
  %v60 = vsub.s32 0, %v37
  %v61 = vsel %vm59, %v60, %v37
  %v62 = vshrl.u32 %v61, 4
  %v63 = vand.u32 %v61, 15
  %v64 = vsub.s32 0, %v63
  %v65 = vsel %vm59, %v64, %v63
  %vm66 = vcmp.ne.s32.totalorder %v44, 0
  %vm67 = vcmp.ne.s32.totalorder %v51, 0
  %vm68 = vcmp.ne.s32.totalorder %v58, 0
  %vm69 = vcmp.ne.s32.totalorder %v65, 0
  %vm70 = vcmp.lt.s32.totalorder %v44, 0
  %vm71 = vcmp.lt.s32.totalorder %v51, 0
  %vm72 = vcmp.lt.s32.totalorder %v58, 0
  %vm73 = vcmp.lt.s32.totalorder %v65, 0
  %vm74 = vmand %vm70, %vm66
  %vm75 = vmand %vm71, %vm67
  %vm76 = vmand %vm72, %vm68
  %vm77 = vmand %vm73, %vm69
  %v78 = vadd.s32 %v44, 16
  %v79 = vadd.s32 %v51, 16
  %v80 = vadd.s32 %v58, 16
  %v81 = vadd.s32 %v65, 16
  %v82 = vsel %vm74, %v78, %v44
  %v83 = vsel %vm75, %v79, %v51
  %v84 = vsel %vm76, %v80, %v58
  %v85 = vsel %vm77, %v81, %v65
  %v86 = vld [vmem:[%s0] sm:$0xff]
  %v87 = vld [vmem:[%s0 + $0x8] sm:$0xff]
  %v88 = vld [vmem:[%s0 + $0x10] sm:$0xff]
  %v89 = vld [vmem:[%s0 + $0x18] sm:$0xff]
  %v90 = vpack.c.bf16 %v87, %v86
  %v91 = vpack.c.bf16 %v89, %v88
  %v92 = vld [vmem:[%s1] sm:$0xf]
  %v93 = vld [vmem:[%s1 + $0x4] sm:$0xf]
  %v94 = vld [vmem:[%s1 + $0x8] sm:$0x3]
  %v98 = vunpack.c.l.b16 %v92
  %v99 = vunpack.c.l.b16 %v93
  %v100 = vunpack.c.l.b16 %v94
  %v101 = vpack.c.b16 %v99, %v98
  %v102 = vpack.c.b16 %v100, %v100
  %vm104 = vcmask 162816
  %v106 = vsel %vm104, %v90, 0
  %v109 = vsel %vm104, %v91, 0
  %vm111 = vcmask 1041408
  %v113 = vsel %vm111, %v102, 0
  %115 = vmatprep.subr.bf16.mxu0 0
  %116 = vmatpush1.bf16.msra.mxu0 %v101
  %117 = vmatprep.subr.bf16.mxu0 0
  %118 = vmatpush1.bf16.msra.mxu0 %v113
  %119 = vmatprep.subr.bf16.mxu0 0
  %120 = vmatpush1.bf16.msra.mxu0 0
  %121 = vmatprep.subr.bf16.mxu0 0
  %122 = vmatpush1.bf16.msra.mxu0 0
  %123 = vmatprep.subr.bf16.mxu0 0
  %124 = vmatpush1.bf16.msra.mxu0 0
  %125 = vmatprep.subr.bf16.mxu0 0
  %126 = vmatpush1.bf16.msra.mxu0 0
  %127 = vmatprep.subr.bf16.mxu0 0
  %128 = vmatpush1.bf16.msra.mxu0 0
  %129 = vmatprep.subr.bf16.mxu0 0
  %130 = vmatpush1.bf16.msra.mxu0 0
  %131 = vmatprep.subr.bf16.mxu0 0
  %132 = vmatpush1.bf16.msra.mxu0 0
  %133 = vmatprep.subr.bf16.mxu0 0
  %134 = vmatpush1.bf16.msra.mxu0 0
  %135 = vmatprep.subr.bf16.mxu0 0
  %136 = vmatpush1.bf16.msra.mxu0 0
  %137 = vmatprep.subr.bf16.mxu0 0
  %138 = vmatpush1.bf16.msra.mxu0 0
  %139 = vmatprep.subr.bf16.mxu0 0
  %140 = vmatpush1.bf16.msra.mxu0 0
  %141 = vmatprep.subr.bf16.mxu0 0
  %142 = vmatpush1.bf16.msra.mxu0 0
  %143 = vmatprep.subr.bf16.mxu0 0
  %144 = vmatpush1.bf16.msra.mxu0 0
  %145 = vmatprep.subr.bf16.mxu0 0
  %146 = vmatpush1.bf16.msra.mxu0 0
  %147 = vmatprep.mubr.bf16.mxu0 0
  %148 = vmatmul.mubr.bf16.gmra.mrb[0].mxu0 %v106
  %v149 = vpop.f32.mrb[0].mxu0
  %v150 = vadd.f32 0.0, %v149
  %v151 = vpop.f32.mrb[0].mxu0
  %v152 = vpop.f32.mrb[0].mxu0
  %v153 = vadd.f32 0.0, %v152
  %v154 = vpop.f32.mrb[0].mxu0
  %155 = vmatprep.mubr.bf16.mxu0 0
  %156 = vmatmul.mubr.bf16.gmra.mrb[0].mxu0 %v109
  %v157 = vpop.f32.mrb[0].mxu0
  %v158 = vadd.f32 0.0, %v157
  %v159 = vpop.f32.mrb[0].mxu0
  %v160 = vpop.f32.mrb[0].mxu0
  %v161 = vadd.f32 0.0, %v160
  %v162 = vpop.f32.mrb[0].mxu0
  %163 = vdwg.mxu0
  %v164 = vld [vmem:[%s4] sm:$0x1]
  %v165 = vld [vmem:[%s4 + $0x1] sm:$0x1]
  %v166 = vlaneseq
  %v167 = vshrl.u32 %v166, 7
  %v168 = vsub.s32 0, %v167
  %v169 = vrot.slane %v164, %v168
  %v170 = vmul.f32 %v150, %v169
  %v171 = vmul.f32 %v153, %v169
  %v172 = vmul.f32 %v158, %v169
  %v173 = vmul.f32 %v161, %v169
  %v174 = vlaneseq
  %v175 = vshrl.u32 %v174, 7
  %v176 = vsub.s32 0, %v175
  %v177 = vrot.slane %v165, %v176
  %v178 = vadd.f32 %v170, %v177
  %v179 = vadd.f32 %v171, %v177
  %v180 = vadd.f32 %v172, %v177
  %v181 = vadd.f32 %v173, %v177
  %v182 = vmax.f32 %v178, 0.0
  %v183 = vmax.f32 %v179, 0.0
  %v184 = vmax.f32 %v180, 0.0
  %v185 = vmax.f32 %v181, 0.0
  %v186 = vrot.slane %v182, 6
  %v187 = vrot.slane %v183, 6
  %v188 = vrot.slane %v184, 6
  %v189 = vrot.slane %v185, 6
  %vm190 = vcmp.lt.s32.totalorder %v34, 2
  %v191 = vsel %vm190, %v188, %v189
  %v192 = vsel %vm190, %v187, %v188
  %v193 = vsel %vm190, %v186, %v187
  %v194 = vsel %vm190, %v189, %v186
  %v195 = vadd.s32 %v82, 4294967294
  %v196 = vadd.s32 %v83, 4294967294
  %v197 = vadd.s32 %v84, 4294967294
  %v198 = vadd.s32 %v85, 4294967294
  %vm199 = vcmp.ge.s32.totalorder %v195, 0
  %vm200 = vcmp.ge.s32.totalorder %v196, 0
  %vm201 = vcmp.ge.s32.totalorder %v197, 0
  %vm202 = vcmp.ge.s32.totalorder %v198, 0
  %vm203 = vcmp.lt.s32.totalorder %v195, 16
  %vm204 = vcmp.lt.s32.totalorder %v196, 16
  %vm205 = vcmp.lt.s32.totalorder %v197, 16
  %vm206 = vcmp.lt.s32.totalorder %v198, 16
  %vm207 = vmand %vm199, %vm203
  %vm208 = vmand %vm200, %vm204
  %vm209 = vmand %vm201, %vm205
  %vm210 = vmand %vm202, %vm206
  %v211 = vsel %vm207, 1, 0
  %v212 = vsel %vm208, 1, 0
  %v213 = vsel %vm209, 1, 0
  %v214 = vsel %vm210, 1, 0
  %vm215 = vcmp.eq.s32.totalorder %v211, 1
  %vm216 = vcmp.eq.s32.totalorder %v212, 1
  %vm217 = vcmp.eq.s32.totalorder %v213, 1
  %vm218 = vcmp.eq.s32.totalorder %v214, 1
  %v219 = vsel %vm215, %v194, 0.0
  %v220 = vsel %vm216, %v193, 0.0
  %v221 = vsel %vm217, %v192, 0.0
  %v222 = vsel %vm218, %v191, 0.0
  %v223 = vpack.c.bf16 %v220, %v219
  %v224 = vpack.c.bf16 %v222, %v221
  %v225 = vld [vmem:[%s2] sm:$0xf]
  %v226 = vld [vmem:[%s2 + $0x4] sm:$0xf]
  %v227 = vld [vmem:[%s2 + $0x8] sm:$0xf]
  %v228 = vld [vmem:[%s2 + $0xc] sm:$0xf]
  %v229 = vld [vmem:[%s2 + $0x10] sm:$0xf]
  %v230 = vld [vmem:[%s2 + $0x14] sm:$0xf]
  %v231 = vld [vmem:[%s2 + $0x18] sm:$0xf]
  %v232 = vld [vmem:[%s2 + $0x1c] sm:$0xf]
  %v233 = vrot.slane %v182, 7
  %v234 = vrot.slane %v183, 7
  %v235 = vrot.slane %v184, 7
  %v236 = vrot.slane %v185, 7
  %vm237 = vcmp.lt.s32.totalorder %v34, 1
  %v238 = vsel %vm237, %v235, %v236
  %v239 = vsel %vm237, %v234, %v235
  %v240 = vsel %vm237, %v233, %v234
  %v241 = vsel %vm237, %v236, %v233
  %v242 = vadd.s32 %v82, 4294967295
  %v243 = vadd.s32 %v83, 4294967295
  %v244 = vadd.s32 %v84, 4294967295
  %v245 = vadd.s32 %v85, 4294967295
  %vm246 = vcmp.ge.s32.totalorder %v242, 0
  %vm247 = vcmp.ge.s32.totalorder %v243, 0
  %vm248 = vcmp.ge.s32.totalorder %v244, 0
  %vm249 = vcmp.ge.s32.totalorder %v245, 0
  %vm250 = vcmp.lt.s32.totalorder %v242, 16
  %vm251 = vcmp.lt.s32.totalorder %v243, 16
  %vm252 = vcmp.lt.s32.totalorder %v244, 16
  %vm253 = vcmp.lt.s32.totalorder %v245, 16
  %vm254 = vmand %vm246, %vm250
  %vm255 = vmand %vm247, %vm251
  %vm256 = vmand %vm248, %vm252
  %vm257 = vmand %vm249, %vm253
  %v258 = vsel %vm254, 1, 0
  %v259 = vsel %vm255, 1, 0
  %v260 = vsel %vm256, 1, 0
  %v261 = vsel %vm257, 1, 0
  %vm262 = vcmp.eq.s32.totalorder %v258, 1
  %vm263 = vcmp.eq.s32.totalorder %v259, 1
  %vm264 = vcmp.eq.s32.totalorder %v260, 1
  %vm265 = vcmp.eq.s32.totalorder %v261, 1
  %v266 = vsel %vm262, %v241, 0.0
  %v267 = vsel %vm263, %v240, 0.0
  %v268 = vsel %vm264, %v239, 0.0
  %v269 = vsel %vm265, %v238, 0.0
  %v270 = vpack.c.bf16 %v267, %v266
  %v271 = vpack.c.bf16 %v269, %v268
  %v272 = vld [vmem:[%s2 + $0x20] sm:$0xf]
  %v273 = vld [vmem:[%s2 + $0x24] sm:$0xf]
  %v274 = vld [vmem:[%s2 + $0x28] sm:$0xf]
  %v275 = vld [vmem:[%s2 + $0x2c] sm:$0xf]
  %v276 = vld [vmem:[%s2 + $0x30] sm:$0xf]
  %v277 = vld [vmem:[%s2 + $0x34] sm:$0xf]
  %v278 = vld [vmem:[%s2 + $0x38] sm:$0xf]
  %v279 = vld [vmem:[%s2 + $0x3c] sm:$0xf]
  %v288 = vunpack.c.l.b16 %v272
  %v289 = vunpack.c.l.b16 %v273
  %v290 = vunpack.c.l.b16 %v274
  %v291 = vunpack.c.l.b16 %v275
  %v292 = vunpack.c.l.b16 %v276
  %v293 = vunpack.c.l.b16 %v277
  %v294 = vunpack.c.l.b16 %v278
  %v295 = vunpack.c.l.b16 %v279
  %v296 = vpack.c.b16 %v289, %v288
  %v297 = vpack.c.b16 %v291, %v290
  %v298 = vpack.c.b16 %v293, %v292
  %v299 = vpack.c.b16 %v295, %v294
  %vm304 = vcmask 523264
  %v306 = vsel %vm304, %v270, 0
  %v309 = vsel %vm304, %v271, 0
  %311 = vmatprep.subr.bf16.mxu0 0
  %312 = vmatpush1.bf16.msra.mxu0 %v296
  %313 = vmatprep.subr.bf16.mxu0 0
  %314 = vmatpush1.bf16.msra.mxu0 %v297
  %315 = vmatprep.subr.bf16.mxu0 0
  %316 = vmatpush1.bf16.msra.mxu0 %v298
  %317 = vmatprep.subr.bf16.mxu0 0
  %318 = vmatpush1.bf16.msra.mxu0 %v299
  %319 = vmatprep.subr.bf16.mxu0 0
  %320 = vmatpush1.bf16.msra.mxu0 0
  %321 = vmatprep.subr.bf16.mxu0 0
  %322 = vmatpush1.bf16.msra.mxu0 0
  %323 = vmatprep.subr.bf16.mxu0 0
  %324 = vmatpush1.bf16.msra.mxu0 0
  %325 = vmatprep.subr.bf16.mxu0 0
  %326 = vmatpush1.bf16.msra.mxu0 0
  %327 = vmatprep.subr.bf16.mxu0 0
  %328 = vmatpush1.bf16.msra.mxu0 0
  %329 = vmatprep.subr.bf16.mxu0 0
  %330 = vmatpush1.bf16.msra.mxu0 0
  %331 = vmatprep.subr.bf16.mxu0 0
  %332 = vmatpush1.bf16.msra.mxu0 0
  %333 = vmatprep.subr.bf16.mxu0 0
  %334 = vmatpush1.bf16.msra.mxu0 0
  %335 = vmatprep.subr.bf16.mxu0 0
  %336 = vmatpush1.bf16.msra.mxu0 0
  %337 = vmatprep.subr.bf16.mxu0 0
  %338 = vmatpush1.bf16.msra.mxu0 0
  %339 = vmatprep.subr.bf16.mxu0 0
  %340 = vmatpush1.bf16.msra.mxu0 0
  %341 = vmatprep.subr.bf16.mxu0 0
  %342 = vmatpush1.bf16.msra.mxu0 0
  %343 = vmatprep.mubr.bf16.mxu0 0
  %344 = vmatmul.mubr.bf16.gmra.mrb[0].mxu0 %v306
  %v345 = vpop.f32.mrb[0].mxu0
  %v346 = vadd.f32 0.0, %v345
  %v347 = vpop.f32.mrb[0].mxu0
  %v348 = vpop.f32.mrb[0].mxu0
  %v349 = vadd.f32 0.0, %v348
  %v350 = vpop.f32.mrb[0].mxu0
  %351 = vmatprep.mubr.bf16.mxu0 0
  %352 = vmatmul.mubr.bf16.gmra.mrb[0].mxu0 %v309
  %v353 = vpop.f32.mrb[0].mxu0
  %v354 = vadd.f32 0.0, %v353
  %v355 = vpop.f32.mrb[0].mxu0
  %v356 = vpop.f32.mrb[0].mxu0
  %v357 = vadd.f32 0.0, %v356
  %v358 = vpop.f32.mrb[0].mxu0
  %359 = vdwg.mxu0
  %v368 = vunpack.c.l.b16 %v225
  %v369 = vunpack.c.l.b16 %v226
  %v370 = vunpack.c.l.b16 %v227
  %v371 = vunpack.c.l.b16 %v228
  %v372 = vunpack.c.l.b16 %v229
  %v373 = vunpack.c.l.b16 %v230
  %v374 = vunpack.c.l.b16 %v231
  %v375 = vunpack.c.l.b16 %v232
  %v376 = vpack.c.b16 %v369, %v368
  %v377 = vpack.c.b16 %v371, %v370
  %v378 = vpack.c.b16 %v373, %v372
  %v379 = vpack.c.b16 %v375, %v374
  %v385 = vsel %vm304, %v223, 0
  %v388 = vsel %vm304, %v224, 0
  %390 = vmatprep.subr.bf16.mxu0 0
  %391 = vmatpush1.bf16.msra.mxu0 %v376
  %392 = vmatprep.subr.bf16.mxu0 0
  %393 = vmatpush1.bf16.msra.mxu0 %v377
  %394 = vmatprep.subr.bf16.mxu0 0
  %395 = vmatpush1.bf16.msra.mxu0 %v378
  %396 = vmatprep.subr.bf16.mxu0 0
  %397 = vmatpush1.bf16.msra.mxu0 %v379
  %398 = vmatprep.subr.bf16.mxu0 0
  %399 = vmatpush1.bf16.msra.mxu0 0
  %400 = vmatprep.subr.bf16.mxu0 0
  %401 = vmatpush1.bf16.msra.mxu0 0
  %402 = vmatprep.subr.bf16.mxu0 0
  %403 = vmatpush1.bf16.msra.mxu0 0
  %404 = vmatprep.subr.bf16.mxu0 0
  %405 = vmatpush1.bf16.msra.mxu0 0
  %406 = vmatprep.subr.bf16.mxu0 0
  %407 = vmatpush1.bf16.msra.mxu0 0
  %408 = vmatprep.subr.bf16.mxu0 0
  %409 = vmatpush1.bf16.msra.mxu0 0
  %410 = vmatprep.subr.bf16.mxu0 0
  %411 = vmatpush1.bf16.msra.mxu0 0
  %412 = vmatprep.subr.bf16.mxu0 0
  %413 = vmatpush1.bf16.msra.mxu0 0
  %414 = vmatprep.subr.bf16.mxu0 0
  %415 = vmatpush1.bf16.msra.mxu0 0
  %416 = vmatprep.subr.bf16.mxu0 0
  %417 = vmatpush1.bf16.msra.mxu0 0
  %418 = vmatprep.subr.bf16.mxu0 0
  %419 = vmatpush1.bf16.msra.mxu0 0
  %420 = vmatprep.subr.bf16.mxu0 0
  %421 = vmatpush1.bf16.msra.mxu0 0
  %422 = vmatprep.mubr.bf16.mxu0 0
  %423 = vmatmul.mubr.bf16.gmra.mrb[0].mxu0 %v385
  %v424 = vpop.f32.mrb[0].mxu0
  %v425 = vadd.f32 %v346, %v424
  %v426 = vpop.f32.mrb[0].mxu0
  %v427 = vpop.f32.mrb[0].mxu0
  %v428 = vadd.f32 %v349, %v427
  %v429 = vpop.f32.mrb[0].mxu0
  %430 = vmatprep.mubr.bf16.mxu0 0
  %431 = vmatmul.mubr.bf16.gmra.mrb[0].mxu0 %v388
  %v432 = vpop.f32.mrb[0].mxu0
  %v433 = vadd.f32 %v354, %v432
  %v434 = vpop.f32.mrb[0].mxu0
  %v435 = vpop.f32.mrb[0].mxu0
  %v436 = vadd.f32 %v357, %v435
  %v437 = vpop.f32.mrb[0].mxu0
  %438 = vdwg.mxu0
  %v439 = vpack.c.bf16 %v183, %v182
  %v440 = vpack.c.bf16 %v185, %v184
  %v441 = vld [vmem:[%s2 + $0x40] sm:$0xf]
  %v442 = vld [vmem:[%s2 + $0x44] sm:$0xf]
  %v443 = vld [vmem:[%s2 + $0x48] sm:$0xf]
  %v444 = vld [vmem:[%s2 + $0x4c] sm:$0xf]
  %v445 = vld [vmem:[%s2 + $0x50] sm:$0xf]
  %v446 = vld [vmem:[%s2 + $0x54] sm:$0xf]
  %v447 = vld [vmem:[%s2 + $0x58] sm:$0xf]
  %v448 = vld [vmem:[%s2 + $0x5c] sm:$0xf]
  %v457 = vunpack.c.l.b16 %v441
  %v458 = vunpack.c.l.b16 %v442
  %v459 = vunpack.c.l.b16 %v443
  %v460 = vunpack.c.l.b16 %v444
  %v461 = vunpack.c.l.b16 %v445
  %v462 = vunpack.c.l.b16 %v446
  %v463 = vunpack.c.l.b16 %v447
  %v464 = vunpack.c.l.b16 %v448
  %v465 = vpack.c.b16 %v458, %v457
  %v466 = vpack.c.b16 %v460, %v459
  %v467 = vpack.c.b16 %v462, %v461
  %v468 = vpack.c.b16 %v464, %v463
  %v474 = vsel %vm304, %v439, 0
  %v477 = vsel %vm304, %v440, 0
  %479 = vmatprep.subr.bf16.mxu0 0
  %480 = vmatpush1.bf16.msra.mxu0 %v465
  %481 = vmatprep.subr.bf16.mxu0 0
  %482 = vmatpush1.bf16.msra.mxu0 %v466
  %483 = vmatprep.subr.bf16.mxu0 0
  %484 = vmatpush1.bf16.msra.mxu0 %v467
  %485 = vmatprep.subr.bf16.mxu0 0
  %486 = vmatpush1.bf16.msra.mxu0 %v468
  %487 = vmatprep.subr.bf16.mxu0 0
  %488 = vmatpush1.bf16.msra.mxu0 0
  %489 = vmatprep.subr.bf16.mxu0 0
  %490 = vmatpush1.bf16.msra.mxu0 0
  %491 = vmatprep.subr.bf16.mxu0 0
  %492 = vmatpush1.bf16.msra.mxu0 0
  %493 = vmatprep.subr.bf16.mxu0 0
  %494 = vmatpush1.bf16.msra.mxu0 0
  %495 = vmatprep.subr.bf16.mxu0 0
  %496 = vmatpush1.bf16.msra.mxu0 0
  %497 = vmatprep.subr.bf16.mxu0 0
  %498 = vmatpush1.bf16.msra.mxu0 0
  %499 = vmatprep.subr.bf16.mxu0 0
  %500 = vmatpush1.bf16.msra.mxu0 0
  %501 = vmatprep.subr.bf16.mxu0 0
  %502 = vmatpush1.bf16.msra.mxu0 0
  %503 = vmatprep.subr.bf16.mxu0 0
  %504 = vmatpush1.bf16.msra.mxu0 0
  %505 = vmatprep.subr.bf16.mxu0 0
  %506 = vmatpush1.bf16.msra.mxu0 0
  %507 = vmatprep.subr.bf16.mxu0 0
  %508 = vmatpush1.bf16.msra.mxu0 0
  %509 = vmatprep.subr.bf16.mxu0 0
  %510 = vmatpush1.bf16.msra.mxu0 0
  %511 = vmatprep.mubr.bf16.mxu0 0
  %512 = vmatmul.mubr.bf16.gmra.mrb[0].mxu0 %v474
  %v513 = vpop.f32.mrb[0].mxu0
  %v514 = vadd.f32 0.0, %v513
  %v515 = vpop.f32.mrb[0].mxu0
  %v516 = vpop.f32.mrb[0].mxu0
  %v517 = vadd.f32 0.0, %v516
  %v518 = vpop.f32.mrb[0].mxu0
  %519 = vmatprep.mubr.bf16.mxu0 0
  %520 = vmatmul.mubr.bf16.gmra.mrb[0].mxu0 %v477
  %v521 = vpop.f32.mrb[0].mxu0
  %v522 = vadd.f32 0.0, %v521
  %v523 = vpop.f32.mrb[0].mxu0
  %v524 = vpop.f32.mrb[0].mxu0
  %v525 = vadd.f32 0.0, %v524
  %v526 = vpop.f32.mrb[0].mxu0
  %527 = vdwg.mxu0
  %v528 = vadd.f32 %v425, %v514
  %v529 = vadd.f32 %v428, %v517
  %v530 = vadd.f32 %v433, %v522
  %v531 = vadd.f32 %v436, %v525
  %v532 = vrot.slane %v182, 1
  %v533 = vrot.slane %v183, 1
  %v534 = vrot.slane %v184, 1
  %v535 = vrot.slane %v185, 1
  %vm536 = vcmp.lt.s32.totalorder %v34, 7
  %v537 = vsel %vm536, %v534, %v535
  %v538 = vsel %vm536, %v533, %v534
  %v539 = vsel %vm536, %v532, %v533
  %v540 = vsel %vm536, %v535, %v532
  %v541 = vadd.s32 %v82, 1
  %v542 = vadd.s32 %v83, 1
  %v543 = vadd.s32 %v84, 1
  %v544 = vadd.s32 %v85, 1
  %vm545 = vcmp.ge.s32.totalorder %v541, 0
  %vm546 = vcmp.ge.s32.totalorder %v542, 0
  %vm547 = vcmp.ge.s32.totalorder %v543, 0
  %vm548 = vcmp.ge.s32.totalorder %v544, 0
  %vm549 = vcmp.lt.s32.totalorder %v541, 16
  %vm550 = vcmp.lt.s32.totalorder %v542, 16
  %vm551 = vcmp.lt.s32.totalorder %v543, 16
  %vm552 = vcmp.lt.s32.totalorder %v544, 16
  %vm553 = vmand %vm545, %vm549
  %vm554 = vmand %vm546, %vm550
  %vm555 = vmand %vm547, %vm551
  %vm556 = vmand %vm548, %vm552
  %v557 = vsel %vm553, 1, 0
  %v558 = vsel %vm554, 1, 0
  %v559 = vsel %vm555, 1, 0
  %v560 = vsel %vm556, 1, 0
  %vm561 = vcmp.eq.s32.totalorder %v557, 1
  %vm562 = vcmp.eq.s32.totalorder %v558, 1
  %vm563 = vcmp.eq.s32.totalorder %v559, 1
  %vm564 = vcmp.eq.s32.totalorder %v560, 1
  %v565 = vsel %vm561, %v539, 0.0
  %v566 = vsel %vm562, %v538, 0.0
  %v567 = vsel %vm563, %v537, 0.0
  %v568 = vsel %vm564, %v540, 0.0
  %v569 = vpack.c.bf16 %v566, %v565
  %v570 = vpack.c.bf16 %v568, %v567
  %v571 = vld [vmem:[%s2 + $0x60] sm:$0xf]
  %v572 = vld [vmem:[%s2 + $0x64] sm:$0xf]
  %v573 = vld [vmem:[%s2 + $0x68] sm:$0xf]
  %v574 = vld [vmem:[%s2 + $0x6c] sm:$0xf]
  %v575 = vld [vmem:[%s2 + $0x70] sm:$0xf]
  %v576 = vld [vmem:[%s2 + $0x74] sm:$0xf]
  %v577 = vld [vmem:[%s2 + $0x78] sm:$0xf]
  %v578 = vld [vmem:[%s2 + $0x7c] sm:$0xf]
  %v587 = vunpack.c.l.b16 %v571
  %v588 = vunpack.c.l.b16 %v572
  %v589 = vunpack.c.l.b16 %v573
  %v590 = vunpack.c.l.b16 %v574
  %v591 = vunpack.c.l.b16 %v575
  %v592 = vunpack.c.l.b16 %v576
  %v593 = vunpack.c.l.b16 %v577
  %v594 = vunpack.c.l.b16 %v578
  %v595 = vpack.c.b16 %v588, %v587
  %v596 = vpack.c.b16 %v590, %v589
  %v597 = vpack.c.b16 %v592, %v591
  %v598 = vpack.c.b16 %v594, %v593
  %v604 = vsel %vm304, %v569, 0
  %v607 = vsel %vm304, %v570, 0
  %609 = vmatprep.subr.bf16.mxu0 0
  %610 = vmatpush1.bf16.msra.mxu0 %v595
  %611 = vmatprep.subr.bf16.mxu0 0
  %612 = vmatpush1.bf16.msra.mxu0 %v596
  %613 = vmatprep.subr.bf16.mxu0 0
  %614 = vmatpush1.bf16.msra.mxu0 %v597
  %615 = vmatprep.subr.bf16.mxu0 0
  %616 = vmatpush1.bf16.msra.mxu0 %v598
  %617 = vmatprep.subr.bf16.mxu0 0
  %618 = vmatpush1.bf16.msra.mxu0 0
  %619 = vmatprep.subr.bf16.mxu0 0
  %620 = vmatpush1.bf16.msra.mxu0 0
  %621 = vmatprep.subr.bf16.mxu0 0
  %622 = vmatpush1.bf16.msra.mxu0 0
  %623 = vmatprep.subr.bf16.mxu0 0
  %624 = vmatpush1.bf16.msra.mxu0 0
  %625 = vmatprep.subr.bf16.mxu0 0
  %626 = vmatpush1.bf16.msra.mxu0 0
  %627 = vmatprep.subr.bf16.mxu0 0
  %628 = vmatpush1.bf16.msra.mxu0 0
  %629 = vmatprep.subr.bf16.mxu0 0
  %630 = vmatpush1.bf16.msra.mxu0 0
  %631 = vmatprep.subr.bf16.mxu0 0
  %632 = vmatpush1.bf16.msra.mxu0 0
  %633 = vmatprep.subr.bf16.mxu0 0
  %634 = vmatpush1.bf16.msra.mxu0 0
  %635 = vmatprep.subr.bf16.mxu0 0
  %636 = vmatpush1.bf16.msra.mxu0 0
  %637 = vmatprep.subr.bf16.mxu0 0
  %638 = vmatpush1.bf16.msra.mxu0 0
  %639 = vmatprep.subr.bf16.mxu0 0
  %640 = vmatpush1.bf16.msra.mxu0 0
  %641 = vmatprep.mubr.bf16.mxu0 0
  %642 = vmatmul.mubr.bf16.gmra.mrb[0].mxu0 %v604
  %v643 = vpop.f32.mrb[0].mxu0
  %v644 = vadd.f32 0.0, %v643
  %v645 = vpop.f32.mrb[0].mxu0
  %v646 = vpop.f32.mrb[0].mxu0
  %v647 = vadd.f32 0.0, %v646
  %v648 = vpop.f32.mrb[0].mxu0
  %649 = vmatprep.mubr.bf16.mxu0 0
  %650 = vmatmul.mubr.bf16.gmra.mrb[0].mxu0 %v607
  %v651 = vpop.f32.mrb[0].mxu0
  %v652 = vadd.f32 0.0, %v651
  %v653 = vpop.f32.mrb[0].mxu0
  %v654 = vpop.f32.mrb[0].mxu0
  %v655 = vadd.f32 0.0, %v654
  %v656 = vpop.f32.mrb[0].mxu0
  %657 = vdwg.mxu0
  %v658 = vadd.f32 %v528, %v644
  %v659 = vadd.f32 %v529, %v647
  %v660 = vadd.f32 %v530, %v652
  %v661 = vadd.f32 %v531, %v655
  %v662 = vrot.slane %v182, 2
  %v663 = vrot.slane %v183, 2
  %v664 = vrot.slane %v184, 2
  %v665 = vrot.slane %v185, 2
  %vm666 = vcmp.lt.s32.totalorder %v34, 6
  %v667 = vsel %vm666, %v664, %v665
  %v668 = vsel %vm666, %v663, %v664
  %v669 = vsel %vm666, %v662, %v663
  %v670 = vsel %vm666, %v665, %v662
  %v671 = vadd.s32 %v82, 2
  %v672 = vadd.s32 %v83, 2
  %v673 = vadd.s32 %v84, 2
  %v674 = vadd.s32 %v85, 2
  %vm675 = vcmp.ge.s32.totalorder %v671, 0
  %vm676 = vcmp.ge.s32.totalorder %v672, 0
  %vm677 = vcmp.ge.s32.totalorder %v673, 0
  %vm678 = vcmp.ge.s32.totalorder %v674, 0
  %vm679 = vcmp.lt.s32.totalorder %v671, 16
  %vm680 = vcmp.lt.s32.totalorder %v672, 16
  %vm681 = vcmp.lt.s32.totalorder %v673, 16
  %vm682 = vcmp.lt.s32.totalorder %v674, 16
  %vm683 = vmand %vm675, %vm679
  %vm684 = vmand %vm676, %vm680
  %vm685 = vmand %vm677, %vm681
  %vm686 = vmand %vm678, %vm682
  %v687 = vsel %vm683, 1, 0
  %v688 = vsel %vm684, 1, 0
  %v689 = vsel %vm685, 1, 0
  %v690 = vsel %vm686, 1, 0
  %vm691 = vcmp.eq.s32.totalorder %v687, 1
  %vm692 = vcmp.eq.s32.totalorder %v688, 1
  %vm693 = vcmp.eq.s32.totalorder %v689, 1
  %vm694 = vcmp.eq.s32.totalorder %v690, 1
  %v695 = vsel %vm691, %v669, 0.0
  %v696 = vsel %vm692, %v668, 0.0
  %v697 = vsel %vm693, %v667, 0.0
  %v698 = vsel %vm694, %v670, 0.0
  %v699 = vpack.c.bf16 %v696, %v695
  %v700 = vpack.c.bf16 %v698, %v697
  %v701 = vld [vmem:[%s2 + $0x80] sm:$0xf]
  %v702 = vld [vmem:[%s2 + $0x84] sm:$0xf]
  %v703 = vld [vmem:[%s2 + $0x88] sm:$0xf]
  %v704 = vld [vmem:[%s2 + $0x8c] sm:$0xf]
  %v705 = vld [vmem:[%s2 + $0x90] sm:$0xf]
  %v706 = vld [vmem:[%s2 + $0x94] sm:$0xf]
  %v707 = vld [vmem:[%s2 + $0x98] sm:$0xf]
  %v708 = vld [vmem:[%s2 + $0x9c] sm:$0xf]
  %v717 = vunpack.c.l.b16 %v701
  %v718 = vunpack.c.l.b16 %v702
  %v719 = vunpack.c.l.b16 %v703
  %v720 = vunpack.c.l.b16 %v704
  %v721 = vunpack.c.l.b16 %v705
  %v722 = vunpack.c.l.b16 %v706
  %v723 = vunpack.c.l.b16 %v707
  %v724 = vunpack.c.l.b16 %v708
  %v725 = vpack.c.b16 %v718, %v717
  %v726 = vpack.c.b16 %v720, %v719
  %v727 = vpack.c.b16 %v722, %v721
  %v728 = vpack.c.b16 %v724, %v723
  %v734 = vsel %vm304, %v699, 0
  %v737 = vsel %vm304, %v700, 0
  %739 = vmatprep.subr.bf16.mxu0 0
  %740 = vmatpush1.bf16.msra.mxu0 %v725
  %741 = vmatprep.subr.bf16.mxu0 0
  %742 = vmatpush1.bf16.msra.mxu0 %v726
  %743 = vmatprep.subr.bf16.mxu0 0
  %744 = vmatpush1.bf16.msra.mxu0 %v727
  %745 = vmatprep.subr.bf16.mxu0 0
  %746 = vmatpush1.bf16.msra.mxu0 %v728
  %747 = vmatprep.subr.bf16.mxu0 0
  %748 = vmatpush1.bf16.msra.mxu0 0
  %749 = vmatprep.subr.bf16.mxu0 0
  %750 = vmatpush1.bf16.msra.mxu0 0
  %751 = vmatprep.subr.bf16.mxu0 0
  %752 = vmatpush1.bf16.msra.mxu0 0
  %753 = vmatprep.subr.bf16.mxu0 0
  %754 = vmatpush1.bf16.msra.mxu0 0
  %755 = vmatprep.subr.bf16.mxu0 0
  %756 = vmatpush1.bf16.msra.mxu0 0
  %757 = vmatprep.subr.bf16.mxu0 0
  %758 = vmatpush1.bf16.msra.mxu0 0
  %759 = vmatprep.subr.bf16.mxu0 0
  %760 = vmatpush1.bf16.msra.mxu0 0
  %761 = vmatprep.subr.bf16.mxu0 0
  %762 = vmatpush1.bf16.msra.mxu0 0
  %763 = vmatprep.subr.bf16.mxu0 0
  %764 = vmatpush1.bf16.msra.mxu0 0
  %765 = vmatprep.subr.bf16.mxu0 0
  %766 = vmatpush1.bf16.msra.mxu0 0
  %767 = vmatprep.subr.bf16.mxu0 0
  %768 = vmatpush1.bf16.msra.mxu0 0
  %769 = vmatprep.subr.bf16.mxu0 0
  %770 = vmatpush1.bf16.msra.mxu0 0
  %771 = vmatprep.mubr.bf16.mxu0 0
  %772 = vmatmul.mubr.bf16.gmra.mrb[0].mxu0 %v734
  %v773 = vpop.f32.mrb[0].mxu0
  %v774 = vadd.f32 0.0, %v773
  %v775 = vpop.f32.mrb[0].mxu0
  %v776 = vpop.f32.mrb[0].mxu0
  %v777 = vadd.f32 0.0, %v776
  %v778 = vpop.f32.mrb[0].mxu0
  %779 = vmatprep.mubr.bf16.mxu0 0
  %780 = vmatmul.mubr.bf16.gmra.mrb[0].mxu0 %v737
  %v781 = vpop.f32.mrb[0].mxu0
  %v782 = vadd.f32 0.0, %v781
  %v783 = vpop.f32.mrb[0].mxu0
  %v784 = vpop.f32.mrb[0].mxu0
  %v785 = vadd.f32 0.0, %v784
  %v786 = vpop.f32.mrb[0].mxu0
  %787 = vdwg.mxu0
  %v788 = vadd.f32 %v658, %v774
  %v789 = vadd.f32 %v659, %v777
  %v790 = vadd.f32 %v660, %v782
  %v791 = vadd.f32 %v661, %v785
  %v792 = vld [vmem:[%s4 + $0x2] sm:$0x1]
  %v793 = vld [vmem:[%s4 + $0x3] sm:$0x1]
  %v794 = vlaneseq
  %v795 = vshrl.u32 %v794, 7
  %v796 = vsub.s32 0, %v795
  %v797 = vrot.slane %v792, %v796
  %v798 = vmul.f32 %v788, %v797
  %v799 = vmul.f32 %v789, %v797
  %v800 = vmul.f32 %v790, %v797
  %v801 = vmul.f32 %v791, %v797
  %v802 = vlaneseq
  %v803 = vshrl.u32 %v802, 7
  %v804 = vsub.s32 0, %v803
  %v805 = vrot.slane %v793, %v804
  %v806 = vadd.f32 %v798, %v805
  %v807 = vadd.f32 %v799, %v805
  %v808 = vadd.f32 %v800, %v805
  %v809 = vadd.f32 %v801, %v805
  %v810 = vmax.f32 %v806, 0.0
  %v811 = vmax.f32 %v807, 0.0
  %v812 = vmax.f32 %v808, 0.0
  %v813 = vmax.f32 %v809, 0.0
  %v814 = vrot.slane %v810, 6
  %v815 = vrot.slane %v811, 6
  %v816 = vrot.slane %v812, 6
  %v817 = vrot.slane %v813, 6
  %v818 = vsel %vm190, %v816, %v817
  %v819 = vsel %vm190, %v815, %v816
  %v820 = vsel %vm190, %v814, %v815
  %v821 = vsel %vm190, %v817, %v814
  %v822 = vsel %vm215, %v821, 0.0
  %v823 = vsel %vm216, %v820, 0.0
  %v824 = vsel %vm217, %v819, 0.0
  %v825 = vsel %vm218, %v818, 0.0
  %v826 = vpack.c.bf16 %v823, %v822
  %v827 = vpack.c.bf16 %v825, %v824
  %v828 = vld [vmem:[%s3] sm:$0xf]
  %v829 = vld [vmem:[%s3 + $0x4] sm:$0xf]
  %v830 = vld [vmem:[%s3 + $0x8] sm:$0xf]
  %v831 = vld [vmem:[%s3 + $0xc] sm:$0xf]
  %v832 = vld [vmem:[%s3 + $0x10] sm:$0xf]
  %v833 = vld [vmem:[%s3 + $0x14] sm:$0xf]
  %v834 = vld [vmem:[%s3 + $0x18] sm:$0xf]
  %v835 = vld [vmem:[%s3 + $0x1c] sm:$0xf]
  %v836 = vrot.slane %v810, 7
  %v837 = vrot.slane %v811, 7
  %v838 = vrot.slane %v812, 7
  %v839 = vrot.slane %v813, 7
  %v840 = vsel %vm237, %v838, %v839
  %v841 = vsel %vm237, %v837, %v838
  %v842 = vsel %vm237, %v836, %v837
  %v843 = vsel %vm237, %v839, %v836
  %v844 = vsel %vm262, %v843, 0.0
  %v845 = vsel %vm263, %v842, 0.0
  %v846 = vsel %vm264, %v841, 0.0
  %v847 = vsel %vm265, %v840, 0.0
  %v848 = vpack.c.bf16 %v845, %v844
  %v849 = vpack.c.bf16 %v847, %v846
  %v850 = vld [vmem:[%s3 + $0x20] sm:$0xf]
  %v851 = vld [vmem:[%s3 + $0x24] sm:$0xf]
  %v852 = vld [vmem:[%s3 + $0x28] sm:$0xf]
  %v853 = vld [vmem:[%s3 + $0x2c] sm:$0xf]
  %v854 = vld [vmem:[%s3 + $0x30] sm:$0xf]
  %v855 = vld [vmem:[%s3 + $0x34] sm:$0xf]
  %v856 = vld [vmem:[%s3 + $0x38] sm:$0xf]
  %v857 = vld [vmem:[%s3 + $0x3c] sm:$0xf]
  %v866 = vunpack.c.l.b16 %v850
  %v867 = vunpack.c.l.b16 %v851
  %v868 = vunpack.c.l.b16 %v852
  %v869 = vunpack.c.l.b16 %v853
  %v870 = vunpack.c.l.b16 %v854
  %v871 = vunpack.c.l.b16 %v855
  %v872 = vunpack.c.l.b16 %v856
  %v873 = vunpack.c.l.b16 %v857
  %v874 = vpack.c.b16 %v867, %v866
  %v875 = vpack.c.b16 %v869, %v868
  %v876 = vpack.c.b16 %v871, %v870
  %v877 = vpack.c.b16 %v873, %v872
  %v883 = vsel %vm304, %v848, 0
  %v886 = vsel %vm304, %v849, 0
  %888 = vmatprep.subr.bf16.mxu0 0
  %889 = vmatpush1.bf16.msra.mxu0 %v874
  %890 = vmatprep.subr.bf16.mxu0 0
  %891 = vmatpush1.bf16.msra.mxu0 %v875
  %892 = vmatprep.subr.bf16.mxu0 0
  %893 = vmatpush1.bf16.msra.mxu0 %v876
  %894 = vmatprep.subr.bf16.mxu0 0
  %895 = vmatpush1.bf16.msra.mxu0 %v877
  %896 = vmatprep.subr.bf16.mxu0 0
  %897 = vmatpush1.bf16.msra.mxu0 0
  %898 = vmatprep.subr.bf16.mxu0 0
  %899 = vmatpush1.bf16.msra.mxu0 0
  %900 = vmatprep.subr.bf16.mxu0 0
  %901 = vmatpush1.bf16.msra.mxu0 0
  %902 = vmatprep.subr.bf16.mxu0 0
  %903 = vmatpush1.bf16.msra.mxu0 0
  %904 = vmatprep.subr.bf16.mxu0 0
  %905 = vmatpush1.bf16.msra.mxu0 0
  %906 = vmatprep.subr.bf16.mxu0 0
  %907 = vmatpush1.bf16.msra.mxu0 0
  %908 = vmatprep.subr.bf16.mxu0 0
  %909 = vmatpush1.bf16.msra.mxu0 0
  %910 = vmatprep.subr.bf16.mxu0 0
  %911 = vmatpush1.bf16.msra.mxu0 0
  %912 = vmatprep.subr.bf16.mxu0 0
  %913 = vmatpush1.bf16.msra.mxu0 0
  %914 = vmatprep.subr.bf16.mxu0 0
  %915 = vmatpush1.bf16.msra.mxu0 0
  %916 = vmatprep.subr.bf16.mxu0 0
  %917 = vmatpush1.bf16.msra.mxu0 0
  %918 = vmatprep.subr.bf16.mxu0 0
  %919 = vmatpush1.bf16.msra.mxu0 0
  %920 = vmatprep.mubr.bf16.mxu0 0
  %921 = vmatmul.mubr.bf16.gmra.mrb[0].mxu0 %v883
  %v922 = vpop.f32.mrb[0].mxu0
  %v923 = vadd.f32 0.0, %v922
  %v924 = vpop.f32.mrb[0].mxu0
  %v925 = vpop.f32.mrb[0].mxu0
  %v926 = vadd.f32 0.0, %v925
  %v927 = vpop.f32.mrb[0].mxu0
  %928 = vmatprep.mubr.bf16.mxu0 0
  %929 = vmatmul.mubr.bf16.gmra.mrb[0].mxu0 %v886
  %v930 = vpop.f32.mrb[0].mxu0
  %v931 = vadd.f32 0.0, %v930
  %v932 = vpop.f32.mrb[0].mxu0
  %v933 = vpop.f32.mrb[0].mxu0
  %v934 = vadd.f32 0.0, %v933
  %v935 = vpop.f32.mrb[0].mxu0
  %936 = vdwg.mxu0
  %v945 = vunpack.c.l.b16 %v828
  %v946 = vunpack.c.l.b16 %v829
  %v947 = vunpack.c.l.b16 %v830
  %v948 = vunpack.c.l.b16 %v831
  %v949 = vunpack.c.l.b16 %v832
  %v950 = vunpack.c.l.b16 %v833
  %v951 = vunpack.c.l.b16 %v834
  %v952 = vunpack.c.l.b16 %v835
  %v953 = vpack.c.b16 %v946, %v945
  %v954 = vpack.c.b16 %v948, %v947
  %v955 = vpack.c.b16 %v950, %v949
  %v956 = vpack.c.b16 %v952, %v951
  %v962 = vsel %vm304, %v826, 0
  %v965 = vsel %vm304, %v827, 0
  %967 = vmatprep.subr.bf16.mxu0 0
  %968 = vmatpush1.bf16.msra.mxu0 %v953
  %969 = vmatprep.subr.bf16.mxu0 0
  %970 = vmatpush1.bf16.msra.mxu0 %v954
  %971 = vmatprep.subr.bf16.mxu0 0
  %972 = vmatpush1.bf16.msra.mxu0 %v955
  %973 = vmatprep.subr.bf16.mxu0 0
  %974 = vmatpush1.bf16.msra.mxu0 %v956
  %975 = vmatprep.subr.bf16.mxu0 0
  %976 = vmatpush1.bf16.msra.mxu0 0
  %977 = vmatprep.subr.bf16.mxu0 0
  %978 = vmatpush1.bf16.msra.mxu0 0
  %979 = vmatprep.subr.bf16.mxu0 0
  %980 = vmatpush1.bf16.msra.mxu0 0
  %981 = vmatprep.subr.bf16.mxu0 0
  %982 = vmatpush1.bf16.msra.mxu0 0
  %983 = vmatprep.subr.bf16.mxu0 0
  %984 = vmatpush1.bf16.msra.mxu0 0
  %985 = vmatprep.subr.bf16.mxu0 0
  %986 = vmatpush1.bf16.msra.mxu0 0
  %987 = vmatprep.subr.bf16.mxu0 0
  %988 = vmatpush1.bf16.msra.mxu0 0
  %989 = vmatprep.subr.bf16.mxu0 0
  %990 = vmatpush1.bf16.msra.mxu0 0
  %991 = vmatprep.subr.bf16.mxu0 0
  %992 = vmatpush1.bf16.msra.mxu0 0
  %993 = vmatprep.subr.bf16.mxu0 0
  %994 = vmatpush1.bf16.msra.mxu0 0
  %995 = vmatprep.subr.bf16.mxu0 0
  %996 = vmatpush1.bf16.msra.mxu0 0
  %997 = vmatprep.subr.bf16.mxu0 0
  %998 = vmatpush1.bf16.msra.mxu0 0
  %999 = vmatprep.mubr.bf16.mxu0 0
  %1000 = vmatmul.mubr.bf16.gmra.mrb[0].mxu0 %v962
  %v1001 = vpop.f32.mrb[0].mxu0
  %v1002 = vadd.f32 %v923, %v1001
  %v1003 = vpop.f32.mrb[0].mxu0
  %v1004 = vpop.f32.mrb[0].mxu0
  %v1005 = vadd.f32 %v926, %v1004
  %v1006 = vpop.f32.mrb[0].mxu0
  %1007 = vmatprep.mubr.bf16.mxu0 0
  %1008 = vmatmul.mubr.bf16.gmra.mrb[0].mxu0 %v965
  %v1009 = vpop.f32.mrb[0].mxu0
  %v1010 = vadd.f32 %v931, %v1009
  %v1011 = vpop.f32.mrb[0].mxu0
  %v1012 = vpop.f32.mrb[0].mxu0
  %v1013 = vadd.f32 %v934, %v1012
  %v1014 = vpop.f32.mrb[0].mxu0
  %1015 = vdwg.mxu0
  %v1016 = vpack.c.bf16 %v811, %v810
  %v1017 = vpack.c.bf16 %v813, %v812
  %v1018 = vld [vmem:[%s3 + $0x40] sm:$0xf]
  %v1019 = vld [vmem:[%s3 + $0x44] sm:$0xf]
  %v1020 = vld [vmem:[%s3 + $0x48] sm:$0xf]
  %v1021 = vld [vmem:[%s3 + $0x4c] sm:$0xf]
  %v1022 = vld [vmem:[%s3 + $0x50] sm:$0xf]
  %v1023 = vld [vmem:[%s3 + $0x54] sm:$0xf]
  %v1024 = vld [vmem:[%s3 + $0x58] sm:$0xf]
  %v1025 = vld [vmem:[%s3 + $0x5c] sm:$0xf]
  %v1034 = vunpack.c.l.b16 %v1018
  %v1035 = vunpack.c.l.b16 %v1019
  %v1036 = vunpack.c.l.b16 %v1020
  %v1037 = vunpack.c.l.b16 %v1021
  %v1038 = vunpack.c.l.b16 %v1022
  %v1039 = vunpack.c.l.b16 %v1023
  %v1040 = vunpack.c.l.b16 %v1024
  %v1041 = vunpack.c.l.b16 %v1025
  %v1042 = vpack.c.b16 %v1035, %v1034
  %v1043 = vpack.c.b16 %v1037, %v1036
  %v1044 = vpack.c.b16 %v1039, %v1038
  %v1045 = vpack.c.b16 %v1041, %v1040
  %v1051 = vsel %vm304, %v1016, 0
  %v1054 = vsel %vm304, %v1017, 0
  %1056 = vmatprep.subr.bf16.mxu0 0
  %1057 = vmatpush1.bf16.msra.mxu0 %v1042
  %1058 = vmatprep.subr.bf16.mxu0 0
  %1059 = vmatpush1.bf16.msra.mxu0 %v1043
  %1060 = vmatprep.subr.bf16.mxu0 0
  %1061 = vmatpush1.bf16.msra.mxu0 %v1044
  %1062 = vmatprep.subr.bf16.mxu0 0
  %1063 = vmatpush1.bf16.msra.mxu0 %v1045
  %1064 = vmatprep.subr.bf16.mxu0 0
  %1065 = vmatpush1.bf16.msra.mxu0 0
  %1066 = vmatprep.subr.bf16.mxu0 0
  %1067 = vmatpush1.bf16.msra.mxu0 0
  %1068 = vmatprep.subr.bf16.mxu0 0
  %1069 = vmatpush1.bf16.msra.mxu0 0
  %1070 = vmatprep.subr.bf16.mxu0 0
  %1071 = vmatpush1.bf16.msra.mxu0 0
  %1072 = vmatprep.subr.bf16.mxu0 0
  %1073 = vmatpush1.bf16.msra.mxu0 0
  %1074 = vmatprep.subr.bf16.mxu0 0
  %1075 = vmatpush1.bf16.msra.mxu0 0
  %1076 = vmatprep.subr.bf16.mxu0 0
  %1077 = vmatpush1.bf16.msra.mxu0 0
  %1078 = vmatprep.subr.bf16.mxu0 0
  %1079 = vmatpush1.bf16.msra.mxu0 0
  %1080 = vmatprep.subr.bf16.mxu0 0
  %1081 = vmatpush1.bf16.msra.mxu0 0
  %1082 = vmatprep.subr.bf16.mxu0 0
  %1083 = vmatpush1.bf16.msra.mxu0 0
  %1084 = vmatprep.subr.bf16.mxu0 0
  %1085 = vmatpush1.bf16.msra.mxu0 0
  %1086 = vmatprep.subr.bf16.mxu0 0
  %1087 = vmatpush1.bf16.msra.mxu0 0
  %1088 = vmatprep.mubr.bf16.mxu0 0
  %1089 = vmatmul.mubr.bf16.gmra.mrb[0].mxu0 %v1051
  %v1090 = vpop.f32.mrb[0].mxu0
  %v1091 = vadd.f32 0.0, %v1090
  %v1092 = vpop.f32.mrb[0].mxu0
  %v1093 = vpop.f32.mrb[0].mxu0
  %v1094 = vadd.f32 0.0, %v1093
  %v1095 = vpop.f32.mrb[0].mxu0
  %1096 = vmatprep.mubr.bf16.mxu0 0
  %1097 = vmatmul.mubr.bf16.gmra.mrb[0].mxu0 %v1054
  %v1098 = vpop.f32.mrb[0].mxu0
  %v1099 = vadd.f32 0.0, %v1098
  %v1100 = vpop.f32.mrb[0].mxu0
  %v1101 = vpop.f32.mrb[0].mxu0
  %v1102 = vadd.f32 0.0, %v1101
  %v1103 = vpop.f32.mrb[0].mxu0
  %1104 = vdwg.mxu0
  %v1105 = vadd.f32 %v1002, %v1091
  %v1106 = vadd.f32 %v1005, %v1094
  %v1107 = vadd.f32 %v1010, %v1099
  %v1108 = vadd.f32 %v1013, %v1102
  %v1109 = vrot.slane %v810, 1
  %v1110 = vrot.slane %v811, 1
  %v1111 = vrot.slane %v812, 1
  %v1112 = vrot.slane %v813, 1
  %v1113 = vsel %vm536, %v1111, %v1112
  %v1114 = vsel %vm536, %v1110, %v1111
  %v1115 = vsel %vm536, %v1109, %v1110
  %v1116 = vsel %vm536, %v1112, %v1109
  %v1117 = vsel %vm561, %v1115, 0.0
  %v1118 = vsel %vm562, %v1114, 0.0
  %v1119 = vsel %vm563, %v1113, 0.0
  %v1120 = vsel %vm564, %v1116, 0.0
  %v1121 = vpack.c.bf16 %v1118, %v1117
  %v1122 = vpack.c.bf16 %v1120, %v1119
  %v1123 = vld [vmem:[%s3 + $0x60] sm:$0xf]
  %v1124 = vld [vmem:[%s3 + $0x64] sm:$0xf]
  %v1125 = vld [vmem:[%s3 + $0x68] sm:$0xf]
  %v1126 = vld [vmem:[%s3 + $0x6c] sm:$0xf]
  %v1127 = vld [vmem:[%s3 + $0x70] sm:$0xf]
  %v1128 = vld [vmem:[%s3 + $0x74] sm:$0xf]
  %v1129 = vld [vmem:[%s3 + $0x78] sm:$0xf]
  %v1130 = vld [vmem:[%s3 + $0x7c] sm:$0xf]
  %v1139 = vunpack.c.l.b16 %v1123
  %v1140 = vunpack.c.l.b16 %v1124
  %v1141 = vunpack.c.l.b16 %v1125
  %v1142 = vunpack.c.l.b16 %v1126
  %v1143 = vunpack.c.l.b16 %v1127
  %v1144 = vunpack.c.l.b16 %v1128
  %v1145 = vunpack.c.l.b16 %v1129
  %v1146 = vunpack.c.l.b16 %v1130
  %v1147 = vpack.c.b16 %v1140, %v1139
  %v1148 = vpack.c.b16 %v1142, %v1141
  %v1149 = vpack.c.b16 %v1144, %v1143
  %v1150 = vpack.c.b16 %v1146, %v1145
  %v1156 = vsel %vm304, %v1121, 0
  %v1159 = vsel %vm304, %v1122, 0
  %1161 = vmatprep.subr.bf16.mxu0 0
  %1162 = vmatpush1.bf16.msra.mxu0 %v1147
  %1163 = vmatprep.subr.bf16.mxu0 0
  %1164 = vmatpush1.bf16.msra.mxu0 %v1148
  %1165 = vmatprep.subr.bf16.mxu0 0
  %1166 = vmatpush1.bf16.msra.mxu0 %v1149
  %1167 = vmatprep.subr.bf16.mxu0 0
  %1168 = vmatpush1.bf16.msra.mxu0 %v1150
  %1169 = vmatprep.subr.bf16.mxu0 0
  %1170 = vmatpush1.bf16.msra.mxu0 0
  %1171 = vmatprep.subr.bf16.mxu0 0
  %1172 = vmatpush1.bf16.msra.mxu0 0
  %1173 = vmatprep.subr.bf16.mxu0 0
  %1174 = vmatpush1.bf16.msra.mxu0 0
  %1175 = vmatprep.subr.bf16.mxu0 0
  %1176 = vmatpush1.bf16.msra.mxu0 0
  %1177 = vmatprep.subr.bf16.mxu0 0
  %1178 = vmatpush1.bf16.msra.mxu0 0
  %1179 = vmatprep.subr.bf16.mxu0 0
  %1180 = vmatpush1.bf16.msra.mxu0 0
  %1181 = vmatprep.subr.bf16.mxu0 0
  %1182 = vmatpush1.bf16.msra.mxu0 0
  %1183 = vmatprep.subr.bf16.mxu0 0
  %1184 = vmatpush1.bf16.msra.mxu0 0
  %1185 = vmatprep.subr.bf16.mxu0 0
  %1186 = vmatpush1.bf16.msra.mxu0 0
  %1187 = vmatprep.subr.bf16.mxu0 0
  %1188 = vmatpush1.bf16.msra.mxu0 0
  %1189 = vmatprep.subr.bf16.mxu0 0
  %1190 = vmatpush1.bf16.msra.mxu0 0
  %1191 = vmatprep.subr.bf16.mxu0 0
  %1192 = vmatpush1.bf16.msra.mxu0 0
  %1193 = vmatprep.mubr.bf16.mxu0 0
  %1194 = vmatmul.mubr.bf16.gmra.mrb[0].mxu0 %v1156
  %v1195 = vpop.f32.mrb[0].mxu0
  %v1196 = vadd.f32 0.0, %v1195
  %v1197 = vpop.f32.mrb[0].mxu0
  %v1198 = vpop.f32.mrb[0].mxu0
  %v1199 = vadd.f32 0.0, %v1198
  %v1200 = vpop.f32.mrb[0].mxu0
  %1201 = vmatprep.mubr.bf16.mxu0 0
  %1202 = vmatmul.mubr.bf16.gmra.mrb[0].mxu0 %v1159
  %v1203 = vpop.f32.mrb[0].mxu0
  %v1204 = vadd.f32 0.0, %v1203
  %v1205 = vpop.f32.mrb[0].mxu0
  %v1206 = vpop.f32.mrb[0].mxu0
  %v1207 = vadd.f32 0.0, %v1206
  %v1208 = vpop.f32.mrb[0].mxu0
  %1209 = vdwg.mxu0
  %v1210 = vadd.f32 %v1105, %v1196
  %v1211 = vadd.f32 %v1106, %v1199
  %v1212 = vadd.f32 %v1107, %v1204
  %v1213 = vadd.f32 %v1108, %v1207
  %v1214 = vrot.slane %v810, 2
  %v1215 = vrot.slane %v811, 2
  %v1216 = vrot.slane %v812, 2
  %v1217 = vrot.slane %v813, 2
  %v1218 = vsel %vm666, %v1216, %v1217
  %v1219 = vsel %vm666, %v1215, %v1216
  %v1220 = vsel %vm666, %v1214, %v1215
  %v1221 = vsel %vm666, %v1217, %v1214
  %v1222 = vsel %vm691, %v1220, 0.0
  %v1223 = vsel %vm692, %v1219, 0.0
  %v1224 = vsel %vm693, %v1218, 0.0
  %v1225 = vsel %vm694, %v1221, 0.0
  %v1226 = vpack.c.bf16 %v1223, %v1222
  %v1227 = vpack.c.bf16 %v1225, %v1224
  %v1228 = vld [vmem:[%s3 + $0x80] sm:$0xf]
  %v1229 = vld [vmem:[%s3 + $0x84] sm:$0xf]
  %v1230 = vld [vmem:[%s3 + $0x88] sm:$0xf]
  %v1231 = vld [vmem:[%s3 + $0x8c] sm:$0xf]
  %v1232 = vld [vmem:[%s3 + $0x90] sm:$0xf]
  %v1233 = vld [vmem:[%s3 + $0x94] sm:$0xf]
  %v1234 = vld [vmem:[%s3 + $0x98] sm:$0xf]
  %v1235 = vld [vmem:[%s3 + $0x9c] sm:$0xf]
  %v1244 = vunpack.c.l.b16 %v1228
  %v1245 = vunpack.c.l.b16 %v1229
  %v1246 = vunpack.c.l.b16 %v1230
  %v1247 = vunpack.c.l.b16 %v1231
  %v1248 = vunpack.c.l.b16 %v1232
  %v1249 = vunpack.c.l.b16 %v1233
  %v1250 = vunpack.c.l.b16 %v1234
  %v1251 = vunpack.c.l.b16 %v1235
  %v1252 = vpack.c.b16 %v1245, %v1244
  %v1253 = vpack.c.b16 %v1247, %v1246
  %v1254 = vpack.c.b16 %v1249, %v1248
  %v1255 = vpack.c.b16 %v1251, %v1250
  %v1261 = vsel %vm304, %v1226, 0
  %v1264 = vsel %vm304, %v1227, 0
  %1266 = vmatprep.subr.bf16.mxu0 0
  %1267 = vmatpush1.bf16.msra.mxu0 %v1252
  %1268 = vmatprep.subr.bf16.mxu0 0
  %1269 = vmatpush1.bf16.msra.mxu0 %v1253
  %1270 = vmatprep.subr.bf16.mxu0 0
  %1271 = vmatpush1.bf16.msra.mxu0 %v1254
  %1272 = vmatprep.subr.bf16.mxu0 0
  %1273 = vmatpush1.bf16.msra.mxu0 %v1255
  %1274 = vmatprep.subr.bf16.mxu0 0
  %1275 = vmatpush1.bf16.msra.mxu0 0
  %1276 = vmatprep.subr.bf16.mxu0 0
  %1277 = vmatpush1.bf16.msra.mxu0 0
  %1278 = vmatprep.subr.bf16.mxu0 0
  %1279 = vmatpush1.bf16.msra.mxu0 0
  %1280 = vmatprep.subr.bf16.mxu0 0
  %1281 = vmatpush1.bf16.msra.mxu0 0
  %1282 = vmatprep.subr.bf16.mxu0 0
  %1283 = vmatpush1.bf16.msra.mxu0 0
  %1284 = vmatprep.subr.bf16.mxu0 0
  %1285 = vmatpush1.bf16.msra.mxu0 0
  %1286 = vmatprep.subr.bf16.mxu0 0
  %1287 = vmatpush1.bf16.msra.mxu0 0
  %1288 = vmatprep.subr.bf16.mxu0 0
  %1289 = vmatpush1.bf16.msra.mxu0 0
  %1290 = vmatprep.subr.bf16.mxu0 0
  %1291 = vmatpush1.bf16.msra.mxu0 0
  %1292 = vmatprep.subr.bf16.mxu0 0
  %1293 = vmatpush1.bf16.msra.mxu0 0
  %1294 = vmatprep.subr.bf16.mxu0 0
  %1295 = vmatpush1.bf16.msra.mxu0 0
  %1296 = vmatprep.subr.bf16.mxu0 0
  %1297 = vmatpush1.bf16.msra.mxu0 0
  %1298 = vmatprep.mubr.bf16.mxu0 0
  %1299 = vmatmul.mubr.bf16.gmra.mrb[0].mxu0 %v1261
  %v1300 = vpop.f32.mrb[0].mxu0
  %v1301 = vadd.f32 0.0, %v1300
  %v1302 = vpop.f32.mrb[0].mxu0
  %v1303 = vpop.f32.mrb[0].mxu0
  %v1304 = vadd.f32 0.0, %v1303
  %v1305 = vpop.f32.mrb[0].mxu0
  %1306 = vmatprep.mubr.bf16.mxu0 0
  %1307 = vmatmul.mubr.bf16.gmra.mrb[0].mxu0 %v1264
  %v1308 = vpop.f32.mrb[0].mxu0
  %v1309 = vadd.f32 0.0, %v1308
  %v1310 = vpop.f32.mrb[0].mxu0
  %v1311 = vpop.f32.mrb[0].mxu0
  %v1312 = vadd.f32 0.0, %v1311
  %v1313 = vpop.f32.mrb[0].mxu0
  %1314 = vdwg.mxu0
  %v1315 = vadd.f32 %v1210, %v1301
  %v1316 = vadd.f32 %v1211, %v1304
  %v1317 = vadd.f32 %v1212, %v1309
  %v1318 = vadd.f32 %v1213, %v1312
  %v1319 = vld [vmem:[%s4 + $0x4] sm:$0x1]
  %v1320 = vld [vmem:[%s4 + $0x5] sm:$0x1]
  %v1321 = vlaneseq
  %v1322 = vshrl.u32 %v1321, 7
  %v1323 = vsub.s32 0, %v1322
  %v1324 = vrot.slane %v1319, %v1323
  %v1325 = vmul.f32 %v1315, %v1324
  %v1326 = vmul.f32 %v1316, %v1324
  %v1327 = vmul.f32 %v1317, %v1324
  %v1328 = vmul.f32 %v1318, %v1324
  %v1329 = vlaneseq
  %v1330 = vshrl.u32 %v1329, 7
  %v1331 = vsub.s32 0, %v1330
  %v1332 = vrot.slane %v1320, %v1331
  %v1333 = vadd.f32 %v1325, %v1332
  %v1334 = vadd.f32 %v1326, %v1332
  %v1335 = vadd.f32 %v1327, %v1332
  %v1336 = vadd.f32 %v1328, %v1332
  %v1337 = vmax.f32 %v1333, 0.0
  %v1338 = vmax.f32 %v1334, 0.0
  %v1339 = vmax.f32 %v1335, 0.0
  %v1340 = vmax.f32 %v1336, 0.0
  %1341 = vst.msk [vmem:[%s8] sm:$0xff] %vm304, %v1337
  %1342 = vst.msk [vmem:[%s8 + $0x8] sm:$0xff] %vm304, %v1338
  %1343 = vst.msk [vmem:[%s8 + $0x10] sm:$0xff] %vm304, %v1339
  %1344 = vst.msk [vmem:[%s8 + $0x18] sm:$0xff] %vm304, %v1340
  %v1345 = vld [vmem:[%s8] sm:$0x1]
  %v1346 = vld [vmem:[%s8 + $0x10] sm:$0x1]
  %v1348 = vrot.slane %v1346, 7
  %vm1350 = vcmask 1040384
  %v1351 = vsel %vm1350, %v1345, %v1348
  %v1352 = vpack.c.bf16 %v1351, %v1351
  %v1353 = vld [vmem:[%s5] sm:$0xff]
  %v1354 = vld [vmem:[%s5 + $0x8] sm:$0xff]
  %v1355 = vld [vmem:[%s5 + $0x10] sm:$0xf]
  %v1356 = vld [vmem:[%s5 + $0x14] sm:$0xff]
  %v1357 = vld [vmem:[%s5 + $0x1c] sm:$0xff]
  %v1358 = vld [vmem:[%s5 + $0x24] sm:$0xf]
  %v1359 = vld [vmem:[%s5 + $0x28] sm:$0xff]
  %v1360 = vld [vmem:[%s5 + $0x30] sm:$0xff]
  %v1361 = vld [vmem:[%s5 + $0x38] sm:$0xf]
  %v1362 = vld [vmem:[%s5 + $0x3c] sm:$0xff]
  %v1363 = vld [vmem:[%s5 + $0x44] sm:$0xff]
  %v1364 = vld [vmem:[%s5 + $0x4c] sm:$0xf]
  %v1365 = vld [vmem:[%s5 + $0x50] sm:$0xff]
  %v1366 = vld [vmem:[%s5 + $0x58] sm:$0xff]
  %v1367 = vld [vmem:[%s5 + $0x60] sm:$0xf]
  %v1368 = vld [vmem:[%s5 + $0x64] sm:$0xff]
  %v1369 = vld [vmem:[%s5 + $0x6c] sm:$0xff]
  %v1370 = vld [vmem:[%s5 + $0x74] sm:$0xf]
  %v1371 = vld [vmem:[%s5 + $0x78] sm:$0xff]
  %v1372 = vld [vmem:[%s5 + $0x80] sm:$0xff]
  %v1373 = vld [vmem:[%s5 + $0x88] sm:$0xf]
  %v1374 = vld [vmem:[%s5 + $0x8c] sm:$0xff]
  %v1375 = vld [vmem:[%s5 + $0x94] sm:$0xff]
  %v1376 = vld [vmem:[%s5 + $0x9c] sm:$0xf]
  %v1377 = vld [vmem:[%s8 + $0x1] sm:$0x1]
  %v1378 = vld [vmem:[%s8 + $0x11] sm:$0x1]
  %v1380 = vrot.slane %v1378, 7
  %v1382 = vsel %vm1350, %v1377, %v1380
  %v1383 = vpack.c.bf16 %v1382, %v1382
  %v1384 = vld [vmem:[%s5 + $0xa0] sm:$0xff]
  %v1385 = vld [vmem:[%s5 + $0xa8] sm:$0xff]
  %v1386 = vld [vmem:[%s5 + $0xb0] sm:$0xf]
  %v1387 = vld [vmem:[%s5 + $0xb4] sm:$0xff]
  %v1388 = vld [vmem:[%s5 + $0xbc] sm:$0xff]
  %v1389 = vld [vmem:[%s5 + $0xc4] sm:$0xf]
  %v1390 = vld [vmem:[%s5 + $0xc8] sm:$0xff]
  %v1391 = vld [vmem:[%s5 + $0xd0] sm:$0xff]
  %v1392 = vld [vmem:[%s5 + $0xd8] sm:$0xf]
  %v1393 = vld [vmem:[%s5 + $0xdc] sm:$0xff]
  %v1394 = vld [vmem:[%s5 + $0xe4] sm:$0xff]
  %v1395 = vld [vmem:[%s5 + $0xec] sm:$0xf]
  %v1396 = vld [vmem:[%s5 + $0xf0] sm:$0xff]
  %v1397 = vld [vmem:[%s5 + $0xf8] sm:$0xff]
  %v1398 = vld [vmem:[%s5 + $0x100] sm:$0xf]
  %v1399 = vld [vmem:[%s5 + $0x104] sm:$0xff]
  %v1400 = vld [vmem:[%s5 + $0x10c] sm:$0xff]
  %v1401 = vld [vmem:[%s5 + $0x114] sm:$0xf]
  %v1402 = vld [vmem:[%s5 + $0x118] sm:$0xff]
  %v1403 = vld [vmem:[%s5 + $0x120] sm:$0xff]
  %v1404 = vld [vmem:[%s5 + $0x128] sm:$0xf]
  %v1405 = vld [vmem:[%s5 + $0x12c] sm:$0xff]
  %v1406 = vld [vmem:[%s5 + $0x134] sm:$0xff]
  %v1407 = vld [vmem:[%s5 + $0x13c] sm:$0xf]
  %v1432 = vunpack.c.l.b16 %v1384
  %v1433 = vunpack.c.h.b16 %v1384
  %v1434 = vunpack.c.l.b16 %v1385
  %v1435 = vunpack.c.h.b16 %v1385
  %v1436 = vunpack.c.l.b16 %v1386
  %v1437 = vunpack.c.l.b16 %v1387
  %v1438 = vunpack.c.h.b16 %v1387
  %v1439 = vunpack.c.l.b16 %v1388
  %v1440 = vunpack.c.h.b16 %v1388
  %v1441 = vunpack.c.l.b16 %v1389
  %v1442 = vunpack.c.l.b16 %v1390
  %v1443 = vunpack.c.h.b16 %v1390
  %v1444 = vunpack.c.l.b16 %v1391
  %v1445 = vunpack.c.h.b16 %v1391
  %v1446 = vunpack.c.l.b16 %v1392
  %v1447 = vunpack.c.l.b16 %v1393
  %v1448 = vunpack.c.h.b16 %v1393
  %v1449 = vunpack.c.l.b16 %v1394
  %v1450 = vunpack.c.h.b16 %v1394
  %v1451 = vunpack.c.l.b16 %v1395
  %v1452 = vunpack.c.l.b16 %v1396
  %v1453 = vunpack.c.h.b16 %v1396
  %v1454 = vunpack.c.l.b16 %v1397
  %v1455 = vunpack.c.h.b16 %v1397
  %v1456 = vunpack.c.l.b16 %v1398
  %v1457 = vunpack.c.l.b16 %v1399
  %v1458 = vunpack.c.h.b16 %v1399
  %v1459 = vunpack.c.l.b16 %v1400
  %v1460 = vunpack.c.h.b16 %v1400
  %v1461 = vunpack.c.l.b16 %v1401
  %v1462 = vunpack.c.l.b16 %v1402
  %v1463 = vunpack.c.h.b16 %v1402
  %v1464 = vunpack.c.l.b16 %v1403
  %v1465 = vunpack.c.h.b16 %v1403
  %v1466 = vunpack.c.l.b16 %v1404
  %v1467 = vunpack.c.l.b16 %v1405
  %v1468 = vunpack.c.h.b16 %v1405
  %v1469 = vunpack.c.l.b16 %v1406
  %v1470 = vunpack.c.h.b16 %v1406
  %v1471 = vunpack.c.l.b16 %v1407
  %v1472 = vpack.c.b16 %v1437, %v1432
  %v1473 = vpack.c.b16 %v1438, %v1433
  %v1474 = vpack.c.b16 %v1439, %v1434
  %v1475 = vpack.c.b16 %v1440, %v1435
  %v1476 = vpack.c.b16 %v1441, %v1436
  %v1477 = vpack.c.b16 %v1447, %v1442
  %v1478 = vpack.c.b16 %v1448, %v1443
  %v1479 = vpack.c.b16 %v1449, %v1444
  %v1480 = vpack.c.b16 %v1450, %v1445
  %v1481 = vpack.c.b16 %v1451, %v1446
  %v1482 = vpack.c.b16 %v1457, %v1452
  %v1483 = vpack.c.b16 %v1458, %v1453
  %v1484 = vpack.c.b16 %v1459, %v1454
  %v1485 = vpack.c.b16 %v1460, %v1455
  %v1486 = vpack.c.b16 %v1461, %v1456
  %v1487 = vpack.c.b16 %v1467, %v1462
  %v1488 = vpack.c.b16 %v1468, %v1463
  %v1489 = vpack.c.b16 %v1469, %v1464
  %v1490 = vpack.c.b16 %v1470, %v1465
  %v1491 = vpack.c.b16 %v1471, %v1466
  %v1513 = vsel %vm304, %v1383, 0
  %1515 = vmatprep.subr.bf16.mxu0 %v1473
  %1516 = vmatpush1.bf16.msra.mxu0 %v1472
  %1517 = vmatprep.subr.bf16.mxu0 %v1478
  %1518 = vmatpush1.bf16.msra.mxu0 %v1477
  %1519 = vmatprep.subr.bf16.mxu0 %v1483
  %1520 = vmatpush1.bf16.msra.mxu0 %v1482
  %1521 = vmatprep.subr.bf16.mxu0 %v1488
  %1522 = vmatpush1.bf16.msra.mxu0 %v1487
  %1523 = vmatprep.subr.bf16.mxu0 0
  %1524 = vmatpush1.bf16.msra.mxu0 0
  %1525 = vmatprep.subr.bf16.mxu0 0
  %1526 = vmatpush1.bf16.msra.mxu0 0
  %1527 = vmatprep.subr.bf16.mxu0 0
  %1528 = vmatpush1.bf16.msra.mxu0 0
  %1529 = vmatprep.subr.bf16.mxu0 0
  %1530 = vmatpush1.bf16.msra.mxu0 0
  %1531 = vmatprep.subr.bf16.mxu0 0
  %1532 = vmatpush1.bf16.msra.mxu0 0
  %1533 = vmatprep.subr.bf16.mxu0 0
  %1534 = vmatpush1.bf16.msra.mxu0 0
  %1535 = vmatprep.subr.bf16.mxu0 0
  %1536 = vmatpush1.bf16.msra.mxu0 0
  %1537 = vmatprep.subr.bf16.mxu0 0
  %1538 = vmatpush1.bf16.msra.mxu0 0
  %1539 = vmatprep.subr.bf16.mxu0 0
  %1540 = vmatpush1.bf16.msra.mxu0 0
  %1541 = vmatprep.subr.bf16.mxu0 0
  %1542 = vmatpush1.bf16.msra.mxu0 0
  %1543 = vmatprep.subr.bf16.mxu0 0
  %1544 = vmatpush1.bf16.msra.mxu0 0
  %1545 = vmatprep.subr.bf16.mxu0 0
  %1546 = vmatpush1.bf16.msra.mxu0 0
  %1547 = vmatprep.mubr.bf16.mxu0 0
  %1548 = vmatmul.mubr.bf16.gmra.mrb[0].mxu0 %v1513
  %v1549 = vpop.f32.mrb[0].mxu0
  %v1550 = vadd.f32 0.0, %v1549
  %v1551 = vpop.f32.mrb[0].mxu0
  %v1552 = vadd.f32 0.0, %v1551
  %v1553 = vpop.f32.mrb[0].mxu0
  %v1554 = vpop.f32.mrb[0].mxu0
  %1555 = vdwg.mxu0
  %1556 = vmatprep.subr.bf16.mxu0 %v1475
  %1557 = vmatpush1.bf16.msra.mxu0 %v1474
  %1558 = vmatprep.subr.bf16.mxu0 %v1480
  %1559 = vmatpush1.bf16.msra.mxu0 %v1479
  %1560 = vmatprep.subr.bf16.mxu0 %v1485
  %1561 = vmatpush1.bf16.msra.mxu0 %v1484
  %1562 = vmatprep.subr.bf16.mxu0 %v1490
  %1563 = vmatpush1.bf16.msra.mxu0 %v1489
  %1564 = vmatprep.subr.bf16.mxu0 0
  %1565 = vmatpush1.bf16.msra.mxu0 0
  %1566 = vmatprep.subr.bf16.mxu0 0
  %1567 = vmatpush1.bf16.msra.mxu0 0
  %1568 = vmatprep.subr.bf16.mxu0 0
  %1569 = vmatpush1.bf16.msra.mxu0 0
  %1570 = vmatprep.subr.bf16.mxu0 0
  %1571 = vmatpush1.bf16.msra.mxu0 0
  %1572 = vmatprep.subr.bf16.mxu0 0
  %1573 = vmatpush1.bf16.msra.mxu0 0
  %1574 = vmatprep.subr.bf16.mxu0 0
  %1575 = vmatpush1.bf16.msra.mxu0 0
  %1576 = vmatprep.subr.bf16.mxu0 0
  %1577 = vmatpush1.bf16.msra.mxu0 0
  %1578 = vmatprep.subr.bf16.mxu0 0
  %1579 = vmatpush1.bf16.msra.mxu0 0
  %1580 = vmatprep.subr.bf16.mxu0 0
  %1581 = vmatpush1.bf16.msra.mxu0 0
  %1582 = vmatprep.subr.bf16.mxu0 0
  %1583 = vmatpush1.bf16.msra.mxu0 0
  %1584 = vmatprep.subr.bf16.mxu0 0
  %1585 = vmatpush1.bf16.msra.mxu0 0
  %1586 = vmatprep.subr.bf16.mxu0 0
  %1587 = vmatpush1.bf16.msra.mxu0 0
  %1588 = vmatprep.mubr.bf16.mxu0 0
  %1589 = vmatmul.mubr.bf16.gmra.mrb[0].mxu0 %v1513
  %v1590 = vpop.f32.mrb[0].mxu0
  %v1591 = vadd.f32 0.0, %v1590
  %v1592 = vpop.f32.mrb[0].mxu0
  %v1593 = vadd.f32 0.0, %v1592
  %v1594 = vpop.f32.mrb[0].mxu0
  %v1595 = vpop.f32.mrb[0].mxu0
  %1596 = vdwg.mxu0
  %1597 = vmatprep.subr.bf16.mxu0 0
  %1598 = vmatpush1.bf16.msra.mxu0 %v1476
  %1599 = vmatprep.subr.bf16.mxu0 0
  %1600 = vmatpush1.bf16.msra.mxu0 %v1481
  %1601 = vmatprep.subr.bf16.mxu0 0
  %1602 = vmatpush1.bf16.msra.mxu0 %v1486
  %1603 = vmatprep.subr.bf16.mxu0 0
  %1604 = vmatpush1.bf16.msra.mxu0 %v1491
  %1605 = vmatprep.subr.bf16.mxu0 0
  %1606 = vmatpush1.bf16.msra.mxu0 0
  %1607 = vmatprep.subr.bf16.mxu0 0
  %1608 = vmatpush1.bf16.msra.mxu0 0
  %1609 = vmatprep.subr.bf16.mxu0 0
  %1610 = vmatpush1.bf16.msra.mxu0 0
  %1611 = vmatprep.subr.bf16.mxu0 0
  %1612 = vmatpush1.bf16.msra.mxu0 0
  %1613 = vmatprep.subr.bf16.mxu0 0
  %1614 = vmatpush1.bf16.msra.mxu0 0
  %1615 = vmatprep.subr.bf16.mxu0 0
  %1616 = vmatpush1.bf16.msra.mxu0 0
  %1617 = vmatprep.subr.bf16.mxu0 0
  %1618 = vmatpush1.bf16.msra.mxu0 0
  %1619 = vmatprep.subr.bf16.mxu0 0
  %1620 = vmatpush1.bf16.msra.mxu0 0
  %1621 = vmatprep.subr.bf16.mxu0 0
  %1622 = vmatpush1.bf16.msra.mxu0 0
  %1623 = vmatprep.subr.bf16.mxu0 0
  %1624 = vmatpush1.bf16.msra.mxu0 0
  %1625 = vmatprep.subr.bf16.mxu0 0
  %1626 = vmatpush1.bf16.msra.mxu0 0
  %1627 = vmatprep.subr.bf16.mxu0 0
  %1628 = vmatpush1.bf16.msra.mxu0 0
  %1629 = vmatprep.mubr.bf16.mxu0 0
  %1630 = vmatmul.mubr.bf16.gmra.mrb[0].mxu0 %v1513
  %v1631 = vpop.f32.mrb[0].mxu0
  %v1632 = vadd.f32 0.0, %v1631
  %v1633 = vpop.f32.mrb[0].mxu0
  %v1634 = vpop.f32.mrb[0].mxu0
  %v1635 = vpop.f32.mrb[0].mxu0
  %1636 = vdwg.mxu0
  %v1661 = vunpack.c.l.b16 %v1353
  %v1662 = vunpack.c.h.b16 %v1353
  %v1663 = vunpack.c.l.b16 %v1354
  %v1664 = vunpack.c.h.b16 %v1354
  %v1665 = vunpack.c.l.b16 %v1355
  %v1666 = vunpack.c.l.b16 %v1356
  %v1667 = vunpack.c.h.b16 %v1356
  %v1668 = vunpack.c.l.b16 %v1357
  %v1669 = vunpack.c.h.b16 %v1357
  %v1670 = vunpack.c.l.b16 %v1358
  %v1671 = vunpack.c.l.b16 %v1359
  %v1672 = vunpack.c.h.b16 %v1359
  %v1673 = vunpack.c.l.b16 %v1360
  %v1674 = vunpack.c.h.b16 %v1360
  %v1675 = vunpack.c.l.b16 %v1361
  %v1676 = vunpack.c.l.b16 %v1362
  %v1677 = vunpack.c.h.b16 %v1362
  %v1678 = vunpack.c.l.b16 %v1363
  %v1679 = vunpack.c.h.b16 %v1363
  %v1680 = vunpack.c.l.b16 %v1364
  %v1681 = vunpack.c.l.b16 %v1365
  %v1682 = vunpack.c.h.b16 %v1365
  %v1683 = vunpack.c.l.b16 %v1366
  %v1684 = vunpack.c.h.b16 %v1366
  %v1685 = vunpack.c.l.b16 %v1367
  %v1686 = vunpack.c.l.b16 %v1368
  %v1687 = vunpack.c.h.b16 %v1368
  %v1688 = vunpack.c.l.b16 %v1369
  %v1689 = vunpack.c.h.b16 %v1369
  %v1690 = vunpack.c.l.b16 %v1370
  %v1691 = vunpack.c.l.b16 %v1371
  %v1692 = vunpack.c.h.b16 %v1371
  %v1693 = vunpack.c.l.b16 %v1372
  %v1694 = vunpack.c.h.b16 %v1372
  %v1695 = vunpack.c.l.b16 %v1373
  %v1696 = vunpack.c.l.b16 %v1374
  %v1697 = vunpack.c.h.b16 %v1374
  %v1698 = vunpack.c.l.b16 %v1375
  %v1699 = vunpack.c.h.b16 %v1375
  %v1700 = vunpack.c.l.b16 %v1376
  %v1701 = vpack.c.b16 %v1666, %v1661
  %v1702 = vpack.c.b16 %v1667, %v1662
  %v1703 = vpack.c.b16 %v1668, %v1663
  %v1704 = vpack.c.b16 %v1669, %v1664
  %v1705 = vpack.c.b16 %v1670, %v1665
  %v1706 = vpack.c.b16 %v1676, %v1671
  %v1707 = vpack.c.b16 %v1677, %v1672
  %v1708 = vpack.c.b16 %v1678, %v1673
  %v1709 = vpack.c.b16 %v1679, %v1674
  %v1710 = vpack.c.b16 %v1680, %v1675
  %v1711 = vpack.c.b16 %v1686, %v1681
  %v1712 = vpack.c.b16 %v1687, %v1682
  %v1713 = vpack.c.b16 %v1688, %v1683
  %v1714 = vpack.c.b16 %v1689, %v1684
  %v1715 = vpack.c.b16 %v1690, %v1685
  %v1716 = vpack.c.b16 %v1696, %v1691
  %v1717 = vpack.c.b16 %v1697, %v1692
  %v1718 = vpack.c.b16 %v1698, %v1693
  %v1719 = vpack.c.b16 %v1699, %v1694
  %v1720 = vpack.c.b16 %v1700, %v1695
  %v1742 = vsel %vm304, %v1352, 0
  %1744 = vmatprep.subr.bf16.mxu0 %v1702
  %1745 = vmatpush1.bf16.msra.mxu0 %v1701
  %1746 = vmatprep.subr.bf16.mxu0 %v1707
  %1747 = vmatpush1.bf16.msra.mxu0 %v1706
  %1748 = vmatprep.subr.bf16.mxu0 %v1712
  %1749 = vmatpush1.bf16.msra.mxu0 %v1711
  %1750 = vmatprep.subr.bf16.mxu0 %v1717
  %1751 = vmatpush1.bf16.msra.mxu0 %v1716
  %1752 = vmatprep.subr.bf16.mxu0 0
  %1753 = vmatpush1.bf16.msra.mxu0 0
  %1754 = vmatprep.subr.bf16.mxu0 0
  %1755 = vmatpush1.bf16.msra.mxu0 0
  %1756 = vmatprep.subr.bf16.mxu0 0
  %1757 = vmatpush1.bf16.msra.mxu0 0
  %1758 = vmatprep.subr.bf16.mxu0 0
  %1759 = vmatpush1.bf16.msra.mxu0 0
  %1760 = vmatprep.subr.bf16.mxu0 0
  %1761 = vmatpush1.bf16.msra.mxu0 0
  %1762 = vmatprep.subr.bf16.mxu0 0
  %1763 = vmatpush1.bf16.msra.mxu0 0
  %1764 = vmatprep.subr.bf16.mxu0 0
  %1765 = vmatpush1.bf16.msra.mxu0 0
  %1766 = vmatprep.subr.bf16.mxu0 0
  %1767 = vmatpush1.bf16.msra.mxu0 0
  %1768 = vmatprep.subr.bf16.mxu0 0
  %1769 = vmatpush1.bf16.msra.mxu0 0
  %1770 = vmatprep.subr.bf16.mxu0 0
  %1771 = vmatpush1.bf16.msra.mxu0 0
  %1772 = vmatprep.subr.bf16.mxu0 0
  %1773 = vmatpush1.bf16.msra.mxu0 0
  %1774 = vmatprep.subr.bf16.mxu0 0
  %1775 = vmatpush1.bf16.msra.mxu0 0
  %1776 = vmatprep.mubr.bf16.mxu0 0
  %1777 = vmatmul.mubr.bf16.gmra.mrb[0].mxu0 %v1742
  %v1778 = vpop.f32.mrb[0].mxu0
  %v1779 = vadd.f32 %v1550, %v1778
  %v1780 = vpop.f32.mrb[0].mxu0
  %v1781 = vadd.f32 %v1552, %v1780
  %v1782 = vpop.f32.mrb[0].mxu0
  %v1783 = vpop.f32.mrb[0].mxu0
  %1784 = vdwg.mxu0
  %1785 = vmatprep.subr.bf16.mxu0 %v1704
  %1786 = vmatpush1.bf16.msra.mxu0 %v1703
  %1787 = vmatprep.subr.bf16.mxu0 %v1709
  %1788 = vmatpush1.bf16.msra.mxu0 %v1708
  %1789 = vmatprep.subr.bf16.mxu0 %v1714
  %1790 = vmatpush1.bf16.msra.mxu0 %v1713
  %1791 = vmatprep.subr.bf16.mxu0 %v1719
  %1792 = vmatpush1.bf16.msra.mxu0 %v1718
  %1793 = vmatprep.subr.bf16.mxu0 0
  %1794 = vmatpush1.bf16.msra.mxu0 0
  %1795 = vmatprep.subr.bf16.mxu0 0
  %1796 = vmatpush1.bf16.msra.mxu0 0
  %1797 = vmatprep.subr.bf16.mxu0 0
  %1798 = vmatpush1.bf16.msra.mxu0 0
  %1799 = vmatprep.subr.bf16.mxu0 0
  %1800 = vmatpush1.bf16.msra.mxu0 0
  %1801 = vmatprep.subr.bf16.mxu0 0
  %1802 = vmatpush1.bf16.msra.mxu0 0
  %1803 = vmatprep.subr.bf16.mxu0 0
  %1804 = vmatpush1.bf16.msra.mxu0 0
  %1805 = vmatprep.subr.bf16.mxu0 0
  %1806 = vmatpush1.bf16.msra.mxu0 0
  %1807 = vmatprep.subr.bf16.mxu0 0
  %1808 = vmatpush1.bf16.msra.mxu0 0
  %1809 = vmatprep.subr.bf16.mxu0 0
  %1810 = vmatpush1.bf16.msra.mxu0 0
  %1811 = vmatprep.subr.bf16.mxu0 0
  %1812 = vmatpush1.bf16.msra.mxu0 0
  %1813 = vmatprep.subr.bf16.mxu0 0
  %1814 = vmatpush1.bf16.msra.mxu0 0
  %1815 = vmatprep.subr.bf16.mxu0 0
  %1816 = vmatpush1.bf16.msra.mxu0 0
  %1817 = vmatprep.mubr.bf16.mxu0 0
  %1818 = vmatmul.mubr.bf16.gmra.mrb[0].mxu0 %v1742
  %v1819 = vpop.f32.mrb[0].mxu0
  %v1820 = vadd.f32 %v1591, %v1819
  %v1821 = vpop.f32.mrb[0].mxu0
  %v1822 = vadd.f32 %v1593, %v1821
  %v1823 = vpop.f32.mrb[0].mxu0
  %v1824 = vpop.f32.mrb[0].mxu0
  %1825 = vdwg.mxu0
  %1826 = vmatprep.subr.bf16.mxu0 0
  %1827 = vmatpush1.bf16.msra.mxu0 %v1705
  %1828 = vmatprep.subr.bf16.mxu0 0
  %1829 = vmatpush1.bf16.msra.mxu0 %v1710
  %1830 = vmatprep.subr.bf16.mxu0 0
  %1831 = vmatpush1.bf16.msra.mxu0 %v1715
  %1832 = vmatprep.subr.bf16.mxu0 0
  %1833 = vmatpush1.bf16.msra.mxu0 %v1720
  %1834 = vmatprep.subr.bf16.mxu0 0
  %1835 = vmatpush1.bf16.msra.mxu0 0
  %1836 = vmatprep.subr.bf16.mxu0 0
  %1837 = vmatpush1.bf16.msra.mxu0 0
  %1838 = vmatprep.subr.bf16.mxu0 0
  %1839 = vmatpush1.bf16.msra.mxu0 0
  %1840 = vmatprep.subr.bf16.mxu0 0
  %1841 = vmatpush1.bf16.msra.mxu0 0
  %1842 = vmatprep.subr.bf16.mxu0 0
  %1843 = vmatpush1.bf16.msra.mxu0 0
  %1844 = vmatprep.subr.bf16.mxu0 0
  %1845 = vmatpush1.bf16.msra.mxu0 0
  %1846 = vmatprep.subr.bf16.mxu0 0
  %1847 = vmatpush1.bf16.msra.mxu0 0
  %1848 = vmatprep.subr.bf16.mxu0 0
  %1849 = vmatpush1.bf16.msra.mxu0 0
  %1850 = vmatprep.subr.bf16.mxu0 0
  %1851 = vmatpush1.bf16.msra.mxu0 0
  %1852 = vmatprep.subr.bf16.mxu0 0
  %1853 = vmatpush1.bf16.msra.mxu0 0
  %1854 = vmatprep.subr.bf16.mxu0 0
  %1855 = vmatpush1.bf16.msra.mxu0 0
  %1856 = vmatprep.subr.bf16.mxu0 0
  %1857 = vmatpush1.bf16.msra.mxu0 0
  %1858 = vmatprep.mubr.bf16.mxu0 0
  %1859 = vmatmul.mubr.bf16.gmra.mrb[0].mxu0 %v1742
  %v1860 = vpop.f32.mrb[0].mxu0
  %v1861 = vadd.f32 %v1632, %v1860
  %v1862 = vpop.f32.mrb[0].mxu0
  %v1863 = vpop.f32.mrb[0].mxu0
  %v1864 = vpop.f32.mrb[0].mxu0
  %1865 = vdwg.mxu0
  %v1866 = vld [vmem:[%s8 + $0x2] sm:$0x1]
  %v1867 = vld [vmem:[%s8 + $0x12] sm:$0x1]
  %v1869 = vrot.slane %v1867, 7
  %v1871 = vsel %vm1350, %v1866, %v1869
  %v1872 = vpack.c.bf16 %v1871, %v1871
  %v1873 = vld [vmem:[%s5 + $0x140] sm:$0xff]
  %v1874 = vld [vmem:[%s5 + $0x148] sm:$0xff]
  %v1875 = vld [vmem:[%s5 + $0x150] sm:$0xf]
  %v1876 = vld [vmem:[%s5 + $0x154] sm:$0xff]
  %v1877 = vld [vmem:[%s5 + $0x15c] sm:$0xff]
  %v1878 = vld [vmem:[%s5 + $0x164] sm:$0xf]
  %v1879 = vld [vmem:[%s5 + $0x168] sm:$0xff]
  %v1880 = vld [vmem:[%s5 + $0x170] sm:$0xff]
  %v1881 = vld [vmem:[%s5 + $0x178] sm:$0xf]
  %v1882 = vld [vmem:[%s5 + $0x17c] sm:$0xff]
  %v1883 = vld [vmem:[%s5 + $0x184] sm:$0xff]
  %v1884 = vld [vmem:[%s5 + $0x18c] sm:$0xf]
  %v1885 = vld [vmem:[%s5 + $0x190] sm:$0xff]
  %v1886 = vld [vmem:[%s5 + $0x198] sm:$0xff]
  %v1887 = vld [vmem:[%s5 + $0x1a0] sm:$0xf]
  %v1888 = vld [vmem:[%s5 + $0x1a4] sm:$0xff]
  %v1889 = vld [vmem:[%s5 + $0x1ac] sm:$0xff]
  %v1890 = vld [vmem:[%s5 + $0x1b4] sm:$0xf]
  %v1891 = vld [vmem:[%s5 + $0x1b8] sm:$0xff]
  %v1892 = vld [vmem:[%s5 + $0x1c0] sm:$0xff]
  %v1893 = vld [vmem:[%s5 + $0x1c8] sm:$0xf]
  %v1894 = vld [vmem:[%s5 + $0x1cc] sm:$0xff]
  %v1895 = vld [vmem:[%s5 + $0x1d4] sm:$0xff]
  %v1896 = vld [vmem:[%s5 + $0x1dc] sm:$0xf]
  %v1921 = vunpack.c.l.b16 %v1873
  %v1922 = vunpack.c.h.b16 %v1873
  %v1923 = vunpack.c.l.b16 %v1874
  %v1924 = vunpack.c.h.b16 %v1874
  %v1925 = vunpack.c.l.b16 %v1875
  %v1926 = vunpack.c.l.b16 %v1876
  %v1927 = vunpack.c.h.b16 %v1876
  %v1928 = vunpack.c.l.b16 %v1877
  %v1929 = vunpack.c.h.b16 %v1877
  %v1930 = vunpack.c.l.b16 %v1878
  %v1931 = vunpack.c.l.b16 %v1879
  %v1932 = vunpack.c.h.b16 %v1879
  %v1933 = vunpack.c.l.b16 %v1880
  %v1934 = vunpack.c.h.b16 %v1880
  %v1935 = vunpack.c.l.b16 %v1881
  %v1936 = vunpack.c.l.b16 %v1882
  %v1937 = vunpack.c.h.b16 %v1882
  %v1938 = vunpack.c.l.b16 %v1883
  %v1939 = vunpack.c.h.b16 %v1883
  %v1940 = vunpack.c.l.b16 %v1884
  %v1941 = vunpack.c.l.b16 %v1885
  %v1942 = vunpack.c.h.b16 %v1885
  %v1943 = vunpack.c.l.b16 %v1886
  %v1944 = vunpack.c.h.b16 %v1886
  %v1945 = vunpack.c.l.b16 %v1887
  %v1946 = vunpack.c.l.b16 %v1888
  %v1947 = vunpack.c.h.b16 %v1888
  %v1948 = vunpack.c.l.b16 %v1889
  %v1949 = vunpack.c.h.b16 %v1889
  %v1950 = vunpack.c.l.b16 %v1890
  %v1951 = vunpack.c.l.b16 %v1891
  %v1952 = vunpack.c.h.b16 %v1891
  %v1953 = vunpack.c.l.b16 %v1892
  %v1954 = vunpack.c.h.b16 %v1892
  %v1955 = vunpack.c.l.b16 %v1893
  %v1956 = vunpack.c.l.b16 %v1894
  %v1957 = vunpack.c.h.b16 %v1894
  %v1958 = vunpack.c.l.b16 %v1895
  %v1959 = vunpack.c.h.b16 %v1895
  %v1960 = vunpack.c.l.b16 %v1896
  %v1961 = vpack.c.b16 %v1926, %v1921
  %v1962 = vpack.c.b16 %v1927, %v1922
  %v1963 = vpack.c.b16 %v1928, %v1923
  %v1964 = vpack.c.b16 %v1929, %v1924
  %v1965 = vpack.c.b16 %v1930, %v1925
  %v1966 = vpack.c.b16 %v1936, %v1931
  %v1967 = vpack.c.b16 %v1937, %v1932
  %v1968 = vpack.c.b16 %v1938, %v1933
  %v1969 = vpack.c.b16 %v1939, %v1934
  %v1970 = vpack.c.b16 %v1940, %v1935
  %v1971 = vpack.c.b16 %v1946, %v1941
  %v1972 = vpack.c.b16 %v1947, %v1942
  %v1973 = vpack.c.b16 %v1948, %v1943
  %v1974 = vpack.c.b16 %v1949, %v1944
  %v1975 = vpack.c.b16 %v1950, %v1945
  %v1976 = vpack.c.b16 %v1956, %v1951
  %v1977 = vpack.c.b16 %v1957, %v1952
  %v1978 = vpack.c.b16 %v1958, %v1953
  %v1979 = vpack.c.b16 %v1959, %v1954
  %v1980 = vpack.c.b16 %v1960, %v1955
  %v2002 = vsel %vm304, %v1872, 0
  %2004 = vmatprep.subr.bf16.mxu0 %v1962
  %2005 = vmatpush1.bf16.msra.mxu0 %v1961
  %2006 = vmatprep.subr.bf16.mxu0 %v1967
  %2007 = vmatpush1.bf16.msra.mxu0 %v1966
  %2008 = vmatprep.subr.bf16.mxu0 %v1972
  %2009 = vmatpush1.bf16.msra.mxu0 %v1971
  %2010 = vmatprep.subr.bf16.mxu0 %v1977
  %2011 = vmatpush1.bf16.msra.mxu0 %v1976
  %2012 = vmatprep.subr.bf16.mxu0 0
  %2013 = vmatpush1.bf16.msra.mxu0 0
  %2014 = vmatprep.subr.bf16.mxu0 0
  %2015 = vmatpush1.bf16.msra.mxu0 0
  %2016 = vmatprep.subr.bf16.mxu0 0
  %2017 = vmatpush1.bf16.msra.mxu0 0
  %2018 = vmatprep.subr.bf16.mxu0 0
  %2019 = vmatpush1.bf16.msra.mxu0 0
  %2020 = vmatprep.subr.bf16.mxu0 0
  %2021 = vmatpush1.bf16.msra.mxu0 0
  %2022 = vmatprep.subr.bf16.mxu0 0
  %2023 = vmatpush1.bf16.msra.mxu0 0
  %2024 = vmatprep.subr.bf16.mxu0 0
  %2025 = vmatpush1.bf16.msra.mxu0 0
  %2026 = vmatprep.subr.bf16.mxu0 0
  %2027 = vmatpush1.bf16.msra.mxu0 0
  %2028 = vmatprep.subr.bf16.mxu0 0
  %2029 = vmatpush1.bf16.msra.mxu0 0
  %2030 = vmatprep.subr.bf16.mxu0 0
  %2031 = vmatpush1.bf16.msra.mxu0 0
  %2032 = vmatprep.subr.bf16.mxu0 0
  %2033 = vmatpush1.bf16.msra.mxu0 0
  %2034 = vmatprep.subr.bf16.mxu0 0
  %2035 = vmatpush1.bf16.msra.mxu0 0
  %2036 = vmatprep.mubr.bf16.mxu0 0
  %2037 = vmatmul.mubr.bf16.gmra.mrb[0].mxu0 %v2002
  %v2038 = vpop.f32.mrb[0].mxu0
  %v2039 = vadd.f32 0.0, %v2038
  %v2040 = vpop.f32.mrb[0].mxu0
  %v2041 = vadd.f32 0.0, %v2040
  %v2042 = vpop.f32.mrb[0].mxu0
  %v2043 = vpop.f32.mrb[0].mxu0
  %2044 = vdwg.mxu0
  %2045 = vmatprep.subr.bf16.mxu0 %v1964
  %2046 = vmatpush1.bf16.msra.mxu0 %v1963
  %2047 = vmatprep.subr.bf16.mxu0 %v1969
  %2048 = vmatpush1.bf16.msra.mxu0 %v1968
  %2049 = vmatprep.subr.bf16.mxu0 %v1974
  %2050 = vmatpush1.bf16.msra.mxu0 %v1973
  %2051 = vmatprep.subr.bf16.mxu0 %v1979
  %2052 = vmatpush1.bf16.msra.mxu0 %v1978
  %2053 = vmatprep.subr.bf16.mxu0 0
  %2054 = vmatpush1.bf16.msra.mxu0 0
  %2055 = vmatprep.subr.bf16.mxu0 0
  %2056 = vmatpush1.bf16.msra.mxu0 0
  %2057 = vmatprep.subr.bf16.mxu0 0
  %2058 = vmatpush1.bf16.msra.mxu0 0
  %2059 = vmatprep.subr.bf16.mxu0 0
  %2060 = vmatpush1.bf16.msra.mxu0 0
  %2061 = vmatprep.subr.bf16.mxu0 0
  %2062 = vmatpush1.bf16.msra.mxu0 0
  %2063 = vmatprep.subr.bf16.mxu0 0
  %2064 = vmatpush1.bf16.msra.mxu0 0
  %2065 = vmatprep.subr.bf16.mxu0 0
  %2066 = vmatpush1.bf16.msra.mxu0 0
  %2067 = vmatprep.subr.bf16.mxu0 0
  %2068 = vmatpush1.bf16.msra.mxu0 0
  %2069 = vmatprep.subr.bf16.mxu0 0
  %2070 = vmatpush1.bf16.msra.mxu0 0
  %2071 = vmatprep.subr.bf16.mxu0 0
  %2072 = vmatpush1.bf16.msra.mxu0 0
  %2073 = vmatprep.subr.bf16.mxu0 0
  %2074 = vmatpush1.bf16.msra.mxu0 0
  %2075 = vmatprep.subr.bf16.mxu0 0
  %2076 = vmatpush1.bf16.msra.mxu0 0
  %2077 = vmatprep.mubr.bf16.mxu0 0
  %2078 = vmatmul.mubr.bf16.gmra.mrb[0].mxu0 %v2002
  %v2079 = vpop.f32.mrb[0].mxu0
  %v2080 = vadd.f32 0.0, %v2079
  %v2081 = vpop.f32.mrb[0].mxu0
  %v2082 = vadd.f32 0.0, %v2081
  %v2083 = vpop.f32.mrb[0].mxu0
  %v2084 = vpop.f32.mrb[0].mxu0
  %2085 = vdwg.mxu0
  %2086 = vmatprep.subr.bf16.mxu0 0
  %2087 = vmatpush1.bf16.msra.mxu0 %v1965
  %2088 = vmatprep.subr.bf16.mxu0 0
  %2089 = vmatpush1.bf16.msra.mxu0 %v1970
  %2090 = vmatprep.subr.bf16.mxu0 0
  %2091 = vmatpush1.bf16.msra.mxu0 %v1975
  %2092 = vmatprep.subr.bf16.mxu0 0
  %2093 = vmatpush1.bf16.msra.mxu0 %v1980
  %2094 = vmatprep.subr.bf16.mxu0 0
  %2095 = vmatpush1.bf16.msra.mxu0 0
  %2096 = vmatprep.subr.bf16.mxu0 0
  %2097 = vmatpush1.bf16.msra.mxu0 0
  %2098 = vmatprep.subr.bf16.mxu0 0
  %2099 = vmatpush1.bf16.msra.mxu0 0
  %2100 = vmatprep.subr.bf16.mxu0 0
  %2101 = vmatpush1.bf16.msra.mxu0 0
  %2102 = vmatprep.subr.bf16.mxu0 0
  %2103 = vmatpush1.bf16.msra.mxu0 0
  %2104 = vmatprep.subr.bf16.mxu0 0
  %2105 = vmatpush1.bf16.msra.mxu0 0
  %2106 = vmatprep.subr.bf16.mxu0 0
  %2107 = vmatpush1.bf16.msra.mxu0 0
  %2108 = vmatprep.subr.bf16.mxu0 0
  %2109 = vmatpush1.bf16.msra.mxu0 0
  %2110 = vmatprep.subr.bf16.mxu0 0
  %2111 = vmatpush1.bf16.msra.mxu0 0
  %2112 = vmatprep.subr.bf16.mxu0 0
  %2113 = vmatpush1.bf16.msra.mxu0 0
  %2114 = vmatprep.subr.bf16.mxu0 0
  %2115 = vmatpush1.bf16.msra.mxu0 0
  %2116 = vmatprep.subr.bf16.mxu0 0
  %2117 = vmatpush1.bf16.msra.mxu0 0
  %2118 = vmatprep.mubr.bf16.mxu0 0
  %2119 = vmatmul.mubr.bf16.gmra.mrb[0].mxu0 %v2002
  %v2120 = vpop.f32.mrb[0].mxu0
  %v2121 = vadd.f32 0.0, %v2120
  %v2122 = vpop.f32.mrb[0].mxu0
  %v2123 = vpop.f32.mrb[0].mxu0
  %v2124 = vpop.f32.mrb[0].mxu0
  %2125 = vdwg.mxu0
  %v2126 = vadd.f32 %v1779, %v2039
  %v2127 = vadd.f32 %v1781, %v2041
  %v2128 = vadd.f32 %v1820, %v2080
  %v2129 = vadd.f32 %v1822, %v2082
  %v2130 = vadd.f32 %v1861, %v2121
  %v2131 = vld [vmem:[%s8 + $0x3] sm:$0x1]
  %v2132 = vld [vmem:[%s8 + $0x13] sm:$0x1]
  %v2134 = vrot.slane %v2132, 7
  %v2136 = vsel %vm1350, %v2131, %v2134
  %v2137 = vpack.c.bf16 %v2136, %v2136
  %v2138 = vld [vmem:[%s5 + $0x1e0] sm:$0xff]
  %v2139 = vld [vmem:[%s5 + $0x1e8] sm:$0xff]
  %v2140 = vld [vmem:[%s5 + $0x1f0] sm:$0xf]
  %v2141 = vld [vmem:[%s5 + $0x1f4] sm:$0xff]
  %v2142 = vld [vmem:[%s5 + $0x1fc] sm:$0xff]
  %v2143 = vld [vmem:[%s5 + $0x204] sm:$0xf]
  %v2144 = vld [vmem:[%s5 + $0x208] sm:$0xff]
  %v2145 = vld [vmem:[%s5 + $0x210] sm:$0xff]
  %v2146 = vld [vmem:[%s5 + $0x218] sm:$0xf]
  %v2147 = vld [vmem:[%s5 + $0x21c] sm:$0xff]
  %v2148 = vld [vmem:[%s5 + $0x224] sm:$0xff]
  %v2149 = vld [vmem:[%s5 + $0x22c] sm:$0xf]
  %v2150 = vld [vmem:[%s5 + $0x230] sm:$0xff]
  %v2151 = vld [vmem:[%s5 + $0x238] sm:$0xff]
  %v2152 = vld [vmem:[%s5 + $0x240] sm:$0xf]
  %v2153 = vld [vmem:[%s5 + $0x244] sm:$0xff]
  %v2154 = vld [vmem:[%s5 + $0x24c] sm:$0xff]
  %v2155 = vld [vmem:[%s5 + $0x254] sm:$0xf]
  %v2156 = vld [vmem:[%s5 + $0x258] sm:$0xff]
  %v2157 = vld [vmem:[%s5 + $0x260] sm:$0xff]
  %v2158 = vld [vmem:[%s5 + $0x268] sm:$0xf]
  %v2159 = vld [vmem:[%s5 + $0x26c] sm:$0xff]
  %v2160 = vld [vmem:[%s5 + $0x274] sm:$0xff]
  %v2161 = vld [vmem:[%s5 + $0x27c] sm:$0xf]
  %v2186 = vunpack.c.l.b16 %v2138
  %v2187 = vunpack.c.h.b16 %v2138
  %v2188 = vunpack.c.l.b16 %v2139
  %v2189 = vunpack.c.h.b16 %v2139
  %v2190 = vunpack.c.l.b16 %v2140
  %v2191 = vunpack.c.l.b16 %v2141
  %v2192 = vunpack.c.h.b16 %v2141
  %v2193 = vunpack.c.l.b16 %v2142
  %v2194 = vunpack.c.h.b16 %v2142
  %v2195 = vunpack.c.l.b16 %v2143
  %v2196 = vunpack.c.l.b16 %v2144
  %v2197 = vunpack.c.h.b16 %v2144
  %v2198 = vunpack.c.l.b16 %v2145
  %v2199 = vunpack.c.h.b16 %v2145
  %v2200 = vunpack.c.l.b16 %v2146
  %v2201 = vunpack.c.l.b16 %v2147
  %v2202 = vunpack.c.h.b16 %v2147
  %v2203 = vunpack.c.l.b16 %v2148
  %v2204 = vunpack.c.h.b16 %v2148
  %v2205 = vunpack.c.l.b16 %v2149
  %v2206 = vunpack.c.l.b16 %v2150
  %v2207 = vunpack.c.h.b16 %v2150
  %v2208 = vunpack.c.l.b16 %v2151
  %v2209 = vunpack.c.h.b16 %v2151
  %v2210 = vunpack.c.l.b16 %v2152
  %v2211 = vunpack.c.l.b16 %v2153
  %v2212 = vunpack.c.h.b16 %v2153
  %v2213 = vunpack.c.l.b16 %v2154
  %v2214 = vunpack.c.h.b16 %v2154
  %v2215 = vunpack.c.l.b16 %v2155
  %v2216 = vunpack.c.l.b16 %v2156
  %v2217 = vunpack.c.h.b16 %v2156
  %v2218 = vunpack.c.l.b16 %v2157
  %v2219 = vunpack.c.h.b16 %v2157
  %v2220 = vunpack.c.l.b16 %v2158
  %v2221 = vunpack.c.l.b16 %v2159
  %v2222 = vunpack.c.h.b16 %v2159
  %v2223 = vunpack.c.l.b16 %v2160
  %v2224 = vunpack.c.h.b16 %v2160
  %v2225 = vunpack.c.l.b16 %v2161
  %v2226 = vpack.c.b16 %v2191, %v2186
  %v2227 = vpack.c.b16 %v2192, %v2187
  %v2228 = vpack.c.b16 %v2193, %v2188
  %v2229 = vpack.c.b16 %v2194, %v2189
  %v2230 = vpack.c.b16 %v2195, %v2190
  %v2231 = vpack.c.b16 %v2201, %v2196
  %v2232 = vpack.c.b16 %v2202, %v2197
  %v2233 = vpack.c.b16 %v2203, %v2198
  %v2234 = vpack.c.b16 %v2204, %v2199
  %v2235 = vpack.c.b16 %v2205, %v2200
  %v2236 = vpack.c.b16 %v2211, %v2206
  %v2237 = vpack.c.b16 %v2212, %v2207
  %v2238 = vpack.c.b16 %v2213, %v2208
  %v2239 = vpack.c.b16 %v2214, %v2209
  %v2240 = vpack.c.b16 %v2215, %v2210
  %v2241 = vpack.c.b16 %v2221, %v2216
  %v2242 = vpack.c.b16 %v2222, %v2217
  %v2243 = vpack.c.b16 %v2223, %v2218
  %v2244 = vpack.c.b16 %v2224, %v2219
  %v2245 = vpack.c.b16 %v2225, %v2220
  %v2267 = vsel %vm304, %v2137, 0
  %2269 = vmatprep.subr.bf16.mxu0 %v2227
  %2270 = vmatpush1.bf16.msra.mxu0 %v2226
  %2271 = vmatprep.subr.bf16.mxu0 %v2232
  %2272 = vmatpush1.bf16.msra.mxu0 %v2231
  %2273 = vmatprep.subr.bf16.mxu0 %v2237
  %2274 = vmatpush1.bf16.msra.mxu0 %v2236
  %2275 = vmatprep.subr.bf16.mxu0 %v2242
  %2276 = vmatpush1.bf16.msra.mxu0 %v2241
  %2277 = vmatprep.subr.bf16.mxu0 0
  %2278 = vmatpush1.bf16.msra.mxu0 0
  %2279 = vmatprep.subr.bf16.mxu0 0
  %2280 = vmatpush1.bf16.msra.mxu0 0
  %2281 = vmatprep.subr.bf16.mxu0 0
  %2282 = vmatpush1.bf16.msra.mxu0 0
  %2283 = vmatprep.subr.bf16.mxu0 0
  %2284 = vmatpush1.bf16.msra.mxu0 0
  %2285 = vmatprep.subr.bf16.mxu0 0
  %2286 = vmatpush1.bf16.msra.mxu0 0
  %2287 = vmatprep.subr.bf16.mxu0 0
  %2288 = vmatpush1.bf16.msra.mxu0 0
  %2289 = vmatprep.subr.bf16.mxu0 0
  %2290 = vmatpush1.bf16.msra.mxu0 0
  %2291 = vmatprep.subr.bf16.mxu0 0
  %2292 = vmatpush1.bf16.msra.mxu0 0
  %2293 = vmatprep.subr.bf16.mxu0 0
  %2294 = vmatpush1.bf16.msra.mxu0 0
  %2295 = vmatprep.subr.bf16.mxu0 0
  %2296 = vmatpush1.bf16.msra.mxu0 0
  %2297 = vmatprep.subr.bf16.mxu0 0
  %2298 = vmatpush1.bf16.msra.mxu0 0
  %2299 = vmatprep.subr.bf16.mxu0 0
  %2300 = vmatpush1.bf16.msra.mxu0 0
  %2301 = vmatprep.mubr.bf16.mxu0 0
  %2302 = vmatmul.mubr.bf16.gmra.mrb[0].mxu0 %v2267
  %v2303 = vpop.f32.mrb[0].mxu0
  %v2304 = vadd.f32 0.0, %v2303
  %v2305 = vpop.f32.mrb[0].mxu0
  %v2306 = vadd.f32 0.0, %v2305
  %v2307 = vpop.f32.mrb[0].mxu0
  %v2308 = vpop.f32.mrb[0].mxu0
  %2309 = vdwg.mxu0
  %2310 = vmatprep.subr.bf16.mxu0 %v2229
  %2311 = vmatpush1.bf16.msra.mxu0 %v2228
  %2312 = vmatprep.subr.bf16.mxu0 %v2234
  %2313 = vmatpush1.bf16.msra.mxu0 %v2233
  %2314 = vmatprep.subr.bf16.mxu0 %v2239
  %2315 = vmatpush1.bf16.msra.mxu0 %v2238
  %2316 = vmatprep.subr.bf16.mxu0 %v2244
  %2317 = vmatpush1.bf16.msra.mxu0 %v2243
  %2318 = vmatprep.subr.bf16.mxu0 0
  %2319 = vmatpush1.bf16.msra.mxu0 0
  %2320 = vmatprep.subr.bf16.mxu0 0
  %2321 = vmatpush1.bf16.msra.mxu0 0
  %2322 = vmatprep.subr.bf16.mxu0 0
  %2323 = vmatpush1.bf16.msra.mxu0 0
  %2324 = vmatprep.subr.bf16.mxu0 0
  %2325 = vmatpush1.bf16.msra.mxu0 0
  %2326 = vmatprep.subr.bf16.mxu0 0
  %2327 = vmatpush1.bf16.msra.mxu0 0
  %2328 = vmatprep.subr.bf16.mxu0 0
  %2329 = vmatpush1.bf16.msra.mxu0 0
  %2330 = vmatprep.subr.bf16.mxu0 0
  %2331 = vmatpush1.bf16.msra.mxu0 0
  %2332 = vmatprep.subr.bf16.mxu0 0
  %2333 = vmatpush1.bf16.msra.mxu0 0
  %2334 = vmatprep.subr.bf16.mxu0 0
  %2335 = vmatpush1.bf16.msra.mxu0 0
  %2336 = vmatprep.subr.bf16.mxu0 0
  %2337 = vmatpush1.bf16.msra.mxu0 0
  %2338 = vmatprep.subr.bf16.mxu0 0
  %2339 = vmatpush1.bf16.msra.mxu0 0
  %2340 = vmatprep.subr.bf16.mxu0 0
  %2341 = vmatpush1.bf16.msra.mxu0 0
  %2342 = vmatprep.mubr.bf16.mxu0 0
  %2343 = vmatmul.mubr.bf16.gmra.mrb[0].mxu0 %v2267
  %v2344 = vpop.f32.mrb[0].mxu0
  %v2345 = vadd.f32 0.0, %v2344
  %v2346 = vpop.f32.mrb[0].mxu0
  %v2347 = vadd.f32 0.0, %v2346
  %v2348 = vpop.f32.mrb[0].mxu0
  %v2349 = vpop.f32.mrb[0].mxu0
  %2350 = vdwg.mxu0
  %2351 = vmatprep.subr.bf16.mxu0 0
  %2352 = vmatpush1.bf16.msra.mxu0 %v2230
  %2353 = vmatprep.subr.bf16.mxu0 0
  %2354 = vmatpush1.bf16.msra.mxu0 %v2235
  %2355 = vmatprep.subr.bf16.mxu0 0
  %2356 = vmatpush1.bf16.msra.mxu0 %v2240
  %2357 = vmatprep.subr.bf16.mxu0 0
  %2358 = vmatpush1.bf16.msra.mxu0 %v2245
  %2359 = vmatprep.subr.bf16.mxu0 0
  %2360 = vmatpush1.bf16.msra.mxu0 0
  %2361 = vmatprep.subr.bf16.mxu0 0
  %2362 = vmatpush1.bf16.msra.mxu0 0
  %2363 = vmatprep.subr.bf16.mxu0 0
  %2364 = vmatpush1.bf16.msra.mxu0 0
  %2365 = vmatprep.subr.bf16.mxu0 0
  %2366 = vmatpush1.bf16.msra.mxu0 0
  %2367 = vmatprep.subr.bf16.mxu0 0
  %2368 = vmatpush1.bf16.msra.mxu0 0
  %2369 = vmatprep.subr.bf16.mxu0 0
  %2370 = vmatpush1.bf16.msra.mxu0 0
  %2371 = vmatprep.subr.bf16.mxu0 0
  %2372 = vmatpush1.bf16.msra.mxu0 0
  %2373 = vmatprep.subr.bf16.mxu0 0
  %2374 = vmatpush1.bf16.msra.mxu0 0
  %2375 = vmatprep.subr.bf16.mxu0 0
  %2376 = vmatpush1.bf16.msra.mxu0 0
  %2377 = vmatprep.subr.bf16.mxu0 0
  %2378 = vmatpush1.bf16.msra.mxu0 0
  %2379 = vmatprep.subr.bf16.mxu0 0
  %2380 = vmatpush1.bf16.msra.mxu0 0
  %2381 = vmatprep.subr.bf16.mxu0 0
  %2382 = vmatpush1.bf16.msra.mxu0 0
  %2383 = vmatprep.mubr.bf16.mxu0 0
  %2384 = vmatmul.mubr.bf16.gmra.mrb[0].mxu0 %v2267
  %v2385 = vpop.f32.mrb[0].mxu0
  %v2386 = vadd.f32 0.0, %v2385
  %v2387 = vpop.f32.mrb[0].mxu0
  %v2388 = vpop.f32.mrb[0].mxu0
  %v2389 = vpop.f32.mrb[0].mxu0
  %2390 = vdwg.mxu0
  %v2391 = vadd.f32 %v2126, %v2304
  %v2392 = vadd.f32 %v2127, %v2306
  %v2393 = vadd.f32 %v2128, %v2345
  %v2394 = vadd.f32 %v2129, %v2347
  %v2395 = vadd.f32 %v2130, %v2386
  %v2396 = vld [vmem:[%s8 + $0x4] sm:$0x1]
  %v2397 = vld [vmem:[%s8 + $0x14] sm:$0x1]
  %v2399 = vrot.slane %v2397, 7
  %v2401 = vsel %vm1350, %v2396, %v2399
  %v2402 = vpack.c.bf16 %v2401, %v2401
  %v2403 = vld [vmem:[%s5 + $0x280] sm:$0xff]
  %v2404 = vld [vmem:[%s5 + $0x288] sm:$0xff]
  %v2405 = vld [vmem:[%s5 + $0x290] sm:$0xf]
  %v2406 = vld [vmem:[%s5 + $0x294] sm:$0xff]
  %v2407 = vld [vmem:[%s5 + $0x29c] sm:$0xff]
  %v2408 = vld [vmem:[%s5 + $0x2a4] sm:$0xf]
  %v2409 = vld [vmem:[%s5 + $0x2a8] sm:$0xff]
  %v2410 = vld [vmem:[%s5 + $0x2b0] sm:$0xff]
  %v2411 = vld [vmem:[%s5 + $0x2b8] sm:$0xf]
  %v2412 = vld [vmem:[%s5 + $0x2bc] sm:$0xff]
  %v2413 = vld [vmem:[%s5 + $0x2c4] sm:$0xff]
  %v2414 = vld [vmem:[%s5 + $0x2cc] sm:$0xf]
  %v2415 = vld [vmem:[%s5 + $0x2d0] sm:$0xff]
  %v2416 = vld [vmem:[%s5 + $0x2d8] sm:$0xff]
  %v2417 = vld [vmem:[%s5 + $0x2e0] sm:$0xf]
  %v2418 = vld [vmem:[%s5 + $0x2e4] sm:$0xff]
  %v2419 = vld [vmem:[%s5 + $0x2ec] sm:$0xff]
  %v2420 = vld [vmem:[%s5 + $0x2f4] sm:$0xf]
  %v2421 = vld [vmem:[%s5 + $0x2f8] sm:$0xff]
  %v2422 = vld [vmem:[%s5 + $0x300] sm:$0xff]
  %v2423 = vld [vmem:[%s5 + $0x308] sm:$0xf]
  %v2424 = vld [vmem:[%s5 + $0x30c] sm:$0xff]
  %v2425 = vld [vmem:[%s5 + $0x314] sm:$0xff]
  %v2426 = vld [vmem:[%s5 + $0x31c] sm:$0xf]
  %v2451 = vunpack.c.l.b16 %v2403
  %v2452 = vunpack.c.h.b16 %v2403
  %v2453 = vunpack.c.l.b16 %v2404
  %v2454 = vunpack.c.h.b16 %v2404
  %v2455 = vunpack.c.l.b16 %v2405
  %v2456 = vunpack.c.l.b16 %v2406
  %v2457 = vunpack.c.h.b16 %v2406
  %v2458 = vunpack.c.l.b16 %v2407
  %v2459 = vunpack.c.h.b16 %v2407
  %v2460 = vunpack.c.l.b16 %v2408
  %v2461 = vunpack.c.l.b16 %v2409
  %v2462 = vunpack.c.h.b16 %v2409
  %v2463 = vunpack.c.l.b16 %v2410
  %v2464 = vunpack.c.h.b16 %v2410
  %v2465 = vunpack.c.l.b16 %v2411
  %v2466 = vunpack.c.l.b16 %v2412
  %v2467 = vunpack.c.h.b16 %v2412
  %v2468 = vunpack.c.l.b16 %v2413
  %v2469 = vunpack.c.h.b16 %v2413
  %v2470 = vunpack.c.l.b16 %v2414
  %v2471 = vunpack.c.l.b16 %v2415
  %v2472 = vunpack.c.h.b16 %v2415
  %v2473 = vunpack.c.l.b16 %v2416
  %v2474 = vunpack.c.h.b16 %v2416
  %v2475 = vunpack.c.l.b16 %v2417
  %v2476 = vunpack.c.l.b16 %v2418
  %v2477 = vunpack.c.h.b16 %v2418
  %v2478 = vunpack.c.l.b16 %v2419
  %v2479 = vunpack.c.h.b16 %v2419
  %v2480 = vunpack.c.l.b16 %v2420
  %v2481 = vunpack.c.l.b16 %v2421
  %v2482 = vunpack.c.h.b16 %v2421
  %v2483 = vunpack.c.l.b16 %v2422
  %v2484 = vunpack.c.h.b16 %v2422
  %v2485 = vunpack.c.l.b16 %v2423
  %v2486 = vunpack.c.l.b16 %v2424
  %v2487 = vunpack.c.h.b16 %v2424
  %v2488 = vunpack.c.l.b16 %v2425
  %v2489 = vunpack.c.h.b16 %v2425
  %v2490 = vunpack.c.l.b16 %v2426
  %v2491 = vpack.c.b16 %v2456, %v2451
  %v2492 = vpack.c.b16 %v2457, %v2452
  %v2493 = vpack.c.b16 %v2458, %v2453
  %v2494 = vpack.c.b16 %v2459, %v2454
  %v2495 = vpack.c.b16 %v2460, %v2455
  %v2496 = vpack.c.b16 %v2466, %v2461
  %v2497 = vpack.c.b16 %v2467, %v2462
  %v2498 = vpack.c.b16 %v2468, %v2463
  %v2499 = vpack.c.b16 %v2469, %v2464
  %v2500 = vpack.c.b16 %v2470, %v2465
  %v2501 = vpack.c.b16 %v2476, %v2471
  %v2502 = vpack.c.b16 %v2477, %v2472
  %v2503 = vpack.c.b16 %v2478, %v2473
  %v2504 = vpack.c.b16 %v2479, %v2474
  %v2505 = vpack.c.b16 %v2480, %v2475
  %v2506 = vpack.c.b16 %v2486, %v2481
  %v2507 = vpack.c.b16 %v2487, %v2482
  %v2508 = vpack.c.b16 %v2488, %v2483
  %v2509 = vpack.c.b16 %v2489, %v2484
  %v2510 = vpack.c.b16 %v2490, %v2485
  %v2532 = vsel %vm304, %v2402, 0
  %2534 = vmatprep.subr.bf16.mxu0 %v2492
  %2535 = vmatpush1.bf16.msra.mxu0 %v2491
  %2536 = vmatprep.subr.bf16.mxu0 %v2497
  %2537 = vmatpush1.bf16.msra.mxu0 %v2496
  %2538 = vmatprep.subr.bf16.mxu0 %v2502
  %2539 = vmatpush1.bf16.msra.mxu0 %v2501
  %2540 = vmatprep.subr.bf16.mxu0 %v2507
  %2541 = vmatpush1.bf16.msra.mxu0 %v2506
  %2542 = vmatprep.subr.bf16.mxu0 0
  %2543 = vmatpush1.bf16.msra.mxu0 0
  %2544 = vmatprep.subr.bf16.mxu0 0
  %2545 = vmatpush1.bf16.msra.mxu0 0
  %2546 = vmatprep.subr.bf16.mxu0 0
  %2547 = vmatpush1.bf16.msra.mxu0 0
  %2548 = vmatprep.subr.bf16.mxu0 0
  %2549 = vmatpush1.bf16.msra.mxu0 0
  %2550 = vmatprep.subr.bf16.mxu0 0
  %2551 = vmatpush1.bf16.msra.mxu0 0
  %2552 = vmatprep.subr.bf16.mxu0 0
  %2553 = vmatpush1.bf16.msra.mxu0 0
  %2554 = vmatprep.subr.bf16.mxu0 0
  %2555 = vmatpush1.bf16.msra.mxu0 0
  %2556 = vmatprep.subr.bf16.mxu0 0
  %2557 = vmatpush1.bf16.msra.mxu0 0
  %2558 = vmatprep.subr.bf16.mxu0 0
  %2559 = vmatpush1.bf16.msra.mxu0 0
  %2560 = vmatprep.subr.bf16.mxu0 0
  %2561 = vmatpush1.bf16.msra.mxu0 0
  %2562 = vmatprep.subr.bf16.mxu0 0
  %2563 = vmatpush1.bf16.msra.mxu0 0
  %2564 = vmatprep.subr.bf16.mxu0 0
  %2565 = vmatpush1.bf16.msra.mxu0 0
  %2566 = vmatprep.mubr.bf16.mxu0 0
  %2567 = vmatmul.mubr.bf16.gmra.mrb[0].mxu0 %v2532
  %v2568 = vpop.f32.mrb[0].mxu0
  %v2569 = vadd.f32 0.0, %v2568
  %v2570 = vpop.f32.mrb[0].mxu0
  %v2571 = vadd.f32 0.0, %v2570
  %v2572 = vpop.f32.mrb[0].mxu0
  %v2573 = vpop.f32.mrb[0].mxu0
  %2574 = vdwg.mxu0
  %2575 = vmatprep.subr.bf16.mxu0 %v2494
  %2576 = vmatpush1.bf16.msra.mxu0 %v2493
  %2577 = vmatprep.subr.bf16.mxu0 %v2499
  %2578 = vmatpush1.bf16.msra.mxu0 %v2498
  %2579 = vmatprep.subr.bf16.mxu0 %v2504
  %2580 = vmatpush1.bf16.msra.mxu0 %v2503
  %2581 = vmatprep.subr.bf16.mxu0 %v2509
  %2582 = vmatpush1.bf16.msra.mxu0 %v2508
  %2583 = vmatprep.subr.bf16.mxu0 0
  %2584 = vmatpush1.bf16.msra.mxu0 0
  %2585 = vmatprep.subr.bf16.mxu0 0
  %2586 = vmatpush1.bf16.msra.mxu0 0
  %2587 = vmatprep.subr.bf16.mxu0 0
  %2588 = vmatpush1.bf16.msra.mxu0 0
  %2589 = vmatprep.subr.bf16.mxu0 0
  %2590 = vmatpush1.bf16.msra.mxu0 0
  %2591 = vmatprep.subr.bf16.mxu0 0
  %2592 = vmatpush1.bf16.msra.mxu0 0
  %2593 = vmatprep.subr.bf16.mxu0 0
  %2594 = vmatpush1.bf16.msra.mxu0 0
  %2595 = vmatprep.subr.bf16.mxu0 0
  %2596 = vmatpush1.bf16.msra.mxu0 0
  %2597 = vmatprep.subr.bf16.mxu0 0
  %2598 = vmatpush1.bf16.msra.mxu0 0
  %2599 = vmatprep.subr.bf16.mxu0 0
  %2600 = vmatpush1.bf16.msra.mxu0 0
  %2601 = vmatprep.subr.bf16.mxu0 0
  %2602 = vmatpush1.bf16.msra.mxu0 0
  %2603 = vmatprep.subr.bf16.mxu0 0
  %2604 = vmatpush1.bf16.msra.mxu0 0
  %2605 = vmatprep.subr.bf16.mxu0 0
  %2606 = vmatpush1.bf16.msra.mxu0 0
  %2607 = vmatprep.mubr.bf16.mxu0 0
  %2608 = vmatmul.mubr.bf16.gmra.mrb[0].mxu0 %v2532
  %v2609 = vpop.f32.mrb[0].mxu0
  %v2610 = vadd.f32 0.0, %v2609
  %v2611 = vpop.f32.mrb[0].mxu0
  %v2612 = vadd.f32 0.0, %v2611
  %v2613 = vpop.f32.mrb[0].mxu0
  %v2614 = vpop.f32.mrb[0].mxu0
  %2615 = vdwg.mxu0
  %2616 = vmatprep.subr.bf16.mxu0 0
  %2617 = vmatpush1.bf16.msra.mxu0 %v2495
  %2618 = vmatprep.subr.bf16.mxu0 0
  %2619 = vmatpush1.bf16.msra.mxu0 %v2500
  %2620 = vmatprep.subr.bf16.mxu0 0
  %2621 = vmatpush1.bf16.msra.mxu0 %v2505
  %2622 = vmatprep.subr.bf16.mxu0 0
  %2623 = vmatpush1.bf16.msra.mxu0 %v2510
  %2624 = vmatprep.subr.bf16.mxu0 0
  %2625 = vmatpush1.bf16.msra.mxu0 0
  %2626 = vmatprep.subr.bf16.mxu0 0
  %2627 = vmatpush1.bf16.msra.mxu0 0
  %2628 = vmatprep.subr.bf16.mxu0 0
  %2629 = vmatpush1.bf16.msra.mxu0 0
  %2630 = vmatprep.subr.bf16.mxu0 0
  %2631 = vmatpush1.bf16.msra.mxu0 0
  %2632 = vmatprep.subr.bf16.mxu0 0
  %2633 = vmatpush1.bf16.msra.mxu0 0
  %2634 = vmatprep.subr.bf16.mxu0 0
  %2635 = vmatpush1.bf16.msra.mxu0 0
  %2636 = vmatprep.subr.bf16.mxu0 0
  %2637 = vmatpush1.bf16.msra.mxu0 0
  %2638 = vmatprep.subr.bf16.mxu0 0
  %2639 = vmatpush1.bf16.msra.mxu0 0
  %2640 = vmatprep.subr.bf16.mxu0 0
  %2641 = vmatpush1.bf16.msra.mxu0 0
  %2642 = vmatprep.subr.bf16.mxu0 0
  %2643 = vmatpush1.bf16.msra.mxu0 0
  %2644 = vmatprep.subr.bf16.mxu0 0
  %2645 = vmatpush1.bf16.msra.mxu0 0
  %2646 = vmatprep.subr.bf16.mxu0 0
  %2647 = vmatpush1.bf16.msra.mxu0 0
  %2648 = vmatprep.mubr.bf16.mxu0 0
  %2649 = vmatmul.mubr.bf16.gmra.mrb[0].mxu0 %v2532
  %v2650 = vpop.f32.mrb[0].mxu0
  %v2651 = vadd.f32 0.0, %v2650
  %v2652 = vpop.f32.mrb[0].mxu0
  %v2653 = vpop.f32.mrb[0].mxu0
  %v2654 = vpop.f32.mrb[0].mxu0
  %2655 = vdwg.mxu0
  %v2656 = vadd.f32 %v2391, %v2569
  %v2657 = vadd.f32 %v2392, %v2571
  %v2658 = vadd.f32 %v2393, %v2610
  %v2659 = vadd.f32 %v2394, %v2612
  %v2660 = vadd.f32 %v2395, %v2651
  %v2661 = vld [vmem:[%s8 + $0x5] sm:$0x1]
  %v2662 = vld [vmem:[%s8 + $0x15] sm:$0x1]
  %v2664 = vrot.slane %v2662, 7
  %v2666 = vsel %vm1350, %v2661, %v2664
  %v2667 = vpack.c.bf16 %v2666, %v2666
  %v2668 = vld [vmem:[%s5 + $0x320] sm:$0xff]
  %v2669 = vld [vmem:[%s5 + $0x328] sm:$0xff]
  %v2670 = vld [vmem:[%s5 + $0x330] sm:$0xf]
  %v2671 = vld [vmem:[%s5 + $0x334] sm:$0xff]
  %v2672 = vld [vmem:[%s5 + $0x33c] sm:$0xff]
  %v2673 = vld [vmem:[%s5 + $0x344] sm:$0xf]
  %v2674 = vld [vmem:[%s5 + $0x348] sm:$0xff]
  %v2675 = vld [vmem:[%s5 + $0x350] sm:$0xff]
  %v2676 = vld [vmem:[%s5 + $0x358] sm:$0xf]
  %v2677 = vld [vmem:[%s5 + $0x35c] sm:$0xff]
  %v2678 = vld [vmem:[%s5 + $0x364] sm:$0xff]
  %v2679 = vld [vmem:[%s5 + $0x36c] sm:$0xf]
  %v2680 = vld [vmem:[%s5 + $0x370] sm:$0xff]
  %v2681 = vld [vmem:[%s5 + $0x378] sm:$0xff]
  %v2682 = vld [vmem:[%s5 + $0x380] sm:$0xf]
  %v2683 = vld [vmem:[%s5 + $0x384] sm:$0xff]
  %v2684 = vld [vmem:[%s5 + $0x38c] sm:$0xff]
  %v2685 = vld [vmem:[%s5 + $0x394] sm:$0xf]
  %v2686 = vld [vmem:[%s5 + $0x398] sm:$0xff]
  %v2687 = vld [vmem:[%s5 + $0x3a0] sm:$0xff]
  %v2688 = vld [vmem:[%s5 + $0x3a8] sm:$0xf]
  %v2689 = vld [vmem:[%s5 + $0x3ac] sm:$0xff]
  %v2690 = vld [vmem:[%s5 + $0x3b4] sm:$0xff]
  %v2691 = vld [vmem:[%s5 + $0x3bc] sm:$0xf]
  %v2716 = vunpack.c.l.b16 %v2668
  %v2717 = vunpack.c.h.b16 %v2668
  %v2718 = vunpack.c.l.b16 %v2669
  %v2719 = vunpack.c.h.b16 %v2669
  %v2720 = vunpack.c.l.b16 %v2670
  %v2721 = vunpack.c.l.b16 %v2671
  %v2722 = vunpack.c.h.b16 %v2671
  %v2723 = vunpack.c.l.b16 %v2672
  %v2724 = vunpack.c.h.b16 %v2672
  %v2725 = vunpack.c.l.b16 %v2673
  %v2726 = vunpack.c.l.b16 %v2674
  %v2727 = vunpack.c.h.b16 %v2674
  %v2728 = vunpack.c.l.b16 %v2675
  %v2729 = vunpack.c.h.b16 %v2675
  %v2730 = vunpack.c.l.b16 %v2676
  %v2731 = vunpack.c.l.b16 %v2677
  %v2732 = vunpack.c.h.b16 %v2677
  %v2733 = vunpack.c.l.b16 %v2678
  %v2734 = vunpack.c.h.b16 %v2678
  %v2735 = vunpack.c.l.b16 %v2679
  %v2736 = vunpack.c.l.b16 %v2680
  %v2737 = vunpack.c.h.b16 %v2680
  %v2738 = vunpack.c.l.b16 %v2681
  %v2739 = vunpack.c.h.b16 %v2681
  %v2740 = vunpack.c.l.b16 %v2682
  %v2741 = vunpack.c.l.b16 %v2683
  %v2742 = vunpack.c.h.b16 %v2683
  %v2743 = vunpack.c.l.b16 %v2684
  %v2744 = vunpack.c.h.b16 %v2684
  %v2745 = vunpack.c.l.b16 %v2685
  %v2746 = vunpack.c.l.b16 %v2686
  %v2747 = vunpack.c.h.b16 %v2686
  %v2748 = vunpack.c.l.b16 %v2687
  %v2749 = vunpack.c.h.b16 %v2687
  %v2750 = vunpack.c.l.b16 %v2688
  %v2751 = vunpack.c.l.b16 %v2689
  %v2752 = vunpack.c.h.b16 %v2689
  %v2753 = vunpack.c.l.b16 %v2690
  %v2754 = vunpack.c.h.b16 %v2690
  %v2755 = vunpack.c.l.b16 %v2691
  %v2756 = vpack.c.b16 %v2721, %v2716
  %v2757 = vpack.c.b16 %v2722, %v2717
  %v2758 = vpack.c.b16 %v2723, %v2718
  %v2759 = vpack.c.b16 %v2724, %v2719
  %v2760 = vpack.c.b16 %v2725, %v2720
  %v2761 = vpack.c.b16 %v2731, %v2726
  %v2762 = vpack.c.b16 %v2732, %v2727
  %v2763 = vpack.c.b16 %v2733, %v2728
  %v2764 = vpack.c.b16 %v2734, %v2729
  %v2765 = vpack.c.b16 %v2735, %v2730
  %v2766 = vpack.c.b16 %v2741, %v2736
  %v2767 = vpack.c.b16 %v2742, %v2737
  %v2768 = vpack.c.b16 %v2743, %v2738
  %v2769 = vpack.c.b16 %v2744, %v2739
  %v2770 = vpack.c.b16 %v2745, %v2740
  %v2771 = vpack.c.b16 %v2751, %v2746
  %v2772 = vpack.c.b16 %v2752, %v2747
  %v2773 = vpack.c.b16 %v2753, %v2748
  %v2774 = vpack.c.b16 %v2754, %v2749
  %v2775 = vpack.c.b16 %v2755, %v2750
  %v2797 = vsel %vm304, %v2667, 0
  %2799 = vmatprep.subr.bf16.mxu0 %v2757
  %2800 = vmatpush1.bf16.msra.mxu0 %v2756
  %2801 = vmatprep.subr.bf16.mxu0 %v2762
  %2802 = vmatpush1.bf16.msra.mxu0 %v2761
  %2803 = vmatprep.subr.bf16.mxu0 %v2767
  %2804 = vmatpush1.bf16.msra.mxu0 %v2766
  %2805 = vmatprep.subr.bf16.mxu0 %v2772
  %2806 = vmatpush1.bf16.msra.mxu0 %v2771
  %2807 = vmatprep.subr.bf16.mxu0 0
  %2808 = vmatpush1.bf16.msra.mxu0 0
  %2809 = vmatprep.subr.bf16.mxu0 0
  %2810 = vmatpush1.bf16.msra.mxu0 0
  %2811 = vmatprep.subr.bf16.mxu0 0
  %2812 = vmatpush1.bf16.msra.mxu0 0
  %2813 = vmatprep.subr.bf16.mxu0 0
  %2814 = vmatpush1.bf16.msra.mxu0 0
  %2815 = vmatprep.subr.bf16.mxu0 0
  %2816 = vmatpush1.bf16.msra.mxu0 0
  %2817 = vmatprep.subr.bf16.mxu0 0
  %2818 = vmatpush1.bf16.msra.mxu0 0
  %2819 = vmatprep.subr.bf16.mxu0 0
  %2820 = vmatpush1.bf16.msra.mxu0 0
  %2821 = vmatprep.subr.bf16.mxu0 0
  %2822 = vmatpush1.bf16.msra.mxu0 0
  %2823 = vmatprep.subr.bf16.mxu0 0
  %2824 = vmatpush1.bf16.msra.mxu0 0
  %2825 = vmatprep.subr.bf16.mxu0 0
  %2826 = vmatpush1.bf16.msra.mxu0 0
  %2827 = vmatprep.subr.bf16.mxu0 0
  %2828 = vmatpush1.bf16.msra.mxu0 0
  %2829 = vmatprep.subr.bf16.mxu0 0
  %2830 = vmatpush1.bf16.msra.mxu0 0
  %2831 = vmatprep.mubr.bf16.mxu0 0
  %2832 = vmatmul.mubr.bf16.gmra.mrb[0].mxu0 %v2797
  %v2833 = vpop.f32.mrb[0].mxu0
  %v2834 = vadd.f32 0.0, %v2833
  %v2835 = vpop.f32.mrb[0].mxu0
  %v2836 = vadd.f32 0.0, %v2835
  %v2837 = vpop.f32.mrb[0].mxu0
  %v2838 = vpop.f32.mrb[0].mxu0
  %2839 = vdwg.mxu0
  %2840 = vmatprep.subr.bf16.mxu0 %v2759
  %2841 = vmatpush1.bf16.msra.mxu0 %v2758
  %2842 = vmatprep.subr.bf16.mxu0 %v2764
  %2843 = vmatpush1.bf16.msra.mxu0 %v2763
  %2844 = vmatprep.subr.bf16.mxu0 %v2769
  %2845 = vmatpush1.bf16.msra.mxu0 %v2768
  %2846 = vmatprep.subr.bf16.mxu0 %v2774
  %2847 = vmatpush1.bf16.msra.mxu0 %v2773
  %2848 = vmatprep.subr.bf16.mxu0 0
  %2849 = vmatpush1.bf16.msra.mxu0 0
  %2850 = vmatprep.subr.bf16.mxu0 0
  %2851 = vmatpush1.bf16.msra.mxu0 0
  %2852 = vmatprep.subr.bf16.mxu0 0
  %2853 = vmatpush1.bf16.msra.mxu0 0
  %2854 = vmatprep.subr.bf16.mxu0 0
  %2855 = vmatpush1.bf16.msra.mxu0 0
  %2856 = vmatprep.subr.bf16.mxu0 0
  %2857 = vmatpush1.bf16.msra.mxu0 0
  %2858 = vmatprep.subr.bf16.mxu0 0
  %2859 = vmatpush1.bf16.msra.mxu0 0
  %2860 = vmatprep.subr.bf16.mxu0 0
  %2861 = vmatpush1.bf16.msra.mxu0 0
  %2862 = vmatprep.subr.bf16.mxu0 0
  %2863 = vmatpush1.bf16.msra.mxu0 0
  %2864 = vmatprep.subr.bf16.mxu0 0
  %2865 = vmatpush1.bf16.msra.mxu0 0
  %2866 = vmatprep.subr.bf16.mxu0 0
  %2867 = vmatpush1.bf16.msra.mxu0 0
  %2868 = vmatprep.subr.bf16.mxu0 0
  %2869 = vmatpush1.bf16.msra.mxu0 0
  %2870 = vmatprep.subr.bf16.mxu0 0
  %2871 = vmatpush1.bf16.msra.mxu0 0
  %2872 = vmatprep.mubr.bf16.mxu0 0
  %2873 = vmatmul.mubr.bf16.gmra.mrb[0].mxu0 %v2797
  %v2874 = vpop.f32.mrb[0].mxu0
  %v2875 = vadd.f32 0.0, %v2874
  %v2876 = vpop.f32.mrb[0].mxu0
  %v2877 = vadd.f32 0.0, %v2876
  %v2878 = vpop.f32.mrb[0].mxu0
  %v2879 = vpop.f32.mrb[0].mxu0
  %2880 = vdwg.mxu0
  %2881 = vmatprep.subr.bf16.mxu0 0
  %2882 = vmatpush1.bf16.msra.mxu0 %v2760
  %2883 = vmatprep.subr.bf16.mxu0 0
  %2884 = vmatpush1.bf16.msra.mxu0 %v2765
  %2885 = vmatprep.subr.bf16.mxu0 0
  %2886 = vmatpush1.bf16.msra.mxu0 %v2770
  %2887 = vmatprep.subr.bf16.mxu0 0
  %2888 = vmatpush1.bf16.msra.mxu0 %v2775
  %2889 = vmatprep.subr.bf16.mxu0 0
  %2890 = vmatpush1.bf16.msra.mxu0 0
  %2891 = vmatprep.subr.bf16.mxu0 0
  %2892 = vmatpush1.bf16.msra.mxu0 0
  %2893 = vmatprep.subr.bf16.mxu0 0
  %2894 = vmatpush1.bf16.msra.mxu0 0
  %2895 = vmatprep.subr.bf16.mxu0 0
  %2896 = vmatpush1.bf16.msra.mxu0 0
  %2897 = vmatprep.subr.bf16.mxu0 0
  %2898 = vmatpush1.bf16.msra.mxu0 0
  %2899 = vmatprep.subr.bf16.mxu0 0
  %2900 = vmatpush1.bf16.msra.mxu0 0
  %2901 = vmatprep.subr.bf16.mxu0 0
  %2902 = vmatpush1.bf16.msra.mxu0 0
  %2903 = vmatprep.subr.bf16.mxu0 0
  %2904 = vmatpush1.bf16.msra.mxu0 0
  %2905 = vmatprep.subr.bf16.mxu0 0
  %2906 = vmatpush1.bf16.msra.mxu0 0
  %2907 = vmatprep.subr.bf16.mxu0 0
  %2908 = vmatpush1.bf16.msra.mxu0 0
  %2909 = vmatprep.subr.bf16.mxu0 0
  %2910 = vmatpush1.bf16.msra.mxu0 0
  %2911 = vmatprep.subr.bf16.mxu0 0
  %2912 = vmatpush1.bf16.msra.mxu0 0
  %2913 = vmatprep.mubr.bf16.mxu0 0
  %2914 = vmatmul.mubr.bf16.gmra.mrb[0].mxu0 %v2797
  %v2915 = vpop.f32.mrb[0].mxu0
  %v2916 = vadd.f32 0.0, %v2915
  %v2917 = vpop.f32.mrb[0].mxu0
  %v2918 = vpop.f32.mrb[0].mxu0
  %v2919 = vpop.f32.mrb[0].mxu0
  %2920 = vdwg.mxu0
  %v2921 = vadd.f32 %v2656, %v2834
  %v2922 = vadd.f32 %v2657, %v2836
  %v2923 = vadd.f32 %v2658, %v2875
  %v2924 = vadd.f32 %v2659, %v2877
  %v2925 = vadd.f32 %v2660, %v2916
  %v2926 = vld [vmem:[%s8 + $0x6] sm:$0x1]
  %v2927 = vld [vmem:[%s8 + $0x16] sm:$0x1]
  %v2929 = vrot.slane %v2927, 7
  %v2931 = vsel %vm1350, %v2926, %v2929
  %v2932 = vpack.c.bf16 %v2931, %v2931
  %v2933 = vld [vmem:[%s5 + $0x3c0] sm:$0xff]
  %v2934 = vld [vmem:[%s5 + $0x3c8] sm:$0xff]
  %v2935 = vld [vmem:[%s5 + $0x3d0] sm:$0xf]
  %v2936 = vld [vmem:[%s5 + $0x3d4] sm:$0xff]
  %v2937 = vld [vmem:[%s5 + $0x3dc] sm:$0xff]
  %v2938 = vld [vmem:[%s5 + $0x3e4] sm:$0xf]
  %v2939 = vld [vmem:[%s5 + $0x3e8] sm:$0xff]
  %v2940 = vld [vmem:[%s5 + $0x3f0] sm:$0xff]
  %v2941 = vld [vmem:[%s5 + $0x3f8] sm:$0xf]
  %v2942 = vld [vmem:[%s5 + $0x3fc] sm:$0xff]
  %v2943 = vld [vmem:[%s5 + $0x404] sm:$0xff]
  %v2944 = vld [vmem:[%s5 + $0x40c] sm:$0xf]
  %v2945 = vld [vmem:[%s5 + $0x410] sm:$0xff]
  %v2946 = vld [vmem:[%s5 + $0x418] sm:$0xff]
  %v2947 = vld [vmem:[%s5 + $0x420] sm:$0xf]
  %v2948 = vld [vmem:[%s5 + $0x424] sm:$0xff]
  %v2949 = vld [vmem:[%s5 + $0x42c] sm:$0xff]
  %v2950 = vld [vmem:[%s5 + $0x434] sm:$0xf]
  %v2951 = vld [vmem:[%s5 + $0x438] sm:$0xff]
  %v2952 = vld [vmem:[%s5 + $0x440] sm:$0xff]
  %v2953 = vld [vmem:[%s5 + $0x448] sm:$0xf]
  %v2954 = vld [vmem:[%s5 + $0x44c] sm:$0xff]
  %v2955 = vld [vmem:[%s5 + $0x454] sm:$0xff]
  %v2956 = vld [vmem:[%s5 + $0x45c] sm:$0xf]
  %v2981 = vunpack.c.l.b16 %v2933
  %v2982 = vunpack.c.h.b16 %v2933
  %v2983 = vunpack.c.l.b16 %v2934
  %v2984 = vunpack.c.h.b16 %v2934
  %v2985 = vunpack.c.l.b16 %v2935
  %v2986 = vunpack.c.l.b16 %v2936
  %v2987 = vunpack.c.h.b16 %v2936
  %v2988 = vunpack.c.l.b16 %v2937
  %v2989 = vunpack.c.h.b16 %v2937
  %v2990 = vunpack.c.l.b16 %v2938
  %v2991 = vunpack.c.l.b16 %v2939
  %v2992 = vunpack.c.h.b16 %v2939
  %v2993 = vunpack.c.l.b16 %v2940
  %v2994 = vunpack.c.h.b16 %v2940
  %v2995 = vunpack.c.l.b16 %v2941
  %v2996 = vunpack.c.l.b16 %v2942
  %v2997 = vunpack.c.h.b16 %v2942
  %v2998 = vunpack.c.l.b16 %v2943
  %v2999 = vunpack.c.h.b16 %v2943
  %v3000 = vunpack.c.l.b16 %v2944
  %v3001 = vunpack.c.l.b16 %v2945
  %v3002 = vunpack.c.h.b16 %v2945
  %v3003 = vunpack.c.l.b16 %v2946
  %v3004 = vunpack.c.h.b16 %v2946
  %v3005 = vunpack.c.l.b16 %v2947
  %v3006 = vunpack.c.l.b16 %v2948
  %v3007 = vunpack.c.h.b16 %v2948
  %v3008 = vunpack.c.l.b16 %v2949
  %v3009 = vunpack.c.h.b16 %v2949
  %v3010 = vunpack.c.l.b16 %v2950
  %v3011 = vunpack.c.l.b16 %v2951
  %v3012 = vunpack.c.h.b16 %v2951
  %v3013 = vunpack.c.l.b16 %v2952
  %v3014 = vunpack.c.h.b16 %v2952
  %v3015 = vunpack.c.l.b16 %v2953
  %v3016 = vunpack.c.l.b16 %v2954
  %v3017 = vunpack.c.h.b16 %v2954
  %v3018 = vunpack.c.l.b16 %v2955
  %v3019 = vunpack.c.h.b16 %v2955
  %v3020 = vunpack.c.l.b16 %v2956
  %v3021 = vpack.c.b16 %v2986, %v2981
  %v3022 = vpack.c.b16 %v2987, %v2982
  %v3023 = vpack.c.b16 %v2988, %v2983
  %v3024 = vpack.c.b16 %v2989, %v2984
  %v3025 = vpack.c.b16 %v2990, %v2985
  %v3026 = vpack.c.b16 %v2996, %v2991
  %v3027 = vpack.c.b16 %v2997, %v2992
  %v3028 = vpack.c.b16 %v2998, %v2993
  %v3029 = vpack.c.b16 %v2999, %v2994
  %v3030 = vpack.c.b16 %v3000, %v2995
  %v3031 = vpack.c.b16 %v3006, %v3001
  %v3032 = vpack.c.b16 %v3007, %v3002
  %v3033 = vpack.c.b16 %v3008, %v3003
  %v3034 = vpack.c.b16 %v3009, %v3004
  %v3035 = vpack.c.b16 %v3010, %v3005
  %v3036 = vpack.c.b16 %v3016, %v3011
  %v3037 = vpack.c.b16 %v3017, %v3012
  %v3038 = vpack.c.b16 %v3018, %v3013
  %v3039 = vpack.c.b16 %v3019, %v3014
  %v3040 = vpack.c.b16 %v3020, %v3015
  %v3062 = vsel %vm304, %v2932, 0
  %3064 = vmatprep.subr.bf16.mxu0 %v3022
  %3065 = vmatpush1.bf16.msra.mxu0 %v3021
  %3066 = vmatprep.subr.bf16.mxu0 %v3027
  %3067 = vmatpush1.bf16.msra.mxu0 %v3026
  %3068 = vmatprep.subr.bf16.mxu0 %v3032
  %3069 = vmatpush1.bf16.msra.mxu0 %v3031
  %3070 = vmatprep.subr.bf16.mxu0 %v3037
  %3071 = vmatpush1.bf16.msra.mxu0 %v3036
  %3072 = vmatprep.subr.bf16.mxu0 0
  %3073 = vmatpush1.bf16.msra.mxu0 0
  %3074 = vmatprep.subr.bf16.mxu0 0
  %3075 = vmatpush1.bf16.msra.mxu0 0
  %3076 = vmatprep.subr.bf16.mxu0 0
  %3077 = vmatpush1.bf16.msra.mxu0 0
  %3078 = vmatprep.subr.bf16.mxu0 0
  %3079 = vmatpush1.bf16.msra.mxu0 0
  %3080 = vmatprep.subr.bf16.mxu0 0
  %3081 = vmatpush1.bf16.msra.mxu0 0
  %3082 = vmatprep.subr.bf16.mxu0 0
  %3083 = vmatpush1.bf16.msra.mxu0 0
  %3084 = vmatprep.subr.bf16.mxu0 0
  %3085 = vmatpush1.bf16.msra.mxu0 0
  %3086 = vmatprep.subr.bf16.mxu0 0
  %3087 = vmatpush1.bf16.msra.mxu0 0
  %3088 = vmatprep.subr.bf16.mxu0 0
  %3089 = vmatpush1.bf16.msra.mxu0 0
  %3090 = vmatprep.subr.bf16.mxu0 0
  %3091 = vmatpush1.bf16.msra.mxu0 0
  %3092 = vmatprep.subr.bf16.mxu0 0
  %3093 = vmatpush1.bf16.msra.mxu0 0
  %3094 = vmatprep.subr.bf16.mxu0 0
  %3095 = vmatpush1.bf16.msra.mxu0 0
  %3096 = vmatprep.mubr.bf16.mxu0 0
  %3097 = vmatmul.mubr.bf16.gmra.mrb[0].mxu0 %v3062
  %v3098 = vpop.f32.mrb[0].mxu0
  %v3099 = vadd.f32 0.0, %v3098
  %v3100 = vpop.f32.mrb[0].mxu0
  %v3101 = vadd.f32 0.0, %v3100
  %v3102 = vpop.f32.mrb[0].mxu0
  %v3103 = vpop.f32.mrb[0].mxu0
  %3104 = vdwg.mxu0
  %3105 = vmatprep.subr.bf16.mxu0 %v3024
  %3106 = vmatpush1.bf16.msra.mxu0 %v3023
  %3107 = vmatprep.subr.bf16.mxu0 %v3029
  %3108 = vmatpush1.bf16.msra.mxu0 %v3028
  %3109 = vmatprep.subr.bf16.mxu0 %v3034
  %3110 = vmatpush1.bf16.msra.mxu0 %v3033
  %3111 = vmatprep.subr.bf16.mxu0 %v3039
  %3112 = vmatpush1.bf16.msra.mxu0 %v3038
  %3113 = vmatprep.subr.bf16.mxu0 0
  %3114 = vmatpush1.bf16.msra.mxu0 0
  %3115 = vmatprep.subr.bf16.mxu0 0
  %3116 = vmatpush1.bf16.msra.mxu0 0
  %3117 = vmatprep.subr.bf16.mxu0 0
  %3118 = vmatpush1.bf16.msra.mxu0 0
  %3119 = vmatprep.subr.bf16.mxu0 0
  %3120 = vmatpush1.bf16.msra.mxu0 0
  %3121 = vmatprep.subr.bf16.mxu0 0
  %3122 = vmatpush1.bf16.msra.mxu0 0
  %3123 = vmatprep.subr.bf16.mxu0 0
  %3124 = vmatpush1.bf16.msra.mxu0 0
  %3125 = vmatprep.subr.bf16.mxu0 0
  %3126 = vmatpush1.bf16.msra.mxu0 0
  %3127 = vmatprep.subr.bf16.mxu0 0
  %3128 = vmatpush1.bf16.msra.mxu0 0
  %3129 = vmatprep.subr.bf16.mxu0 0
  %3130 = vmatpush1.bf16.msra.mxu0 0
  %3131 = vmatprep.subr.bf16.mxu0 0
  %3132 = vmatpush1.bf16.msra.mxu0 0
  %3133 = vmatprep.subr.bf16.mxu0 0
  %3134 = vmatpush1.bf16.msra.mxu0 0
  %3135 = vmatprep.subr.bf16.mxu0 0
  %3136 = vmatpush1.bf16.msra.mxu0 0
  %3137 = vmatprep.mubr.bf16.mxu0 0
  %3138 = vmatmul.mubr.bf16.gmra.mrb[0].mxu0 %v3062
  %v3139 = vpop.f32.mrb[0].mxu0
  %v3140 = vadd.f32 0.0, %v3139
  %v3141 = vpop.f32.mrb[0].mxu0
  %v3142 = vadd.f32 0.0, %v3141
  %v3143 = vpop.f32.mrb[0].mxu0
  %v3144 = vpop.f32.mrb[0].mxu0
  %3145 = vdwg.mxu0
  %3146 = vmatprep.subr.bf16.mxu0 0
  %3147 = vmatpush1.bf16.msra.mxu0 %v3025
  %3148 = vmatprep.subr.bf16.mxu0 0
  %3149 = vmatpush1.bf16.msra.mxu0 %v3030
  %3150 = vmatprep.subr.bf16.mxu0 0
  %3151 = vmatpush1.bf16.msra.mxu0 %v3035
  %3152 = vmatprep.subr.bf16.mxu0 0
  %3153 = vmatpush1.bf16.msra.mxu0 %v3040
  %3154 = vmatprep.subr.bf16.mxu0 0
  %3155 = vmatpush1.bf16.msra.mxu0 0
  %3156 = vmatprep.subr.bf16.mxu0 0
  %3157 = vmatpush1.bf16.msra.mxu0 0
  %3158 = vmatprep.subr.bf16.mxu0 0
  %3159 = vmatpush1.bf16.msra.mxu0 0
  %3160 = vmatprep.subr.bf16.mxu0 0
  %3161 = vmatpush1.bf16.msra.mxu0 0
  %3162 = vmatprep.subr.bf16.mxu0 0
  %3163 = vmatpush1.bf16.msra.mxu0 0
  %3164 = vmatprep.subr.bf16.mxu0 0
  %3165 = vmatpush1.bf16.msra.mxu0 0
  %3166 = vmatprep.subr.bf16.mxu0 0
  %3167 = vmatpush1.bf16.msra.mxu0 0
  %3168 = vmatprep.subr.bf16.mxu0 0
  %3169 = vmatpush1.bf16.msra.mxu0 0
  %3170 = vmatprep.subr.bf16.mxu0 0
  %3171 = vmatpush1.bf16.msra.mxu0 0
  %3172 = vmatprep.subr.bf16.mxu0 0
  %3173 = vmatpush1.bf16.msra.mxu0 0
  %3174 = vmatprep.subr.bf16.mxu0 0
  %3175 = vmatpush1.bf16.msra.mxu0 0
  %3176 = vmatprep.subr.bf16.mxu0 0
  %3177 = vmatpush1.bf16.msra.mxu0 0
  %3178 = vmatprep.mubr.bf16.mxu0 0
  %3179 = vmatmul.mubr.bf16.gmra.mrb[0].mxu0 %v3062
  %v3180 = vpop.f32.mrb[0].mxu0
  %v3181 = vadd.f32 0.0, %v3180
  %v3182 = vpop.f32.mrb[0].mxu0
  %v3183 = vpop.f32.mrb[0].mxu0
  %v3184 = vpop.f32.mrb[0].mxu0
  %3185 = vdwg.mxu0
  %v3186 = vadd.f32 %v2921, %v3099
  %v3187 = vadd.f32 %v2922, %v3101
  %v3188 = vadd.f32 %v2923, %v3140
  %v3189 = vadd.f32 %v2924, %v3142
  %v3190 = vadd.f32 %v2925, %v3181
  %v3191 = vld [vmem:[%s8 + $0x7] sm:$0x1]
  %v3192 = vld [vmem:[%s8 + $0x17] sm:$0x1]
  %v3194 = vrot.slane %v3192, 7
  %v3196 = vsel %vm1350, %v3191, %v3194
  %v3197 = vpack.c.bf16 %v3196, %v3196
  %v3198 = vld [vmem:[%s5 + $0x460] sm:$0xff]
  %v3199 = vld [vmem:[%s5 + $0x468] sm:$0xff]
  %v3200 = vld [vmem:[%s5 + $0x470] sm:$0xf]
  %v3201 = vld [vmem:[%s5 + $0x474] sm:$0xff]
  %v3202 = vld [vmem:[%s5 + $0x47c] sm:$0xff]
  %v3203 = vld [vmem:[%s5 + $0x484] sm:$0xf]
  %v3204 = vld [vmem:[%s5 + $0x488] sm:$0xff]
  %v3205 = vld [vmem:[%s5 + $0x490] sm:$0xff]
  %v3206 = vld [vmem:[%s5 + $0x498] sm:$0xf]
  %v3207 = vld [vmem:[%s5 + $0x49c] sm:$0xff]
  %v3208 = vld [vmem:[%s5 + $0x4a4] sm:$0xff]
  %v3209 = vld [vmem:[%s5 + $0x4ac] sm:$0xf]
  %v3210 = vld [vmem:[%s5 + $0x4b0] sm:$0xff]
  %v3211 = vld [vmem:[%s5 + $0x4b8] sm:$0xff]
  %v3212 = vld [vmem:[%s5 + $0x4c0] sm:$0xf]
  %v3213 = vld [vmem:[%s5 + $0x4c4] sm:$0xff]
  %v3214 = vld [vmem:[%s5 + $0x4cc] sm:$0xff]
  %v3215 = vld [vmem:[%s5 + $0x4d4] sm:$0xf]
  %v3216 = vld [vmem:[%s5 + $0x4d8] sm:$0xff]
  %v3217 = vld [vmem:[%s5 + $0x4e0] sm:$0xff]
  %v3218 = vld [vmem:[%s5 + $0x4e8] sm:$0xf]
  %v3219 = vld [vmem:[%s5 + $0x4ec] sm:$0xff]
  %v3220 = vld [vmem:[%s5 + $0x4f4] sm:$0xff]
  %v3221 = vld [vmem:[%s5 + $0x4fc] sm:$0xf]
  %v3246 = vunpack.c.l.b16 %v3198
  %v3247 = vunpack.c.h.b16 %v3198
  %v3248 = vunpack.c.l.b16 %v3199
  %v3249 = vunpack.c.h.b16 %v3199
  %v3250 = vunpack.c.l.b16 %v3200
  %v3251 = vunpack.c.l.b16 %v3201
  %v3252 = vunpack.c.h.b16 %v3201
  %v3253 = vunpack.c.l.b16 %v3202
  %v3254 = vunpack.c.h.b16 %v3202
  %v3255 = vunpack.c.l.b16 %v3203
  %v3256 = vunpack.c.l.b16 %v3204
  %v3257 = vunpack.c.h.b16 %v3204
  %v3258 = vunpack.c.l.b16 %v3205
  %v3259 = vunpack.c.h.b16 %v3205
  %v3260 = vunpack.c.l.b16 %v3206
  %v3261 = vunpack.c.l.b16 %v3207
  %v3262 = vunpack.c.h.b16 %v3207
  %v3263 = vunpack.c.l.b16 %v3208
  %v3264 = vunpack.c.h.b16 %v3208
  %v3265 = vunpack.c.l.b16 %v3209
  %v3266 = vunpack.c.l.b16 %v3210
  %v3267 = vunpack.c.h.b16 %v3210
  %v3268 = vunpack.c.l.b16 %v3211
  %v3269 = vunpack.c.h.b16 %v3211
  %v3270 = vunpack.c.l.b16 %v3212
  %v3271 = vunpack.c.l.b16 %v3213
  %v3272 = vunpack.c.h.b16 %v3213
  %v3273 = vunpack.c.l.b16 %v3214
  %v3274 = vunpack.c.h.b16 %v3214
  %v3275 = vunpack.c.l.b16 %v3215
  %v3276 = vunpack.c.l.b16 %v3216
  %v3277 = vunpack.c.h.b16 %v3216
  %v3278 = vunpack.c.l.b16 %v3217
  %v3279 = vunpack.c.h.b16 %v3217
  %v3280 = vunpack.c.l.b16 %v3218
  %v3281 = vunpack.c.l.b16 %v3219
  %v3282 = vunpack.c.h.b16 %v3219
  %v3283 = vunpack.c.l.b16 %v3220
  %v3284 = vunpack.c.h.b16 %v3220
  %v3285 = vunpack.c.l.b16 %v3221
  %v3286 = vpack.c.b16 %v3251, %v3246
  %v3287 = vpack.c.b16 %v3252, %v3247
  %v3288 = vpack.c.b16 %v3253, %v3248
  %v3289 = vpack.c.b16 %v3254, %v3249
  %v3290 = vpack.c.b16 %v3255, %v3250
  %v3291 = vpack.c.b16 %v3261, %v3256
  %v3292 = vpack.c.b16 %v3262, %v3257
  %v3293 = vpack.c.b16 %v3263, %v3258
  %v3294 = vpack.c.b16 %v3264, %v3259
  %v3295 = vpack.c.b16 %v3265, %v3260
  %v3296 = vpack.c.b16 %v3271, %v3266
  %v3297 = vpack.c.b16 %v3272, %v3267
  %v3298 = vpack.c.b16 %v3273, %v3268
  %v3299 = vpack.c.b16 %v3274, %v3269
  %v3300 = vpack.c.b16 %v3275, %v3270
  %v3301 = vpack.c.b16 %v3281, %v3276
  %v3302 = vpack.c.b16 %v3282, %v3277
  %v3303 = vpack.c.b16 %v3283, %v3278
  %v3304 = vpack.c.b16 %v3284, %v3279
  %v3305 = vpack.c.b16 %v3285, %v3280
  %v3327 = vsel %vm304, %v3197, 0
  %3329 = vmatprep.subr.bf16.mxu0 %v3287
  %3330 = vmatpush1.bf16.msra.mxu0 %v3286
  %3331 = vmatprep.subr.bf16.mxu0 %v3292
  %3332 = vmatpush1.bf16.msra.mxu0 %v3291
  %3333 = vmatprep.subr.bf16.mxu0 %v3297
  %3334 = vmatpush1.bf16.msra.mxu0 %v3296
  %3335 = vmatprep.subr.bf16.mxu0 %v3302
  %3336 = vmatpush1.bf16.msra.mxu0 %v3301
  %3337 = vmatprep.subr.bf16.mxu0 0
  %3338 = vmatpush1.bf16.msra.mxu0 0
  %3339 = vmatprep.subr.bf16.mxu0 0
  %3340 = vmatpush1.bf16.msra.mxu0 0
  %3341 = vmatprep.subr.bf16.mxu0 0
  %3342 = vmatpush1.bf16.msra.mxu0 0
  %3343 = vmatprep.subr.bf16.mxu0 0
  %3344 = vmatpush1.bf16.msra.mxu0 0
  %3345 = vmatprep.subr.bf16.mxu0 0
  %3346 = vmatpush1.bf16.msra.mxu0 0
  %3347 = vmatprep.subr.bf16.mxu0 0
  %3348 = vmatpush1.bf16.msra.mxu0 0
  %3349 = vmatprep.subr.bf16.mxu0 0
  %3350 = vmatpush1.bf16.msra.mxu0 0
  %3351 = vmatprep.subr.bf16.mxu0 0
  %3352 = vmatpush1.bf16.msra.mxu0 0
  %3353 = vmatprep.subr.bf16.mxu0 0
  %3354 = vmatpush1.bf16.msra.mxu0 0
  %3355 = vmatprep.subr.bf16.mxu0 0
  %3356 = vmatpush1.bf16.msra.mxu0 0
  %3357 = vmatprep.subr.bf16.mxu0 0
  %3358 = vmatpush1.bf16.msra.mxu0 0
  %3359 = vmatprep.subr.bf16.mxu0 0
  %3360 = vmatpush1.bf16.msra.mxu0 0
  %3361 = vmatprep.mubr.bf16.mxu0 0
  %3362 = vmatmul.mubr.bf16.gmra.mrb[0].mxu0 %v3327
  %v3363 = vpop.f32.mrb[0].mxu0
  %v3364 = vadd.f32 0.0, %v3363
  %v3365 = vpop.f32.mrb[0].mxu0
  %v3366 = vadd.f32 0.0, %v3365
  %v3367 = vpop.f32.mrb[0].mxu0
  %v3368 = vpop.f32.mrb[0].mxu0
  %3369 = vdwg.mxu0
  %3370 = vmatprep.subr.bf16.mxu0 %v3289
  %3371 = vmatpush1.bf16.msra.mxu0 %v3288
  %3372 = vmatprep.subr.bf16.mxu0 %v3294
  %3373 = vmatpush1.bf16.msra.mxu0 %v3293
  %3374 = vmatprep.subr.bf16.mxu0 %v3299
  %3375 = vmatpush1.bf16.msra.mxu0 %v3298
  %3376 = vmatprep.subr.bf16.mxu0 %v3304
  %3377 = vmatpush1.bf16.msra.mxu0 %v3303
  %3378 = vmatprep.subr.bf16.mxu0 0
  %3379 = vmatpush1.bf16.msra.mxu0 0
  %3380 = vmatprep.subr.bf16.mxu0 0
  %3381 = vmatpush1.bf16.msra.mxu0 0
  %3382 = vmatprep.subr.bf16.mxu0 0
  %3383 = vmatpush1.bf16.msra.mxu0 0
  %3384 = vmatprep.subr.bf16.mxu0 0
  %3385 = vmatpush1.bf16.msra.mxu0 0
  %3386 = vmatprep.subr.bf16.mxu0 0
  %3387 = vmatpush1.bf16.msra.mxu0 0
  %3388 = vmatprep.subr.bf16.mxu0 0
  %3389 = vmatpush1.bf16.msra.mxu0 0
  %3390 = vmatprep.subr.bf16.mxu0 0
  %3391 = vmatpush1.bf16.msra.mxu0 0
  %3392 = vmatprep.subr.bf16.mxu0 0
  %3393 = vmatpush1.bf16.msra.mxu0 0
  %3394 = vmatprep.subr.bf16.mxu0 0
  %3395 = vmatpush1.bf16.msra.mxu0 0
  %3396 = vmatprep.subr.bf16.mxu0 0
  %3397 = vmatpush1.bf16.msra.mxu0 0
  %3398 = vmatprep.subr.bf16.mxu0 0
  %3399 = vmatpush1.bf16.msra.mxu0 0
  %3400 = vmatprep.subr.bf16.mxu0 0
  %3401 = vmatpush1.bf16.msra.mxu0 0
  %3402 = vmatprep.mubr.bf16.mxu0 0
  %3403 = vmatmul.mubr.bf16.gmra.mrb[0].mxu0 %v3327
  %v3404 = vpop.f32.mrb[0].mxu0
  %v3405 = vadd.f32 0.0, %v3404
  %v3406 = vpop.f32.mrb[0].mxu0
  %v3407 = vadd.f32 0.0, %v3406
  %v3408 = vpop.f32.mrb[0].mxu0
  %v3409 = vpop.f32.mrb[0].mxu0
  %3410 = vdwg.mxu0
  %3411 = vmatprep.subr.bf16.mxu0 0
  %3412 = vmatpush1.bf16.msra.mxu0 %v3290
  %3413 = vmatprep.subr.bf16.mxu0 0
  %3414 = vmatpush1.bf16.msra.mxu0 %v3295
  %3415 = vmatprep.subr.bf16.mxu0 0
  %3416 = vmatpush1.bf16.msra.mxu0 %v3300
  %3417 = vmatprep.subr.bf16.mxu0 0
  %3418 = vmatpush1.bf16.msra.mxu0 %v3305
  %3419 = vmatprep.subr.bf16.mxu0 0
  %3420 = vmatpush1.bf16.msra.mxu0 0
  %3421 = vmatprep.subr.bf16.mxu0 0
  %3422 = vmatpush1.bf16.msra.mxu0 0
  %3423 = vmatprep.subr.bf16.mxu0 0
  %3424 = vmatpush1.bf16.msra.mxu0 0
  %3425 = vmatprep.subr.bf16.mxu0 0
  %3426 = vmatpush1.bf16.msra.mxu0 0
  %3427 = vmatprep.subr.bf16.mxu0 0
  %3428 = vmatpush1.bf16.msra.mxu0 0
  %3429 = vmatprep.subr.bf16.mxu0 0
  %3430 = vmatpush1.bf16.msra.mxu0 0
  %3431 = vmatprep.subr.bf16.mxu0 0
  %3432 = vmatpush1.bf16.msra.mxu0 0
  %3433 = vmatprep.subr.bf16.mxu0 0
  %3434 = vmatpush1.bf16.msra.mxu0 0
  %3435 = vmatprep.subr.bf16.mxu0 0
  %3436 = vmatpush1.bf16.msra.mxu0 0
  %3437 = vmatprep.subr.bf16.mxu0 0
  %3438 = vmatpush1.bf16.msra.mxu0 0
  %3439 = vmatprep.subr.bf16.mxu0 0
  %3440 = vmatpush1.bf16.msra.mxu0 0
  %3441 = vmatprep.subr.bf16.mxu0 0
  %3442 = vmatpush1.bf16.msra.mxu0 0
  %3443 = vmatprep.mubr.bf16.mxu0 0
  %3444 = vmatmul.mubr.bf16.gmra.mrb[0].mxu0 %v3327
  %v3445 = vpop.f32.mrb[0].mxu0
  %v3446 = vadd.f32 0.0, %v3445
  %v3447 = vpop.f32.mrb[0].mxu0
  %v3448 = vpop.f32.mrb[0].mxu0
  %v3449 = vpop.f32.mrb[0].mxu0
  %3450 = vdwg.mxu0
  %v3451 = vadd.f32 %v3186, %v3364
  %v3452 = vadd.f32 %v3187, %v3366
  %v3453 = vadd.f32 %v3188, %v3405
  %v3454 = vadd.f32 %v3189, %v3407
  %v3455 = vadd.f32 %v3190, %v3446
  %v3456 = vld [vmem:[%s8 + $0x8] sm:$0x1]
  %v3457 = vld [vmem:[%s8 + $0x18] sm:$0x1]
  %v3459 = vrot.slane %v3457, 7
  %v3461 = vsel %vm1350, %v3456, %v3459
  %v3462 = vpack.c.bf16 %v3461, %v3461
  %v3463 = vld [vmem:[%s5 + $0x500] sm:$0xff]
  %v3464 = vld [vmem:[%s5 + $0x508] sm:$0xff]
  %v3465 = vld [vmem:[%s5 + $0x510] sm:$0xf]
  %v3466 = vld [vmem:[%s5 + $0x514] sm:$0xff]
  %v3467 = vld [vmem:[%s5 + $0x51c] sm:$0xff]
  %v3468 = vld [vmem:[%s5 + $0x524] sm:$0xf]
  %v3469 = vld [vmem:[%s5 + $0x528] sm:$0xff]
  %v3470 = vld [vmem:[%s5 + $0x530] sm:$0xff]
  %v3471 = vld [vmem:[%s5 + $0x538] sm:$0xf]
  %v3472 = vld [vmem:[%s5 + $0x53c] sm:$0xff]
  %v3473 = vld [vmem:[%s5 + $0x544] sm:$0xff]
  %v3474 = vld [vmem:[%s5 + $0x54c] sm:$0xf]
  %v3475 = vld [vmem:[%s5 + $0x550] sm:$0xff]
  %v3476 = vld [vmem:[%s5 + $0x558] sm:$0xff]
  %v3477 = vld [vmem:[%s5 + $0x560] sm:$0xf]
  %v3478 = vld [vmem:[%s5 + $0x564] sm:$0xff]
  %v3479 = vld [vmem:[%s5 + $0x56c] sm:$0xff]
  %v3480 = vld [vmem:[%s5 + $0x574] sm:$0xf]
  %v3481 = vld [vmem:[%s5 + $0x578] sm:$0xff]
  %v3482 = vld [vmem:[%s5 + $0x580] sm:$0xff]
  %v3483 = vld [vmem:[%s5 + $0x588] sm:$0xf]
  %v3484 = vld [vmem:[%s5 + $0x58c] sm:$0xff]
  %v3485 = vld [vmem:[%s5 + $0x594] sm:$0xff]
  %v3486 = vld [vmem:[%s5 + $0x59c] sm:$0xf]
  %v3511 = vunpack.c.l.b16 %v3463
  %v3512 = vunpack.c.h.b16 %v3463
  %v3513 = vunpack.c.l.b16 %v3464
  %v3514 = vunpack.c.h.b16 %v3464
  %v3515 = vunpack.c.l.b16 %v3465
  %v3516 = vunpack.c.l.b16 %v3466
  %v3517 = vunpack.c.h.b16 %v3466
  %v3518 = vunpack.c.l.b16 %v3467
  %v3519 = vunpack.c.h.b16 %v3467
  %v3520 = vunpack.c.l.b16 %v3468
  %v3521 = vunpack.c.l.b16 %v3469
  %v3522 = vunpack.c.h.b16 %v3469
  %v3523 = vunpack.c.l.b16 %v3470
  %v3524 = vunpack.c.h.b16 %v3470
  %v3525 = vunpack.c.l.b16 %v3471
  %v3526 = vunpack.c.l.b16 %v3472
  %v3527 = vunpack.c.h.b16 %v3472
  %v3528 = vunpack.c.l.b16 %v3473
  %v3529 = vunpack.c.h.b16 %v3473
  %v3530 = vunpack.c.l.b16 %v3474
  %v3531 = vunpack.c.l.b16 %v3475
  %v3532 = vunpack.c.h.b16 %v3475
  %v3533 = vunpack.c.l.b16 %v3476
  %v3534 = vunpack.c.h.b16 %v3476
  %v3535 = vunpack.c.l.b16 %v3477
  %v3536 = vunpack.c.l.b16 %v3478
  %v3537 = vunpack.c.h.b16 %v3478
  %v3538 = vunpack.c.l.b16 %v3479
  %v3539 = vunpack.c.h.b16 %v3479
  %v3540 = vunpack.c.l.b16 %v3480
  %v3541 = vunpack.c.l.b16 %v3481
  %v3542 = vunpack.c.h.b16 %v3481
  %v3543 = vunpack.c.l.b16 %v3482
  %v3544 = vunpack.c.h.b16 %v3482
  %v3545 = vunpack.c.l.b16 %v3483
  %v3546 = vunpack.c.l.b16 %v3484
  %v3547 = vunpack.c.h.b16 %v3484
  %v3548 = vunpack.c.l.b16 %v3485
  %v3549 = vunpack.c.h.b16 %v3485
  %v3550 = vunpack.c.l.b16 %v3486
  %v3551 = vpack.c.b16 %v3516, %v3511
  %v3552 = vpack.c.b16 %v3517, %v3512
  %v3553 = vpack.c.b16 %v3518, %v3513
  %v3554 = vpack.c.b16 %v3519, %v3514
  %v3555 = vpack.c.b16 %v3520, %v3515
  %v3556 = vpack.c.b16 %v3526, %v3521
  %v3557 = vpack.c.b16 %v3527, %v3522
  %v3558 = vpack.c.b16 %v3528, %v3523
  %v3559 = vpack.c.b16 %v3529, %v3524
  %v3560 = vpack.c.b16 %v3530, %v3525
  %v3561 = vpack.c.b16 %v3536, %v3531
  %v3562 = vpack.c.b16 %v3537, %v3532
  %v3563 = vpack.c.b16 %v3538, %v3533
  %v3564 = vpack.c.b16 %v3539, %v3534
  %v3565 = vpack.c.b16 %v3540, %v3535
  %v3566 = vpack.c.b16 %v3546, %v3541
  %v3567 = vpack.c.b16 %v3547, %v3542
  %v3568 = vpack.c.b16 %v3548, %v3543
  %v3569 = vpack.c.b16 %v3549, %v3544
  %v3570 = vpack.c.b16 %v3550, %v3545
  %v3592 = vsel %vm304, %v3462, 0
  %3594 = vmatprep.subr.bf16.mxu0 %v3552
  %3595 = vmatpush1.bf16.msra.mxu0 %v3551
  %3596 = vmatprep.subr.bf16.mxu0 %v3557
  %3597 = vmatpush1.bf16.msra.mxu0 %v3556
  %3598 = vmatprep.subr.bf16.mxu0 %v3562
  %3599 = vmatpush1.bf16.msra.mxu0 %v3561
  %3600 = vmatprep.subr.bf16.mxu0 %v3567
  %3601 = vmatpush1.bf16.msra.mxu0 %v3566
  %3602 = vmatprep.subr.bf16.mxu0 0
  %3603 = vmatpush1.bf16.msra.mxu0 0
  %3604 = vmatprep.subr.bf16.mxu0 0
  %3605 = vmatpush1.bf16.msra.mxu0 0
  %3606 = vmatprep.subr.bf16.mxu0 0
  %3607 = vmatpush1.bf16.msra.mxu0 0
  %3608 = vmatprep.subr.bf16.mxu0 0
  %3609 = vmatpush1.bf16.msra.mxu0 0
  %3610 = vmatprep.subr.bf16.mxu0 0
  %3611 = vmatpush1.bf16.msra.mxu0 0
  %3612 = vmatprep.subr.bf16.mxu0 0
  %3613 = vmatpush1.bf16.msra.mxu0 0
  %3614 = vmatprep.subr.bf16.mxu0 0
  %3615 = vmatpush1.bf16.msra.mxu0 0
  %3616 = vmatprep.subr.bf16.mxu0 0
  %3617 = vmatpush1.bf16.msra.mxu0 0
  %3618 = vmatprep.subr.bf16.mxu0 0
  %3619 = vmatpush1.bf16.msra.mxu0 0
  %3620 = vmatprep.subr.bf16.mxu0 0
  %3621 = vmatpush1.bf16.msra.mxu0 0
  %3622 = vmatprep.subr.bf16.mxu0 0
  %3623 = vmatpush1.bf16.msra.mxu0 0
  %3624 = vmatprep.subr.bf16.mxu0 0
  %3625 = vmatpush1.bf16.msra.mxu0 0
  %3626 = vmatprep.mubr.bf16.mxu0 0
  %3627 = vmatmul.mubr.bf16.gmra.mrb[0].mxu0 %v3592
  %v3628 = vpop.f32.mrb[0].mxu0
  %v3629 = vadd.f32 0.0, %v3628
  %v3630 = vpop.f32.mrb[0].mxu0
  %v3631 = vadd.f32 0.0, %v3630
  %v3632 = vpop.f32.mrb[0].mxu0
  %v3633 = vpop.f32.mrb[0].mxu0
  %3634 = vdwg.mxu0
  %3635 = vmatprep.subr.bf16.mxu0 %v3554
  %3636 = vmatpush1.bf16.msra.mxu0 %v3553
  %3637 = vmatprep.subr.bf16.mxu0 %v3559
  %3638 = vmatpush1.bf16.msra.mxu0 %v3558
  %3639 = vmatprep.subr.bf16.mxu0 %v3564
  %3640 = vmatpush1.bf16.msra.mxu0 %v3563
  %3641 = vmatprep.subr.bf16.mxu0 %v3569
  %3642 = vmatpush1.bf16.msra.mxu0 %v3568
  %3643 = vmatprep.subr.bf16.mxu0 0
  %3644 = vmatpush1.bf16.msra.mxu0 0
  %3645 = vmatprep.subr.bf16.mxu0 0
  %3646 = vmatpush1.bf16.msra.mxu0 0
  %3647 = vmatprep.subr.bf16.mxu0 0
  %3648 = vmatpush1.bf16.msra.mxu0 0
  %3649 = vmatprep.subr.bf16.mxu0 0
  %3650 = vmatpush1.bf16.msra.mxu0 0
  %3651 = vmatprep.subr.bf16.mxu0 0
  %3652 = vmatpush1.bf16.msra.mxu0 0
  %3653 = vmatprep.subr.bf16.mxu0 0
  %3654 = vmatpush1.bf16.msra.mxu0 0
  %3655 = vmatprep.subr.bf16.mxu0 0
  %3656 = vmatpush1.bf16.msra.mxu0 0
  %3657 = vmatprep.subr.bf16.mxu0 0
  %3658 = vmatpush1.bf16.msra.mxu0 0
  %3659 = vmatprep.subr.bf16.mxu0 0
  %3660 = vmatpush1.bf16.msra.mxu0 0
  %3661 = vmatprep.subr.bf16.mxu0 0
  %3662 = vmatpush1.bf16.msra.mxu0 0
  %3663 = vmatprep.subr.bf16.mxu0 0
  %3664 = vmatpush1.bf16.msra.mxu0 0
  %3665 = vmatprep.subr.bf16.mxu0 0
  %3666 = vmatpush1.bf16.msra.mxu0 0
  %3667 = vmatprep.mubr.bf16.mxu0 0
  %3668 = vmatmul.mubr.bf16.gmra.mrb[0].mxu0 %v3592
  %v3669 = vpop.f32.mrb[0].mxu0
  %v3670 = vadd.f32 0.0, %v3669
  %v3671 = vpop.f32.mrb[0].mxu0
  %v3672 = vadd.f32 0.0, %v3671
  %v3673 = vpop.f32.mrb[0].mxu0
  %v3674 = vpop.f32.mrb[0].mxu0
  %3675 = vdwg.mxu0
  %3676 = vmatprep.subr.bf16.mxu0 0
  %3677 = vmatpush1.bf16.msra.mxu0 %v3555
  %3678 = vmatprep.subr.bf16.mxu0 0
  %3679 = vmatpush1.bf16.msra.mxu0 %v3560
  %3680 = vmatprep.subr.bf16.mxu0 0
  %3681 = vmatpush1.bf16.msra.mxu0 %v3565
  %3682 = vmatprep.subr.bf16.mxu0 0
  %3683 = vmatpush1.bf16.msra.mxu0 %v3570
  %3684 = vmatprep.subr.bf16.mxu0 0
  %3685 = vmatpush1.bf16.msra.mxu0 0
  %3686 = vmatprep.subr.bf16.mxu0 0
  %3687 = vmatpush1.bf16.msra.mxu0 0
  %3688 = vmatprep.subr.bf16.mxu0 0
  %3689 = vmatpush1.bf16.msra.mxu0 0
  %3690 = vmatprep.subr.bf16.mxu0 0
  %3691 = vmatpush1.bf16.msra.mxu0 0
  %3692 = vmatprep.subr.bf16.mxu0 0
  %3693 = vmatpush1.bf16.msra.mxu0 0
  %3694 = vmatprep.subr.bf16.mxu0 0
  %3695 = vmatpush1.bf16.msra.mxu0 0
  %3696 = vmatprep.subr.bf16.mxu0 0
  %3697 = vmatpush1.bf16.msra.mxu0 0
  %3698 = vmatprep.subr.bf16.mxu0 0
  %3699 = vmatpush1.bf16.msra.mxu0 0
  %3700 = vmatprep.subr.bf16.mxu0 0
  %3701 = vmatpush1.bf16.msra.mxu0 0
  %3702 = vmatprep.subr.bf16.mxu0 0
  %3703 = vmatpush1.bf16.msra.mxu0 0
  %3704 = vmatprep.subr.bf16.mxu0 0
  %3705 = vmatpush1.bf16.msra.mxu0 0
  %3706 = vmatprep.subr.bf16.mxu0 0
  %3707 = vmatpush1.bf16.msra.mxu0 0
  %3708 = vmatprep.mubr.bf16.mxu0 0
  %3709 = vmatmul.mubr.bf16.gmra.mrb[0].mxu0 %v3592
  %v3710 = vpop.f32.mrb[0].mxu0
  %v3711 = vadd.f32 0.0, %v3710
  %v3712 = vpop.f32.mrb[0].mxu0
  %v3713 = vpop.f32.mrb[0].mxu0
  %v3714 = vpop.f32.mrb[0].mxu0
  %3715 = vdwg.mxu0
  %v3716 = vadd.f32 %v3451, %v3629
  %v3717 = vadd.f32 %v3452, %v3631
  %v3718 = vadd.f32 %v3453, %v3670
  %v3719 = vadd.f32 %v3454, %v3672
  %v3720 = vadd.f32 %v3455, %v3711
  %v3721 = vld [vmem:[%s8 + $0x9] sm:$0x1]
  %v3722 = vld [vmem:[%s8 + $0x19] sm:$0x1]
  %v3724 = vrot.slane %v3722, 7
  %v3726 = vsel %vm1350, %v3721, %v3724
  %v3727 = vpack.c.bf16 %v3726, %v3726
  %v3728 = vld [vmem:[%s5 + $0x5a0] sm:$0xff]
  %v3729 = vld [vmem:[%s5 + $0x5a8] sm:$0xff]
  %v3730 = vld [vmem:[%s5 + $0x5b0] sm:$0xf]
  %v3731 = vld [vmem:[%s5 + $0x5b4] sm:$0xff]
  %v3732 = vld [vmem:[%s5 + $0x5bc] sm:$0xff]
  %v3733 = vld [vmem:[%s5 + $0x5c4] sm:$0xf]
  %v3734 = vld [vmem:[%s5 + $0x5c8] sm:$0xff]
  %v3735 = vld [vmem:[%s5 + $0x5d0] sm:$0xff]
  %v3736 = vld [vmem:[%s5 + $0x5d8] sm:$0xf]
  %v3737 = vld [vmem:[%s5 + $0x5dc] sm:$0xff]
  %v3738 = vld [vmem:[%s5 + $0x5e4] sm:$0xff]
  %v3739 = vld [vmem:[%s5 + $0x5ec] sm:$0xf]
  %v3740 = vld [vmem:[%s5 + $0x5f0] sm:$0xff]
  %v3741 = vld [vmem:[%s5 + $0x5f8] sm:$0xff]
  %v3742 = vld [vmem:[%s5 + $0x600] sm:$0xf]
  %v3743 = vld [vmem:[%s5 + $0x604] sm:$0xff]
  %v3744 = vld [vmem:[%s5 + $0x60c] sm:$0xff]
  %v3745 = vld [vmem:[%s5 + $0x614] sm:$0xf]
  %v3746 = vld [vmem:[%s5 + $0x618] sm:$0xff]
  %v3747 = vld [vmem:[%s5 + $0x620] sm:$0xff]
  %v3748 = vld [vmem:[%s5 + $0x628] sm:$0xf]
  %v3749 = vld [vmem:[%s5 + $0x62c] sm:$0xff]
  %v3750 = vld [vmem:[%s5 + $0x634] sm:$0xff]
  %v3751 = vld [vmem:[%s5 + $0x63c] sm:$0xf]
  %v3776 = vunpack.c.l.b16 %v3728
  %v3777 = vunpack.c.h.b16 %v3728
  %v3778 = vunpack.c.l.b16 %v3729
  %v3779 = vunpack.c.h.b16 %v3729
  %v3780 = vunpack.c.l.b16 %v3730
  %v3781 = vunpack.c.l.b16 %v3731
  %v3782 = vunpack.c.h.b16 %v3731
  %v3783 = vunpack.c.l.b16 %v3732
  %v3784 = vunpack.c.h.b16 %v3732
  %v3785 = vunpack.c.l.b16 %v3733
  %v3786 = vunpack.c.l.b16 %v3734
  %v3787 = vunpack.c.h.b16 %v3734
  %v3788 = vunpack.c.l.b16 %v3735
  %v3789 = vunpack.c.h.b16 %v3735
  %v3790 = vunpack.c.l.b16 %v3736
  %v3791 = vunpack.c.l.b16 %v3737
  %v3792 = vunpack.c.h.b16 %v3737
  %v3793 = vunpack.c.l.b16 %v3738
  %v3794 = vunpack.c.h.b16 %v3738
  %v3795 = vunpack.c.l.b16 %v3739
  %v3796 = vunpack.c.l.b16 %v3740
  %v3797 = vunpack.c.h.b16 %v3740
  %v3798 = vunpack.c.l.b16 %v3741
  %v3799 = vunpack.c.h.b16 %v3741
  %v3800 = vunpack.c.l.b16 %v3742
  %v3801 = vunpack.c.l.b16 %v3743
  %v3802 = vunpack.c.h.b16 %v3743
  %v3803 = vunpack.c.l.b16 %v3744
  %v3804 = vunpack.c.h.b16 %v3744
  %v3805 = vunpack.c.l.b16 %v3745
  %v3806 = vunpack.c.l.b16 %v3746
  %v3807 = vunpack.c.h.b16 %v3746
  %v3808 = vunpack.c.l.b16 %v3747
  %v3809 = vunpack.c.h.b16 %v3747
  %v3810 = vunpack.c.l.b16 %v3748
  %v3811 = vunpack.c.l.b16 %v3749
  %v3812 = vunpack.c.h.b16 %v3749
  %v3813 = vunpack.c.l.b16 %v3750
  %v3814 = vunpack.c.h.b16 %v3750
  %v3815 = vunpack.c.l.b16 %v3751
  %v3816 = vpack.c.b16 %v3781, %v3776
  %v3817 = vpack.c.b16 %v3782, %v3777
  %v3818 = vpack.c.b16 %v3783, %v3778
  %v3819 = vpack.c.b16 %v3784, %v3779
  %v3820 = vpack.c.b16 %v3785, %v3780
  %v3821 = vpack.c.b16 %v3791, %v3786
  %v3822 = vpack.c.b16 %v3792, %v3787
  %v3823 = vpack.c.b16 %v3793, %v3788
  %v3824 = vpack.c.b16 %v3794, %v3789
  %v3825 = vpack.c.b16 %v3795, %v3790
  %v3826 = vpack.c.b16 %v3801, %v3796
  %v3827 = vpack.c.b16 %v3802, %v3797
  %v3828 = vpack.c.b16 %v3803, %v3798
  %v3829 = vpack.c.b16 %v3804, %v3799
  %v3830 = vpack.c.b16 %v3805, %v3800
  %v3831 = vpack.c.b16 %v3811, %v3806
  %v3832 = vpack.c.b16 %v3812, %v3807
  %v3833 = vpack.c.b16 %v3813, %v3808
  %v3834 = vpack.c.b16 %v3814, %v3809
  %v3835 = vpack.c.b16 %v3815, %v3810
  %v3857 = vsel %vm304, %v3727, 0
  %3859 = vmatprep.subr.bf16.mxu0 %v3817
  %3860 = vmatpush1.bf16.msra.mxu0 %v3816
  %3861 = vmatprep.subr.bf16.mxu0 %v3822
  %3862 = vmatpush1.bf16.msra.mxu0 %v3821
  %3863 = vmatprep.subr.bf16.mxu0 %v3827
  %3864 = vmatpush1.bf16.msra.mxu0 %v3826
  %3865 = vmatprep.subr.bf16.mxu0 %v3832
  %3866 = vmatpush1.bf16.msra.mxu0 %v3831
  %3867 = vmatprep.subr.bf16.mxu0 0
  %3868 = vmatpush1.bf16.msra.mxu0 0
  %3869 = vmatprep.subr.bf16.mxu0 0
  %3870 = vmatpush1.bf16.msra.mxu0 0
  %3871 = vmatprep.subr.bf16.mxu0 0
  %3872 = vmatpush1.bf16.msra.mxu0 0
  %3873 = vmatprep.subr.bf16.mxu0 0
  %3874 = vmatpush1.bf16.msra.mxu0 0
  %3875 = vmatprep.subr.bf16.mxu0 0
  %3876 = vmatpush1.bf16.msra.mxu0 0
  %3877 = vmatprep.subr.bf16.mxu0 0
  %3878 = vmatpush1.bf16.msra.mxu0 0
  %3879 = vmatprep.subr.bf16.mxu0 0
  %3880 = vmatpush1.bf16.msra.mxu0 0
  %3881 = vmatprep.subr.bf16.mxu0 0
  %3882 = vmatpush1.bf16.msra.mxu0 0
  %3883 = vmatprep.subr.bf16.mxu0 0
  %3884 = vmatpush1.bf16.msra.mxu0 0
  %3885 = vmatprep.subr.bf16.mxu0 0
  %3886 = vmatpush1.bf16.msra.mxu0 0
  %3887 = vmatprep.subr.bf16.mxu0 0
  %3888 = vmatpush1.bf16.msra.mxu0 0
  %3889 = vmatprep.subr.bf16.mxu0 0
  %3890 = vmatpush1.bf16.msra.mxu0 0
  %3891 = vmatprep.mubr.bf16.mxu0 0
  %3892 = vmatmul.mubr.bf16.gmra.mrb[0].mxu0 %v3857
  %v3893 = vpop.f32.mrb[0].mxu0
  %v3894 = vadd.f32 0.0, %v3893
  %v3895 = vpop.f32.mrb[0].mxu0
  %v3896 = vadd.f32 0.0, %v3895
  %v3897 = vpop.f32.mrb[0].mxu0
  %v3898 = vpop.f32.mrb[0].mxu0
  %3899 = vdwg.mxu0
  %3900 = vmatprep.subr.bf16.mxu0 %v3819
  %3901 = vmatpush1.bf16.msra.mxu0 %v3818
  %3902 = vmatprep.subr.bf16.mxu0 %v3824
  %3903 = vmatpush1.bf16.msra.mxu0 %v3823
  %3904 = vmatprep.subr.bf16.mxu0 %v3829
  %3905 = vmatpush1.bf16.msra.mxu0 %v3828
  %3906 = vmatprep.subr.bf16.mxu0 %v3834
  %3907 = vmatpush1.bf16.msra.mxu0 %v3833
  %3908 = vmatprep.subr.bf16.mxu0 0
  %3909 = vmatpush1.bf16.msra.mxu0 0
  %3910 = vmatprep.subr.bf16.mxu0 0
  %3911 = vmatpush1.bf16.msra.mxu0 0
  %3912 = vmatprep.subr.bf16.mxu0 0
  %3913 = vmatpush1.bf16.msra.mxu0 0
  %3914 = vmatprep.subr.bf16.mxu0 0
  %3915 = vmatpush1.bf16.msra.mxu0 0
  %3916 = vmatprep.subr.bf16.mxu0 0
  %3917 = vmatpush1.bf16.msra.mxu0 0
  %3918 = vmatprep.subr.bf16.mxu0 0
  %3919 = vmatpush1.bf16.msra.mxu0 0
  %3920 = vmatprep.subr.bf16.mxu0 0
  %3921 = vmatpush1.bf16.msra.mxu0 0
  %3922 = vmatprep.subr.bf16.mxu0 0
  %3923 = vmatpush1.bf16.msra.mxu0 0
  %3924 = vmatprep.subr.bf16.mxu0 0
  %3925 = vmatpush1.bf16.msra.mxu0 0
  %3926 = vmatprep.subr.bf16.mxu0 0
  %3927 = vmatpush1.bf16.msra.mxu0 0
  %3928 = vmatprep.subr.bf16.mxu0 0
  %3929 = vmatpush1.bf16.msra.mxu0 0
  %3930 = vmatprep.subr.bf16.mxu0 0
  %3931 = vmatpush1.bf16.msra.mxu0 0
  %3932 = vmatprep.mubr.bf16.mxu0 0
  %3933 = vmatmul.mubr.bf16.gmra.mrb[0].mxu0 %v3857
  %v3934 = vpop.f32.mrb[0].mxu0
  %v3935 = vadd.f32 0.0, %v3934
  %v3936 = vpop.f32.mrb[0].mxu0
  %v3937 = vadd.f32 0.0, %v3936
  %v3938 = vpop.f32.mrb[0].mxu0
  %v3939 = vpop.f32.mrb[0].mxu0
  %3940 = vdwg.mxu0
  %3941 = vmatprep.subr.bf16.mxu0 0
  %3942 = vmatpush1.bf16.msra.mxu0 %v3820
  %3943 = vmatprep.subr.bf16.mxu0 0
  %3944 = vmatpush1.bf16.msra.mxu0 %v3825
  %3945 = vmatprep.subr.bf16.mxu0 0
  %3946 = vmatpush1.bf16.msra.mxu0 %v3830
  %3947 = vmatprep.subr.bf16.mxu0 0
  %3948 = vmatpush1.bf16.msra.mxu0 %v3835
  %3949 = vmatprep.subr.bf16.mxu0 0
  %3950 = vmatpush1.bf16.msra.mxu0 0
  %3951 = vmatprep.subr.bf16.mxu0 0
  %3952 = vmatpush1.bf16.msra.mxu0 0
  %3953 = vmatprep.subr.bf16.mxu0 0
  %3954 = vmatpush1.bf16.msra.mxu0 0
  %3955 = vmatprep.subr.bf16.mxu0 0
  %3956 = vmatpush1.bf16.msra.mxu0 0
  %3957 = vmatprep.subr.bf16.mxu0 0
  %3958 = vmatpush1.bf16.msra.mxu0 0
  %3959 = vmatprep.subr.bf16.mxu0 0
  %3960 = vmatpush1.bf16.msra.mxu0 0
  %3961 = vmatprep.subr.bf16.mxu0 0
  %3962 = vmatpush1.bf16.msra.mxu0 0
  %3963 = vmatprep.subr.bf16.mxu0 0
  %3964 = vmatpush1.bf16.msra.mxu0 0
  %3965 = vmatprep.subr.bf16.mxu0 0
  %3966 = vmatpush1.bf16.msra.mxu0 0
  %3967 = vmatprep.subr.bf16.mxu0 0
  %3968 = vmatpush1.bf16.msra.mxu0 0
  %3969 = vmatprep.subr.bf16.mxu0 0
  %3970 = vmatpush1.bf16.msra.mxu0 0
  %3971 = vmatprep.subr.bf16.mxu0 0
  %3972 = vmatpush1.bf16.msra.mxu0 0
  %3973 = vmatprep.mubr.bf16.mxu0 0
  %3974 = vmatmul.mubr.bf16.gmra.mrb[0].mxu0 %v3857
  %v3975 = vpop.f32.mrb[0].mxu0
  %v3976 = vadd.f32 0.0, %v3975
  %v3977 = vpop.f32.mrb[0].mxu0
  %v3978 = vpop.f32.mrb[0].mxu0
  %v3979 = vpop.f32.mrb[0].mxu0
  %3980 = vdwg.mxu0
  %v3981 = vadd.f32 %v3716, %v3894
  %v3982 = vadd.f32 %v3717, %v3896
  %v3983 = vadd.f32 %v3718, %v3935
  %v3984 = vadd.f32 %v3719, %v3937
  %v3985 = vadd.f32 %v3720, %v3976
  %v3986 = vld [vmem:[%s8 + $0xa] sm:$0x1]
  %v3987 = vld [vmem:[%s8 + $0x1a] sm:$0x1]
  %v3989 = vrot.slane %v3987, 7
  %v3991 = vsel %vm1350, %v3986, %v3989
  %v3992 = vpack.c.bf16 %v3991, %v3991
  %v3993 = vld [vmem:[%s5 + $0x640] sm:$0xff]
  %v3994 = vld [vmem:[%s5 + $0x648] sm:$0xff]
  %v3995 = vld [vmem:[%s5 + $0x650] sm:$0xf]
  %v3996 = vld [vmem:[%s5 + $0x654] sm:$0xff]
  %v3997 = vld [vmem:[%s5 + $0x65c] sm:$0xff]
  %v3998 = vld [vmem:[%s5 + $0x664] sm:$0xf]
  %v3999 = vld [vmem:[%s5 + $0x668] sm:$0xff]
  %v4000 = vld [vmem:[%s5 + $0x670] sm:$0xff]
  %v4001 = vld [vmem:[%s5 + $0x678] sm:$0xf]
  %v4002 = vld [vmem:[%s5 + $0x67c] sm:$0xff]
  %v4003 = vld [vmem:[%s5 + $0x684] sm:$0xff]
  %v4004 = vld [vmem:[%s5 + $0x68c] sm:$0xf]
  %v4005 = vld [vmem:[%s5 + $0x690] sm:$0xff]
  %v4006 = vld [vmem:[%s5 + $0x698] sm:$0xff]
  %v4007 = vld [vmem:[%s5 + $0x6a0] sm:$0xf]
  %v4008 = vld [vmem:[%s5 + $0x6a4] sm:$0xff]
  %v4009 = vld [vmem:[%s5 + $0x6ac] sm:$0xff]
  %v4010 = vld [vmem:[%s5 + $0x6b4] sm:$0xf]
  %v4011 = vld [vmem:[%s5 + $0x6b8] sm:$0xff]
  %v4012 = vld [vmem:[%s5 + $0x6c0] sm:$0xff]
  %v4013 = vld [vmem:[%s5 + $0x6c8] sm:$0xf]
  %v4014 = vld [vmem:[%s5 + $0x6cc] sm:$0xff]
  %v4015 = vld [vmem:[%s5 + $0x6d4] sm:$0xff]
  %v4016 = vld [vmem:[%s5 + $0x6dc] sm:$0xf]
  %v4041 = vunpack.c.l.b16 %v3993
  %v4042 = vunpack.c.h.b16 %v3993
  %v4043 = vunpack.c.l.b16 %v3994
  %v4044 = vunpack.c.h.b16 %v3994
  %v4045 = vunpack.c.l.b16 %v3995
  %v4046 = vunpack.c.l.b16 %v3996
  %v4047 = vunpack.c.h.b16 %v3996
  %v4048 = vunpack.c.l.b16 %v3997
  %v4049 = vunpack.c.h.b16 %v3997
  %v4050 = vunpack.c.l.b16 %v3998
  %v4051 = vunpack.c.l.b16 %v3999
  %v4052 = vunpack.c.h.b16 %v3999
  %v4053 = vunpack.c.l.b16 %v4000
  %v4054 = vunpack.c.h.b16 %v4000
  %v4055 = vunpack.c.l.b16 %v4001
  %v4056 = vunpack.c.l.b16 %v4002
  %v4057 = vunpack.c.h.b16 %v4002
  %v4058 = vunpack.c.l.b16 %v4003
  %v4059 = vunpack.c.h.b16 %v4003
  %v4060 = vunpack.c.l.b16 %v4004
  %v4061 = vunpack.c.l.b16 %v4005
  %v4062 = vunpack.c.h.b16 %v4005
  %v4063 = vunpack.c.l.b16 %v4006
  %v4064 = vunpack.c.h.b16 %v4006
  %v4065 = vunpack.c.l.b16 %v4007
  %v4066 = vunpack.c.l.b16 %v4008
  %v4067 = vunpack.c.h.b16 %v4008
  %v4068 = vunpack.c.l.b16 %v4009
  %v4069 = vunpack.c.h.b16 %v4009
  %v4070 = vunpack.c.l.b16 %v4010
  %v4071 = vunpack.c.l.b16 %v4011
  %v4072 = vunpack.c.h.b16 %v4011
  %v4073 = vunpack.c.l.b16 %v4012
  %v4074 = vunpack.c.h.b16 %v4012
  %v4075 = vunpack.c.l.b16 %v4013
  %v4076 = vunpack.c.l.b16 %v4014
  %v4077 = vunpack.c.h.b16 %v4014
  %v4078 = vunpack.c.l.b16 %v4015
  %v4079 = vunpack.c.h.b16 %v4015
  %v4080 = vunpack.c.l.b16 %v4016
  %v4081 = vpack.c.b16 %v4046, %v4041
  %v4082 = vpack.c.b16 %v4047, %v4042
  %v4083 = vpack.c.b16 %v4048, %v4043
  %v4084 = vpack.c.b16 %v4049, %v4044
  %v4085 = vpack.c.b16 %v4050, %v4045
  %v4086 = vpack.c.b16 %v4056, %v4051
  %v4087 = vpack.c.b16 %v4057, %v4052
  %v4088 = vpack.c.b16 %v4058, %v4053
  %v4089 = vpack.c.b16 %v4059, %v4054
  %v4090 = vpack.c.b16 %v4060, %v4055
  %v4091 = vpack.c.b16 %v4066, %v4061
  %v4092 = vpack.c.b16 %v4067, %v4062
  %v4093 = vpack.c.b16 %v4068, %v4063
  %v4094 = vpack.c.b16 %v4069, %v4064
  %v4095 = vpack.c.b16 %v4070, %v4065
  %v4096 = vpack.c.b16 %v4076, %v4071
  %v4097 = vpack.c.b16 %v4077, %v4072
  %v4098 = vpack.c.b16 %v4078, %v4073
  %v4099 = vpack.c.b16 %v4079, %v4074
  %v4100 = vpack.c.b16 %v4080, %v4075
  %v4122 = vsel %vm304, %v3992, 0
  %4124 = vmatprep.subr.bf16.mxu0 %v4082
  %4125 = vmatpush1.bf16.msra.mxu0 %v4081
  %4126 = vmatprep.subr.bf16.mxu0 %v4087
  %4127 = vmatpush1.bf16.msra.mxu0 %v4086
  %4128 = vmatprep.subr.bf16.mxu0 %v4092
  %4129 = vmatpush1.bf16.msra.mxu0 %v4091
  %4130 = vmatprep.subr.bf16.mxu0 %v4097
  %4131 = vmatpush1.bf16.msra.mxu0 %v4096
  %4132 = vmatprep.subr.bf16.mxu0 0
  %4133 = vmatpush1.bf16.msra.mxu0 0
  %4134 = vmatprep.subr.bf16.mxu0 0
  %4135 = vmatpush1.bf16.msra.mxu0 0
  %4136 = vmatprep.subr.bf16.mxu0 0
  %4137 = vmatpush1.bf16.msra.mxu0 0
  %4138 = vmatprep.subr.bf16.mxu0 0
  %4139 = vmatpush1.bf16.msra.mxu0 0
  %4140 = vmatprep.subr.bf16.mxu0 0
  %4141 = vmatpush1.bf16.msra.mxu0 0
  %4142 = vmatprep.subr.bf16.mxu0 0
  %4143 = vmatpush1.bf16.msra.mxu0 0
  %4144 = vmatprep.subr.bf16.mxu0 0
  %4145 = vmatpush1.bf16.msra.mxu0 0
  %4146 = vmatprep.subr.bf16.mxu0 0
  %4147 = vmatpush1.bf16.msra.mxu0 0
  %4148 = vmatprep.subr.bf16.mxu0 0
  %4149 = vmatpush1.bf16.msra.mxu0 0
  %4150 = vmatprep.subr.bf16.mxu0 0
  %4151 = vmatpush1.bf16.msra.mxu0 0
  %4152 = vmatprep.subr.bf16.mxu0 0
  %4153 = vmatpush1.bf16.msra.mxu0 0
  %4154 = vmatprep.subr.bf16.mxu0 0
  %4155 = vmatpush1.bf16.msra.mxu0 0
  %4156 = vmatprep.mubr.bf16.mxu0 0
  %4157 = vmatmul.mubr.bf16.gmra.mrb[0].mxu0 %v4122
  %v4158 = vpop.f32.mrb[0].mxu0
  %v4159 = vadd.f32 0.0, %v4158
  %v4160 = vpop.f32.mrb[0].mxu0
  %v4161 = vadd.f32 0.0, %v4160
  %v4162 = vpop.f32.mrb[0].mxu0
  %v4163 = vpop.f32.mrb[0].mxu0
  %4164 = vdwg.mxu0
  %4165 = vmatprep.subr.bf16.mxu0 %v4084
  %4166 = vmatpush1.bf16.msra.mxu0 %v4083
  %4167 = vmatprep.subr.bf16.mxu0 %v4089
  %4168 = vmatpush1.bf16.msra.mxu0 %v4088
  %4169 = vmatprep.subr.bf16.mxu0 %v4094
  %4170 = vmatpush1.bf16.msra.mxu0 %v4093
  %4171 = vmatprep.subr.bf16.mxu0 %v4099
  %4172 = vmatpush1.bf16.msra.mxu0 %v4098
  %4173 = vmatprep.subr.bf16.mxu0 0
  %4174 = vmatpush1.bf16.msra.mxu0 0
  %4175 = vmatprep.subr.bf16.mxu0 0
  %4176 = vmatpush1.bf16.msra.mxu0 0
  %4177 = vmatprep.subr.bf16.mxu0 0
  %4178 = vmatpush1.bf16.msra.mxu0 0
  %4179 = vmatprep.subr.bf16.mxu0 0
  %4180 = vmatpush1.bf16.msra.mxu0 0
  %4181 = vmatprep.subr.bf16.mxu0 0
  %4182 = vmatpush1.bf16.msra.mxu0 0
  %4183 = vmatprep.subr.bf16.mxu0 0
  %4184 = vmatpush1.bf16.msra.mxu0 0
  %4185 = vmatprep.subr.bf16.mxu0 0
  %4186 = vmatpush1.bf16.msra.mxu0 0
  %4187 = vmatprep.subr.bf16.mxu0 0
  %4188 = vmatpush1.bf16.msra.mxu0 0
  %4189 = vmatprep.subr.bf16.mxu0 0
  %4190 = vmatpush1.bf16.msra.mxu0 0
  %4191 = vmatprep.subr.bf16.mxu0 0
  %4192 = vmatpush1.bf16.msra.mxu0 0
  %4193 = vmatprep.subr.bf16.mxu0 0
  %4194 = vmatpush1.bf16.msra.mxu0 0
  %4195 = vmatprep.subr.bf16.mxu0 0
  %4196 = vmatpush1.bf16.msra.mxu0 0
  %4197 = vmatprep.mubr.bf16.mxu0 0
  %4198 = vmatmul.mubr.bf16.gmra.mrb[0].mxu0 %v4122
  %v4199 = vpop.f32.mrb[0].mxu0
  %v4200 = vadd.f32 0.0, %v4199
  %v4201 = vpop.f32.mrb[0].mxu0
  %v4202 = vadd.f32 0.0, %v4201
  %v4203 = vpop.f32.mrb[0].mxu0
  %v4204 = vpop.f32.mrb[0].mxu0
  %4205 = vdwg.mxu0
  %4206 = vmatprep.subr.bf16.mxu0 0
  %4207 = vmatpush1.bf16.msra.mxu0 %v4085
  %4208 = vmatprep.subr.bf16.mxu0 0
  %4209 = vmatpush1.bf16.msra.mxu0 %v4090
  %4210 = vmatprep.subr.bf16.mxu0 0
  %4211 = vmatpush1.bf16.msra.mxu0 %v4095
  %4212 = vmatprep.subr.bf16.mxu0 0
  %4213 = vmatpush1.bf16.msra.mxu0 %v4100
  %4214 = vmatprep.subr.bf16.mxu0 0
  %4215 = vmatpush1.bf16.msra.mxu0 0
  %4216 = vmatprep.subr.bf16.mxu0 0
  %4217 = vmatpush1.bf16.msra.mxu0 0
  %4218 = vmatprep.subr.bf16.mxu0 0
  %4219 = vmatpush1.bf16.msra.mxu0 0
  %4220 = vmatprep.subr.bf16.mxu0 0
  %4221 = vmatpush1.bf16.msra.mxu0 0
  %4222 = vmatprep.subr.bf16.mxu0 0
  %4223 = vmatpush1.bf16.msra.mxu0 0
  %4224 = vmatprep.subr.bf16.mxu0 0
  %4225 = vmatpush1.bf16.msra.mxu0 0
  %4226 = vmatprep.subr.bf16.mxu0 0
  %4227 = vmatpush1.bf16.msra.mxu0 0
  %4228 = vmatprep.subr.bf16.mxu0 0
  %4229 = vmatpush1.bf16.msra.mxu0 0
  %4230 = vmatprep.subr.bf16.mxu0 0
  %4231 = vmatpush1.bf16.msra.mxu0 0
  %4232 = vmatprep.subr.bf16.mxu0 0
  %4233 = vmatpush1.bf16.msra.mxu0 0
  %4234 = vmatprep.subr.bf16.mxu0 0
  %4235 = vmatpush1.bf16.msra.mxu0 0
  %4236 = vmatprep.subr.bf16.mxu0 0
  %4237 = vmatpush1.bf16.msra.mxu0 0
  %4238 = vmatprep.mubr.bf16.mxu0 0
  %4239 = vmatmul.mubr.bf16.gmra.mrb[0].mxu0 %v4122
  %v4240 = vpop.f32.mrb[0].mxu0
  %v4241 = vadd.f32 0.0, %v4240
  %v4242 = vpop.f32.mrb[0].mxu0
  %v4243 = vpop.f32.mrb[0].mxu0
  %v4244 = vpop.f32.mrb[0].mxu0
  %4245 = vdwg.mxu0
  %v4246 = vadd.f32 %v3981, %v4159
  %v4247 = vadd.f32 %v3982, %v4161
  %v4248 = vadd.f32 %v3983, %v4200
  %v4249 = vadd.f32 %v3984, %v4202
  %v4250 = vadd.f32 %v3985, %v4241
  %v4251 = vld [vmem:[%s8 + $0xb] sm:$0x1]
  %v4252 = vld [vmem:[%s8 + $0x1b] sm:$0x1]
  %v4254 = vrot.slane %v4252, 7
  %v4256 = vsel %vm1350, %v4251, %v4254
  %v4257 = vpack.c.bf16 %v4256, %v4256
  %v4258 = vld [vmem:[%s5 + $0x6e0] sm:$0xff]
  %v4259 = vld [vmem:[%s5 + $0x6e8] sm:$0xff]
  %v4260 = vld [vmem:[%s5 + $0x6f0] sm:$0xf]
  %v4261 = vld [vmem:[%s5 + $0x6f4] sm:$0xff]
  %v4262 = vld [vmem:[%s5 + $0x6fc] sm:$0xff]
  %v4263 = vld [vmem:[%s5 + $0x704] sm:$0xf]
  %v4264 = vld [vmem:[%s5 + $0x708] sm:$0xff]
  %v4265 = vld [vmem:[%s5 + $0x710] sm:$0xff]
  %v4266 = vld [vmem:[%s5 + $0x718] sm:$0xf]
  %v4267 = vld [vmem:[%s5 + $0x71c] sm:$0xff]
  %v4268 = vld [vmem:[%s5 + $0x724] sm:$0xff]
  %v4269 = vld [vmem:[%s5 + $0x72c] sm:$0xf]
  %v4270 = vld [vmem:[%s5 + $0x730] sm:$0xff]
  %v4271 = vld [vmem:[%s5 + $0x738] sm:$0xff]
  %v4272 = vld [vmem:[%s5 + $0x740] sm:$0xf]
  %v4273 = vld [vmem:[%s5 + $0x744] sm:$0xff]
  %v4274 = vld [vmem:[%s5 + $0x74c] sm:$0xff]
  %v4275 = vld [vmem:[%s5 + $0x754] sm:$0xf]
  %v4276 = vld [vmem:[%s5 + $0x758] sm:$0xff]
  %v4277 = vld [vmem:[%s5 + $0x760] sm:$0xff]
  %v4278 = vld [vmem:[%s5 + $0x768] sm:$0xf]
  %v4279 = vld [vmem:[%s5 + $0x76c] sm:$0xff]
  %v4280 = vld [vmem:[%s5 + $0x774] sm:$0xff]
  %v4281 = vld [vmem:[%s5 + $0x77c] sm:$0xf]
  %v4306 = vunpack.c.l.b16 %v4258
  %v4307 = vunpack.c.h.b16 %v4258
  %v4308 = vunpack.c.l.b16 %v4259
  %v4309 = vunpack.c.h.b16 %v4259
  %v4310 = vunpack.c.l.b16 %v4260
  %v4311 = vunpack.c.l.b16 %v4261
  %v4312 = vunpack.c.h.b16 %v4261
  %v4313 = vunpack.c.l.b16 %v4262
  %v4314 = vunpack.c.h.b16 %v4262
  %v4315 = vunpack.c.l.b16 %v4263
  %v4316 = vunpack.c.l.b16 %v4264
  %v4317 = vunpack.c.h.b16 %v4264
  %v4318 = vunpack.c.l.b16 %v4265
  %v4319 = vunpack.c.h.b16 %v4265
  %v4320 = vunpack.c.l.b16 %v4266
  %v4321 = vunpack.c.l.b16 %v4267
  %v4322 = vunpack.c.h.b16 %v4267
  %v4323 = vunpack.c.l.b16 %v4268
  %v4324 = vunpack.c.h.b16 %v4268
  %v4325 = vunpack.c.l.b16 %v4269
  %v4326 = vunpack.c.l.b16 %v4270
  %v4327 = vunpack.c.h.b16 %v4270
  %v4328 = vunpack.c.l.b16 %v4271
  %v4329 = vunpack.c.h.b16 %v4271
  %v4330 = vunpack.c.l.b16 %v4272
  %v4331 = vunpack.c.l.b16 %v4273
  %v4332 = vunpack.c.h.b16 %v4273
  %v4333 = vunpack.c.l.b16 %v4274
  %v4334 = vunpack.c.h.b16 %v4274
  %v4335 = vunpack.c.l.b16 %v4275
  %v4336 = vunpack.c.l.b16 %v4276
  %v4337 = vunpack.c.h.b16 %v4276
  %v4338 = vunpack.c.l.b16 %v4277
  %v4339 = vunpack.c.h.b16 %v4277
  %v4340 = vunpack.c.l.b16 %v4278
  %v4341 = vunpack.c.l.b16 %v4279
  %v4342 = vunpack.c.h.b16 %v4279
  %v4343 = vunpack.c.l.b16 %v4280
  %v4344 = vunpack.c.h.b16 %v4280
  %v4345 = vunpack.c.l.b16 %v4281
  %v4346 = vpack.c.b16 %v4311, %v4306
  %v4347 = vpack.c.b16 %v4312, %v4307
  %v4348 = vpack.c.b16 %v4313, %v4308
  %v4349 = vpack.c.b16 %v4314, %v4309
  %v4350 = vpack.c.b16 %v4315, %v4310
  %v4351 = vpack.c.b16 %v4321, %v4316
  %v4352 = vpack.c.b16 %v4322, %v4317
  %v4353 = vpack.c.b16 %v4323, %v4318
  %v4354 = vpack.c.b16 %v4324, %v4319
  %v4355 = vpack.c.b16 %v4325, %v4320
  %v4356 = vpack.c.b16 %v4331, %v4326
  %v4357 = vpack.c.b16 %v4332, %v4327
  %v4358 = vpack.c.b16 %v4333, %v4328
  %v4359 = vpack.c.b16 %v4334, %v4329
  %v4360 = vpack.c.b16 %v4335, %v4330
  %v4361 = vpack.c.b16 %v4341, %v4336
  %v4362 = vpack.c.b16 %v4342, %v4337
  %v4363 = vpack.c.b16 %v4343, %v4338
  %v4364 = vpack.c.b16 %v4344, %v4339
  %v4365 = vpack.c.b16 %v4345, %v4340
  %v4387 = vsel %vm304, %v4257, 0
  %4389 = vmatprep.subr.bf16.mxu0 %v4347
  %4390 = vmatpush1.bf16.msra.mxu0 %v4346
  %4391 = vmatprep.subr.bf16.mxu0 %v4352
  %4392 = vmatpush1.bf16.msra.mxu0 %v4351
  %4393 = vmatprep.subr.bf16.mxu0 %v4357
  %4394 = vmatpush1.bf16.msra.mxu0 %v4356
  %4395 = vmatprep.subr.bf16.mxu0 %v4362
  %4396 = vmatpush1.bf16.msra.mxu0 %v4361
  %4397 = vmatprep.subr.bf16.mxu0 0
  %4398 = vmatpush1.bf16.msra.mxu0 0
  %4399 = vmatprep.subr.bf16.mxu0 0
  %4400 = vmatpush1.bf16.msra.mxu0 0
  %4401 = vmatprep.subr.bf16.mxu0 0
  %4402 = vmatpush1.bf16.msra.mxu0 0
  %4403 = vmatprep.subr.bf16.mxu0 0
  %4404 = vmatpush1.bf16.msra.mxu0 0
  %4405 = vmatprep.subr.bf16.mxu0 0
  %4406 = vmatpush1.bf16.msra.mxu0 0
  %4407 = vmatprep.subr.bf16.mxu0 0
  %4408 = vmatpush1.bf16.msra.mxu0 0
  %4409 = vmatprep.subr.bf16.mxu0 0
  %4410 = vmatpush1.bf16.msra.mxu0 0
  %4411 = vmatprep.subr.bf16.mxu0 0
  %4412 = vmatpush1.bf16.msra.mxu0 0
  %4413 = vmatprep.subr.bf16.mxu0 0
  %4414 = vmatpush1.bf16.msra.mxu0 0
  %4415 = vmatprep.subr.bf16.mxu0 0
  %4416 = vmatpush1.bf16.msra.mxu0 0
  %4417 = vmatprep.subr.bf16.mxu0 0
  %4418 = vmatpush1.bf16.msra.mxu0 0
  %4419 = vmatprep.subr.bf16.mxu0 0
  %4420 = vmatpush1.bf16.msra.mxu0 0
  %4421 = vmatprep.mubr.bf16.mxu0 0
  %4422 = vmatmul.mubr.bf16.gmra.mrb[0].mxu0 %v4387
  %v4423 = vpop.f32.mrb[0].mxu0
  %v4424 = vadd.f32 0.0, %v4423
  %v4425 = vpop.f32.mrb[0].mxu0
  %v4426 = vadd.f32 0.0, %v4425
  %v4427 = vpop.f32.mrb[0].mxu0
  %v4428 = vpop.f32.mrb[0].mxu0
  %4429 = vdwg.mxu0
  %4430 = vmatprep.subr.bf16.mxu0 %v4349
  %4431 = vmatpush1.bf16.msra.mxu0 %v4348
  %4432 = vmatprep.subr.bf16.mxu0 %v4354
  %4433 = vmatpush1.bf16.msra.mxu0 %v4353
  %4434 = vmatprep.subr.bf16.mxu0 %v4359
  %4435 = vmatpush1.bf16.msra.mxu0 %v4358
  %4436 = vmatprep.subr.bf16.mxu0 %v4364
  %4437 = vmatpush1.bf16.msra.mxu0 %v4363
  %4438 = vmatprep.subr.bf16.mxu0 0
  %4439 = vmatpush1.bf16.msra.mxu0 0
  %4440 = vmatprep.subr.bf16.mxu0 0
  %4441 = vmatpush1.bf16.msra.mxu0 0
  %4442 = vmatprep.subr.bf16.mxu0 0
  %4443 = vmatpush1.bf16.msra.mxu0 0
  %4444 = vmatprep.subr.bf16.mxu0 0
  %4445 = vmatpush1.bf16.msra.mxu0 0
  %4446 = vmatprep.subr.bf16.mxu0 0
  %4447 = vmatpush1.bf16.msra.mxu0 0
  %4448 = vmatprep.subr.bf16.mxu0 0
  %4449 = vmatpush1.bf16.msra.mxu0 0
  %4450 = vmatprep.subr.bf16.mxu0 0
  %4451 = vmatpush1.bf16.msra.mxu0 0
  %4452 = vmatprep.subr.bf16.mxu0 0
  %4453 = vmatpush1.bf16.msra.mxu0 0
  %4454 = vmatprep.subr.bf16.mxu0 0
  %4455 = vmatpush1.bf16.msra.mxu0 0
  %4456 = vmatprep.subr.bf16.mxu0 0
  %4457 = vmatpush1.bf16.msra.mxu0 0
  %4458 = vmatprep.subr.bf16.mxu0 0
  %4459 = vmatpush1.bf16.msra.mxu0 0
  %4460 = vmatprep.subr.bf16.mxu0 0
  %4461 = vmatpush1.bf16.msra.mxu0 0
  %4462 = vmatprep.mubr.bf16.mxu0 0
  %4463 = vmatmul.mubr.bf16.gmra.mrb[0].mxu0 %v4387
  %v4464 = vpop.f32.mrb[0].mxu0
  %v4465 = vadd.f32 0.0, %v4464
  %v4466 = vpop.f32.mrb[0].mxu0
  %v4467 = vadd.f32 0.0, %v4466
  %v4468 = vpop.f32.mrb[0].mxu0
  %v4469 = vpop.f32.mrb[0].mxu0
  %4470 = vdwg.mxu0
  %4471 = vmatprep.subr.bf16.mxu0 0
  %4472 = vmatpush1.bf16.msra.mxu0 %v4350
  %4473 = vmatprep.subr.bf16.mxu0 0
  %4474 = vmatpush1.bf16.msra.mxu0 %v4355
  %4475 = vmatprep.subr.bf16.mxu0 0
  %4476 = vmatpush1.bf16.msra.mxu0 %v4360
  %4477 = vmatprep.subr.bf16.mxu0 0
  %4478 = vmatpush1.bf16.msra.mxu0 %v4365
  %4479 = vmatprep.subr.bf16.mxu0 0
  %4480 = vmatpush1.bf16.msra.mxu0 0
  %4481 = vmatprep.subr.bf16.mxu0 0
  %4482 = vmatpush1.bf16.msra.mxu0 0
  %4483 = vmatprep.subr.bf16.mxu0 0
  %4484 = vmatpush1.bf16.msra.mxu0 0
  %4485 = vmatprep.subr.bf16.mxu0 0
  %4486 = vmatpush1.bf16.msra.mxu0 0
  %4487 = vmatprep.subr.bf16.mxu0 0
  %4488 = vmatpush1.bf16.msra.mxu0 0
  %4489 = vmatprep.subr.bf16.mxu0 0
  %4490 = vmatpush1.bf16.msra.mxu0 0
  %4491 = vmatprep.subr.bf16.mxu0 0
  %4492 = vmatpush1.bf16.msra.mxu0 0
  %4493 = vmatprep.subr.bf16.mxu0 0
  %4494 = vmatpush1.bf16.msra.mxu0 0
  %4495 = vmatprep.subr.bf16.mxu0 0
  %4496 = vmatpush1.bf16.msra.mxu0 0
  %4497 = vmatprep.subr.bf16.mxu0 0
  %4498 = vmatpush1.bf16.msra.mxu0 0
  %4499 = vmatprep.subr.bf16.mxu0 0
  %4500 = vmatpush1.bf16.msra.mxu0 0
  %4501 = vmatprep.subr.bf16.mxu0 0
  %4502 = vmatpush1.bf16.msra.mxu0 0
  %4503 = vmatprep.mubr.bf16.mxu0 0
  %4504 = vmatmul.mubr.bf16.gmra.mrb[0].mxu0 %v4387
  %v4505 = vpop.f32.mrb[0].mxu0
  %v4506 = vadd.f32 0.0, %v4505
  %v4507 = vpop.f32.mrb[0].mxu0
  %v4508 = vpop.f32.mrb[0].mxu0
  %v4509 = vpop.f32.mrb[0].mxu0
  %4510 = vdwg.mxu0
  %v4511 = vadd.f32 %v4246, %v4424
  %v4512 = vadd.f32 %v4247, %v4426
  %v4513 = vadd.f32 %v4248, %v4465
  %v4514 = vadd.f32 %v4249, %v4467
  %v4515 = vadd.f32 %v4250, %v4506
  %v4516 = vld [vmem:[%s8 + $0xc] sm:$0x1]
  %v4517 = vld [vmem:[%s8 + $0x1c] sm:$0x1]
  %v4519 = vrot.slane %v4517, 7
  %v4521 = vsel %vm1350, %v4516, %v4519
  %v4522 = vpack.c.bf16 %v4521, %v4521
  %v4523 = vld [vmem:[%s5 + $0x780] sm:$0xff]
  %v4524 = vld [vmem:[%s5 + $0x788] sm:$0xff]
  %v4525 = vld [vmem:[%s5 + $0x790] sm:$0xf]
  %v4526 = vld [vmem:[%s5 + $0x794] sm:$0xff]
  %v4527 = vld [vmem:[%s5 + $0x79c] sm:$0xff]
  %v4528 = vld [vmem:[%s5 + $0x7a4] sm:$0xf]
  %v4529 = vld [vmem:[%s5 + $0x7a8] sm:$0xff]
  %v4530 = vld [vmem:[%s5 + $0x7b0] sm:$0xff]
  %v4531 = vld [vmem:[%s5 + $0x7b8] sm:$0xf]
  %v4532 = vld [vmem:[%s5 + $0x7bc] sm:$0xff]
  %v4533 = vld [vmem:[%s5 + $0x7c4] sm:$0xff]
  %v4534 = vld [vmem:[%s5 + $0x7cc] sm:$0xf]
  %v4535 = vld [vmem:[%s5 + $0x7d0] sm:$0xff]
  %v4536 = vld [vmem:[%s5 + $0x7d8] sm:$0xff]
  %v4537 = vld [vmem:[%s5 + $0x7e0] sm:$0xf]
  %v4538 = vld [vmem:[%s5 + $0x7e4] sm:$0xff]
  %v4539 = vld [vmem:[%s5 + $0x7ec] sm:$0xff]
  %v4540 = vld [vmem:[%s5 + $0x7f4] sm:$0xf]
  %v4541 = vld [vmem:[%s5 + $0x7f8] sm:$0xff]
  %v4542 = vld [vmem:[%s5 + $0x800] sm:$0xff]
  %v4543 = vld [vmem:[%s5 + $0x808] sm:$0xf]
  %v4544 = vld [vmem:[%s5 + $0x80c] sm:$0xff]
  %v4545 = vld [vmem:[%s5 + $0x814] sm:$0xff]
  %v4546 = vld [vmem:[%s5 + $0x81c] sm:$0xf]
  %v4571 = vunpack.c.l.b16 %v4523
  %v4572 = vunpack.c.h.b16 %v4523
  %v4573 = vunpack.c.l.b16 %v4524
  %v4574 = vunpack.c.h.b16 %v4524
  %v4575 = vunpack.c.l.b16 %v4525
  %v4576 = vunpack.c.l.b16 %v4526
  %v4577 = vunpack.c.h.b16 %v4526
  %v4578 = vunpack.c.l.b16 %v4527
  %v4579 = vunpack.c.h.b16 %v4527
  %v4580 = vunpack.c.l.b16 %v4528
  %v4581 = vunpack.c.l.b16 %v4529
  %v4582 = vunpack.c.h.b16 %v4529
  %v4583 = vunpack.c.l.b16 %v4530
  %v4584 = vunpack.c.h.b16 %v4530
  %v4585 = vunpack.c.l.b16 %v4531
  %v4586 = vunpack.c.l.b16 %v4532
  %v4587 = vunpack.c.h.b16 %v4532
  %v4588 = vunpack.c.l.b16 %v4533
  %v4589 = vunpack.c.h.b16 %v4533
  %v4590 = vunpack.c.l.b16 %v4534
  %v4591 = vunpack.c.l.b16 %v4535
  %v4592 = vunpack.c.h.b16 %v4535
  %v4593 = vunpack.c.l.b16 %v4536
  %v4594 = vunpack.c.h.b16 %v4536
  %v4595 = vunpack.c.l.b16 %v4537
  %v4596 = vunpack.c.l.b16 %v4538
  %v4597 = vunpack.c.h.b16 %v4538
  %v4598 = vunpack.c.l.b16 %v4539
  %v4599 = vunpack.c.h.b16 %v4539
  %v4600 = vunpack.c.l.b16 %v4540
  %v4601 = vunpack.c.l.b16 %v4541
  %v4602 = vunpack.c.h.b16 %v4541
  %v4603 = vunpack.c.l.b16 %v4542
  %v4604 = vunpack.c.h.b16 %v4542
  %v4605 = vunpack.c.l.b16 %v4543
  %v4606 = vunpack.c.l.b16 %v4544
  %v4607 = vunpack.c.h.b16 %v4544
  %v4608 = vunpack.c.l.b16 %v4545
  %v4609 = vunpack.c.h.b16 %v4545
  %v4610 = vunpack.c.l.b16 %v4546
  %v4611 = vpack.c.b16 %v4576, %v4571
  %v4612 = vpack.c.b16 %v4577, %v4572
  %v4613 = vpack.c.b16 %v4578, %v4573
  %v4614 = vpack.c.b16 %v4579, %v4574
  %v4615 = vpack.c.b16 %v4580, %v4575
  %v4616 = vpack.c.b16 %v4586, %v4581
  %v4617 = vpack.c.b16 %v4587, %v4582
  %v4618 = vpack.c.b16 %v4588, %v4583
  %v4619 = vpack.c.b16 %v4589, %v4584
  %v4620 = vpack.c.b16 %v4590, %v4585
  %v4621 = vpack.c.b16 %v4596, %v4591
  %v4622 = vpack.c.b16 %v4597, %v4592
  %v4623 = vpack.c.b16 %v4598, %v4593
  %v4624 = vpack.c.b16 %v4599, %v4594
  %v4625 = vpack.c.b16 %v4600, %v4595
  %v4626 = vpack.c.b16 %v4606, %v4601
  %v4627 = vpack.c.b16 %v4607, %v4602
  %v4628 = vpack.c.b16 %v4608, %v4603
  %v4629 = vpack.c.b16 %v4609, %v4604
  %v4630 = vpack.c.b16 %v4610, %v4605
  %v4652 = vsel %vm304, %v4522, 0
  %4654 = vmatprep.subr.bf16.mxu0 %v4612
  %4655 = vmatpush1.bf16.msra.mxu0 %v4611
  %4656 = vmatprep.subr.bf16.mxu0 %v4617
  %4657 = vmatpush1.bf16.msra.mxu0 %v4616
  %4658 = vmatprep.subr.bf16.mxu0 %v4622
  %4659 = vmatpush1.bf16.msra.mxu0 %v4621
  %4660 = vmatprep.subr.bf16.mxu0 %v4627
  %4661 = vmatpush1.bf16.msra.mxu0 %v4626
  %4662 = vmatprep.subr.bf16.mxu0 0
  %4663 = vmatpush1.bf16.msra.mxu0 0
  %4664 = vmatprep.subr.bf16.mxu0 0
  %4665 = vmatpush1.bf16.msra.mxu0 0
  %4666 = vmatprep.subr.bf16.mxu0 0
  %4667 = vmatpush1.bf16.msra.mxu0 0
  %4668 = vmatprep.subr.bf16.mxu0 0
  %4669 = vmatpush1.bf16.msra.mxu0 0
  %4670 = vmatprep.subr.bf16.mxu0 0
  %4671 = vmatpush1.bf16.msra.mxu0 0
  %4672 = vmatprep.subr.bf16.mxu0 0
  %4673 = vmatpush1.bf16.msra.mxu0 0
  %4674 = vmatprep.subr.bf16.mxu0 0
  %4675 = vmatpush1.bf16.msra.mxu0 0
  %4676 = vmatprep.subr.bf16.mxu0 0
  %4677 = vmatpush1.bf16.msra.mxu0 0
  %4678 = vmatprep.subr.bf16.mxu0 0
  %4679 = vmatpush1.bf16.msra.mxu0 0
  %4680 = vmatprep.subr.bf16.mxu0 0
  %4681 = vmatpush1.bf16.msra.mxu0 0
  %4682 = vmatprep.subr.bf16.mxu0 0
  %4683 = vmatpush1.bf16.msra.mxu0 0
  %4684 = vmatprep.subr.bf16.mxu0 0
  %4685 = vmatpush1.bf16.msra.mxu0 0
  %4686 = vmatprep.mubr.bf16.mxu0 0
  %4687 = vmatmul.mubr.bf16.gmra.mrb[0].mxu0 %v4652
  %v4688 = vpop.f32.mrb[0].mxu0
  %v4689 = vadd.f32 0.0, %v4688
  %v4690 = vpop.f32.mrb[0].mxu0
  %v4691 = vadd.f32 0.0, %v4690
  %v4692 = vpop.f32.mrb[0].mxu0
  %v4693 = vpop.f32.mrb[0].mxu0
  %4694 = vdwg.mxu0
  %4695 = vmatprep.subr.bf16.mxu0 %v4614
  %4696 = vmatpush1.bf16.msra.mxu0 %v4613
  %4697 = vmatprep.subr.bf16.mxu0 %v4619
  %4698 = vmatpush1.bf16.msra.mxu0 %v4618
  %4699 = vmatprep.subr.bf16.mxu0 %v4624
  %4700 = vmatpush1.bf16.msra.mxu0 %v4623
  %4701 = vmatprep.subr.bf16.mxu0 %v4629
  %4702 = vmatpush1.bf16.msra.mxu0 %v4628
  %4703 = vmatprep.subr.bf16.mxu0 0
  %4704 = vmatpush1.bf16.msra.mxu0 0
  %4705 = vmatprep.subr.bf16.mxu0 0
  %4706 = vmatpush1.bf16.msra.mxu0 0
  %4707 = vmatprep.subr.bf16.mxu0 0
  %4708 = vmatpush1.bf16.msra.mxu0 0
  %4709 = vmatprep.subr.bf16.mxu0 0
  %4710 = vmatpush1.bf16.msra.mxu0 0
  %4711 = vmatprep.subr.bf16.mxu0 0
  %4712 = vmatpush1.bf16.msra.mxu0 0
  %4713 = vmatprep.subr.bf16.mxu0 0
  %4714 = vmatpush1.bf16.msra.mxu0 0
  %4715 = vmatprep.subr.bf16.mxu0 0
  %4716 = vmatpush1.bf16.msra.mxu0 0
  %4717 = vmatprep.subr.bf16.mxu0 0
  %4718 = vmatpush1.bf16.msra.mxu0 0
  %4719 = vmatprep.subr.bf16.mxu0 0
  %4720 = vmatpush1.bf16.msra.mxu0 0
  %4721 = vmatprep.subr.bf16.mxu0 0
  %4722 = vmatpush1.bf16.msra.mxu0 0
  %4723 = vmatprep.subr.bf16.mxu0 0
  %4724 = vmatpush1.bf16.msra.mxu0 0
  %4725 = vmatprep.subr.bf16.mxu0 0
  %4726 = vmatpush1.bf16.msra.mxu0 0
  %4727 = vmatprep.mubr.bf16.mxu0 0
  %4728 = vmatmul.mubr.bf16.gmra.mrb[0].mxu0 %v4652
  %v4729 = vpop.f32.mrb[0].mxu0
  %v4730 = vadd.f32 0.0, %v4729
  %v4731 = vpop.f32.mrb[0].mxu0
  %v4732 = vadd.f32 0.0, %v4731
  %v4733 = vpop.f32.mrb[0].mxu0
  %v4734 = vpop.f32.mrb[0].mxu0
  %4735 = vdwg.mxu0
  %4736 = vmatprep.subr.bf16.mxu0 0
  %4737 = vmatpush1.bf16.msra.mxu0 %v4615
  %4738 = vmatprep.subr.bf16.mxu0 0
  %4739 = vmatpush1.bf16.msra.mxu0 %v4620
  %4740 = vmatprep.subr.bf16.mxu0 0
  %4741 = vmatpush1.bf16.msra.mxu0 %v4625
  %4742 = vmatprep.subr.bf16.mxu0 0
  %4743 = vmatpush1.bf16.msra.mxu0 %v4630
  %4744 = vmatprep.subr.bf16.mxu0 0
  %4745 = vmatpush1.bf16.msra.mxu0 0
  %4746 = vmatprep.subr.bf16.mxu0 0
  %4747 = vmatpush1.bf16.msra.mxu0 0
  %4748 = vmatprep.subr.bf16.mxu0 0
  %4749 = vmatpush1.bf16.msra.mxu0 0
  %4750 = vmatprep.subr.bf16.mxu0 0
  %4751 = vmatpush1.bf16.msra.mxu0 0
  %4752 = vmatprep.subr.bf16.mxu0 0
  %4753 = vmatpush1.bf16.msra.mxu0 0
  %4754 = vmatprep.subr.bf16.mxu0 0
  %4755 = vmatpush1.bf16.msra.mxu0 0
  %4756 = vmatprep.subr.bf16.mxu0 0
  %4757 = vmatpush1.bf16.msra.mxu0 0
  %4758 = vmatprep.subr.bf16.mxu0 0
  %4759 = vmatpush1.bf16.msra.mxu0 0
  %4760 = vmatprep.subr.bf16.mxu0 0
  %4761 = vmatpush1.bf16.msra.mxu0 0
  %4762 = vmatprep.subr.bf16.mxu0 0
  %4763 = vmatpush1.bf16.msra.mxu0 0
  %4764 = vmatprep.subr.bf16.mxu0 0
  %4765 = vmatpush1.bf16.msra.mxu0 0
  %4766 = vmatprep.subr.bf16.mxu0 0
  %4767 = vmatpush1.bf16.msra.mxu0 0
  %4768 = vmatprep.mubr.bf16.mxu0 0
  %4769 = vmatmul.mubr.bf16.gmra.mrb[0].mxu0 %v4652
  %v4770 = vpop.f32.mrb[0].mxu0
  %v4771 = vadd.f32 0.0, %v4770
  %v4772 = vpop.f32.mrb[0].mxu0
  %v4773 = vpop.f32.mrb[0].mxu0
  %v4774 = vpop.f32.mrb[0].mxu0
  %4775 = vdwg.mxu0
  %v4776 = vadd.f32 %v4511, %v4689
  %v4777 = vadd.f32 %v4512, %v4691
  %v4778 = vadd.f32 %v4513, %v4730
  %v4779 = vadd.f32 %v4514, %v4732
  %v4780 = vadd.f32 %v4515, %v4771
  %v4781 = vld [vmem:[%s8 + $0xd] sm:$0x1]
  %v4782 = vld [vmem:[%s8 + $0x1d] sm:$0x1]
  %v4784 = vrot.slane %v4782, 7
  %v4786 = vsel %vm1350, %v4781, %v4784
  %v4787 = vpack.c.bf16 %v4786, %v4786
  %v4788 = vld [vmem:[%s5 + $0x820] sm:$0xff]
  %v4789 = vld [vmem:[%s5 + $0x828] sm:$0xff]
  %v4790 = vld [vmem:[%s5 + $0x830] sm:$0xf]
  %v4791 = vld [vmem:[%s5 + $0x834] sm:$0xff]
  %v4792 = vld [vmem:[%s5 + $0x83c] sm:$0xff]
  %v4793 = vld [vmem:[%s5 + $0x844] sm:$0xf]
  %v4794 = vld [vmem:[%s5 + $0x848] sm:$0xff]
  %v4795 = vld [vmem:[%s5 + $0x850] sm:$0xff]
  %v4796 = vld [vmem:[%s5 + $0x858] sm:$0xf]
  %v4797 = vld [vmem:[%s5 + $0x85c] sm:$0xff]
  %v4798 = vld [vmem:[%s5 + $0x864] sm:$0xff]
  %v4799 = vld [vmem:[%s5 + $0x86c] sm:$0xf]
  %v4800 = vld [vmem:[%s5 + $0x870] sm:$0xff]
  %v4801 = vld [vmem:[%s5 + $0x878] sm:$0xff]
  %v4802 = vld [vmem:[%s5 + $0x880] sm:$0xf]
  %v4803 = vld [vmem:[%s5 + $0x884] sm:$0xff]
  %v4804 = vld [vmem:[%s5 + $0x88c] sm:$0xff]
  %v4805 = vld [vmem:[%s5 + $0x894] sm:$0xf]
  %v4806 = vld [vmem:[%s5 + $0x898] sm:$0xff]
  %v4807 = vld [vmem:[%s5 + $0x8a0] sm:$0xff]
  %v4808 = vld [vmem:[%s5 + $0x8a8] sm:$0xf]
  %v4809 = vld [vmem:[%s5 + $0x8ac] sm:$0xff]
  %v4810 = vld [vmem:[%s5 + $0x8b4] sm:$0xff]
  %v4811 = vld [vmem:[%s5 + $0x8bc] sm:$0xf]
  %v4836 = vunpack.c.l.b16 %v4788
  %v4837 = vunpack.c.h.b16 %v4788
  %v4838 = vunpack.c.l.b16 %v4789
  %v4839 = vunpack.c.h.b16 %v4789
  %v4840 = vunpack.c.l.b16 %v4790
  %v4841 = vunpack.c.l.b16 %v4791
  %v4842 = vunpack.c.h.b16 %v4791
  %v4843 = vunpack.c.l.b16 %v4792
  %v4844 = vunpack.c.h.b16 %v4792
  %v4845 = vunpack.c.l.b16 %v4793
  %v4846 = vunpack.c.l.b16 %v4794
  %v4847 = vunpack.c.h.b16 %v4794
  %v4848 = vunpack.c.l.b16 %v4795
  %v4849 = vunpack.c.h.b16 %v4795
  %v4850 = vunpack.c.l.b16 %v4796
  %v4851 = vunpack.c.l.b16 %v4797
  %v4852 = vunpack.c.h.b16 %v4797
  %v4853 = vunpack.c.l.b16 %v4798
  %v4854 = vunpack.c.h.b16 %v4798
  %v4855 = vunpack.c.l.b16 %v4799
  %v4856 = vunpack.c.l.b16 %v4800
  %v4857 = vunpack.c.h.b16 %v4800
  %v4858 = vunpack.c.l.b16 %v4801
  %v4859 = vunpack.c.h.b16 %v4801
  %v4860 = vunpack.c.l.b16 %v4802
  %v4861 = vunpack.c.l.b16 %v4803
  %v4862 = vunpack.c.h.b16 %v4803
  %v4863 = vunpack.c.l.b16 %v4804
  %v4864 = vunpack.c.h.b16 %v4804
  %v4865 = vunpack.c.l.b16 %v4805
  %v4866 = vunpack.c.l.b16 %v4806
  %v4867 = vunpack.c.h.b16 %v4806
  %v4868 = vunpack.c.l.b16 %v4807
  %v4869 = vunpack.c.h.b16 %v4807
  %v4870 = vunpack.c.l.b16 %v4808
  %v4871 = vunpack.c.l.b16 %v4809
  %v4872 = vunpack.c.h.b16 %v4809
  %v4873 = vunpack.c.l.b16 %v4810
  %v4874 = vunpack.c.h.b16 %v4810
  %v4875 = vunpack.c.l.b16 %v4811
  %v4876 = vpack.c.b16 %v4841, %v4836
  %v4877 = vpack.c.b16 %v4842, %v4837
  %v4878 = vpack.c.b16 %v4843, %v4838
  %v4879 = vpack.c.b16 %v4844, %v4839
  %v4880 = vpack.c.b16 %v4845, %v4840
  %v4881 = vpack.c.b16 %v4851, %v4846
  %v4882 = vpack.c.b16 %v4852, %v4847
  %v4883 = vpack.c.b16 %v4853, %v4848
  %v4884 = vpack.c.b16 %v4854, %v4849
  %v4885 = vpack.c.b16 %v4855, %v4850
  %v4886 = vpack.c.b16 %v4861, %v4856
  %v4887 = vpack.c.b16 %v4862, %v4857
  %v4888 = vpack.c.b16 %v4863, %v4858
  %v4889 = vpack.c.b16 %v4864, %v4859
  %v4890 = vpack.c.b16 %v4865, %v4860
  %v4891 = vpack.c.b16 %v4871, %v4866
  %v4892 = vpack.c.b16 %v4872, %v4867
  %v4893 = vpack.c.b16 %v4873, %v4868
  %v4894 = vpack.c.b16 %v4874, %v4869
  %v4895 = vpack.c.b16 %v4875, %v4870
  %v4917 = vsel %vm304, %v4787, 0
  %4919 = vmatprep.subr.bf16.mxu0 %v4877
  %4920 = vmatpush1.bf16.msra.mxu0 %v4876
  %4921 = vmatprep.subr.bf16.mxu0 %v4882
  %4922 = vmatpush1.bf16.msra.mxu0 %v4881
  %4923 = vmatprep.subr.bf16.mxu0 %v4887
  %4924 = vmatpush1.bf16.msra.mxu0 %v4886
  %4925 = vmatprep.subr.bf16.mxu0 %v4892
  %4926 = vmatpush1.bf16.msra.mxu0 %v4891
  %4927 = vmatprep.subr.bf16.mxu0 0
  %4928 = vmatpush1.bf16.msra.mxu0 0
  %4929 = vmatprep.subr.bf16.mxu0 0
  %4930 = vmatpush1.bf16.msra.mxu0 0
  %4931 = vmatprep.subr.bf16.mxu0 0
  %4932 = vmatpush1.bf16.msra.mxu0 0
  %4933 = vmatprep.subr.bf16.mxu0 0
  %4934 = vmatpush1.bf16.msra.mxu0 0
  %4935 = vmatprep.subr.bf16.mxu0 0
  %4936 = vmatpush1.bf16.msra.mxu0 0
  %4937 = vmatprep.subr.bf16.mxu0 0
  %4938 = vmatpush1.bf16.msra.mxu0 0
  %4939 = vmatprep.subr.bf16.mxu0 0
  %4940 = vmatpush1.bf16.msra.mxu0 0
  %4941 = vmatprep.subr.bf16.mxu0 0
  %4942 = vmatpush1.bf16.msra.mxu0 0
  %4943 = vmatprep.subr.bf16.mxu0 0
  %4944 = vmatpush1.bf16.msra.mxu0 0
  %4945 = vmatprep.subr.bf16.mxu0 0
  %4946 = vmatpush1.bf16.msra.mxu0 0
  %4947 = vmatprep.subr.bf16.mxu0 0
  %4948 = vmatpush1.bf16.msra.mxu0 0
  %4949 = vmatprep.subr.bf16.mxu0 0
  %4950 = vmatpush1.bf16.msra.mxu0 0
  %4951 = vmatprep.mubr.bf16.mxu0 0
  %4952 = vmatmul.mubr.bf16.gmra.mrb[0].mxu0 %v4917
  %v4953 = vpop.f32.mrb[0].mxu0
  %v4954 = vadd.f32 0.0, %v4953
  %v4955 = vpop.f32.mrb[0].mxu0
  %v4956 = vadd.f32 0.0, %v4955
  %v4957 = vpop.f32.mrb[0].mxu0
  %v4958 = vpop.f32.mrb[0].mxu0
  %4959 = vdwg.mxu0
  %4960 = vmatprep.subr.bf16.mxu0 %v4879
  %4961 = vmatpush1.bf16.msra.mxu0 %v4878
  %4962 = vmatprep.subr.bf16.mxu0 %v4884
  %4963 = vmatpush1.bf16.msra.mxu0 %v4883
  %4964 = vmatprep.subr.bf16.mxu0 %v4889
  %4965 = vmatpush1.bf16.msra.mxu0 %v4888
  %4966 = vmatprep.subr.bf16.mxu0 %v4894
  %4967 = vmatpush1.bf16.msra.mxu0 %v4893
  %4968 = vmatprep.subr.bf16.mxu0 0
  %4969 = vmatpush1.bf16.msra.mxu0 0
  %4970 = vmatprep.subr.bf16.mxu0 0
  %4971 = vmatpush1.bf16.msra.mxu0 0
  %4972 = vmatprep.subr.bf16.mxu0 0
  %4973 = vmatpush1.bf16.msra.mxu0 0
  %4974 = vmatprep.subr.bf16.mxu0 0
  %4975 = vmatpush1.bf16.msra.mxu0 0
  %4976 = vmatprep.subr.bf16.mxu0 0
  %4977 = vmatpush1.bf16.msra.mxu0 0
  %4978 = vmatprep.subr.bf16.mxu0 0
  %4979 = vmatpush1.bf16.msra.mxu0 0
  %4980 = vmatprep.subr.bf16.mxu0 0
  %4981 = vmatpush1.bf16.msra.mxu0 0
  %4982 = vmatprep.subr.bf16.mxu0 0
  %4983 = vmatpush1.bf16.msra.mxu0 0
  %4984 = vmatprep.subr.bf16.mxu0 0
  %4985 = vmatpush1.bf16.msra.mxu0 0
  %4986 = vmatprep.subr.bf16.mxu0 0
  %4987 = vmatpush1.bf16.msra.mxu0 0
  %4988 = vmatprep.subr.bf16.mxu0 0
  %4989 = vmatpush1.bf16.msra.mxu0 0
  %4990 = vmatprep.subr.bf16.mxu0 0
  %4991 = vmatpush1.bf16.msra.mxu0 0
  %4992 = vmatprep.mubr.bf16.mxu0 0
  %4993 = vmatmul.mubr.bf16.gmra.mrb[0].mxu0 %v4917
  %v4994 = vpop.f32.mrb[0].mxu0
  %v4995 = vadd.f32 0.0, %v4994
  %v4996 = vpop.f32.mrb[0].mxu0
  %v4997 = vadd.f32 0.0, %v4996
  %v4998 = vpop.f32.mrb[0].mxu0
  %v4999 = vpop.f32.mrb[0].mxu0
  %5000 = vdwg.mxu0
  %5001 = vmatprep.subr.bf16.mxu0 0
  %5002 = vmatpush1.bf16.msra.mxu0 %v4880
  %5003 = vmatprep.subr.bf16.mxu0 0
  %5004 = vmatpush1.bf16.msra.mxu0 %v4885
  %5005 = vmatprep.subr.bf16.mxu0 0
  %5006 = vmatpush1.bf16.msra.mxu0 %v4890
  %5007 = vmatprep.subr.bf16.mxu0 0
  %5008 = vmatpush1.bf16.msra.mxu0 %v4895
  %5009 = vmatprep.subr.bf16.mxu0 0
  %5010 = vmatpush1.bf16.msra.mxu0 0
  %5011 = vmatprep.subr.bf16.mxu0 0
  %5012 = vmatpush1.bf16.msra.mxu0 0
  %5013 = vmatprep.subr.bf16.mxu0 0
  %5014 = vmatpush1.bf16.msra.mxu0 0
  %5015 = vmatprep.subr.bf16.mxu0 0
  %5016 = vmatpush1.bf16.msra.mxu0 0
  %5017 = vmatprep.subr.bf16.mxu0 0
  %5018 = vmatpush1.bf16.msra.mxu0 0
  %5019 = vmatprep.subr.bf16.mxu0 0
  %5020 = vmatpush1.bf16.msra.mxu0 0
  %5021 = vmatprep.subr.bf16.mxu0 0
  %5022 = vmatpush1.bf16.msra.mxu0 0
  %5023 = vmatprep.subr.bf16.mxu0 0
  %5024 = vmatpush1.bf16.msra.mxu0 0
  %5025 = vmatprep.subr.bf16.mxu0 0
  %5026 = vmatpush1.bf16.msra.mxu0 0
  %5027 = vmatprep.subr.bf16.mxu0 0
  %5028 = vmatpush1.bf16.msra.mxu0 0
  %5029 = vmatprep.subr.bf16.mxu0 0
  %5030 = vmatpush1.bf16.msra.mxu0 0
  %5031 = vmatprep.subr.bf16.mxu0 0
  %5032 = vmatpush1.bf16.msra.mxu0 0
  %5033 = vmatprep.mubr.bf16.mxu0 0
  %5034 = vmatmul.mubr.bf16.gmra.mrb[0].mxu0 %v4917
  %v5035 = vpop.f32.mrb[0].mxu0
  %v5036 = vadd.f32 0.0, %v5035
  %v5037 = vpop.f32.mrb[0].mxu0
  %v5038 = vpop.f32.mrb[0].mxu0
  %v5039 = vpop.f32.mrb[0].mxu0
  %5040 = vdwg.mxu0
  %v5041 = vadd.f32 %v4776, %v4954
  %v5042 = vadd.f32 %v4777, %v4956
  %v5043 = vadd.f32 %v4778, %v4995
  %v5044 = vadd.f32 %v4779, %v4997
  %v5045 = vadd.f32 %v4780, %v5036
  %v5046 = vld [vmem:[%s8 + $0xe] sm:$0x1]
  %v5047 = vld [vmem:[%s8 + $0x1e] sm:$0x1]
  %v5049 = vrot.slane %v5047, 7
  %v5051 = vsel %vm1350, %v5046, %v5049
  %v5052 = vpack.c.bf16 %v5051, %v5051
  %v5053 = vld [vmem:[%s5 + $0x8c0] sm:$0xff]
  %v5054 = vld [vmem:[%s5 + $0x8c8] sm:$0xff]
  %v5055 = vld [vmem:[%s5 + $0x8d0] sm:$0xf]
  %v5056 = vld [vmem:[%s5 + $0x8d4] sm:$0xff]
  %v5057 = vld [vmem:[%s5 + $0x8dc] sm:$0xff]
  %v5058 = vld [vmem:[%s5 + $0x8e4] sm:$0xf]
  %v5059 = vld [vmem:[%s5 + $0x8e8] sm:$0xff]
  %v5060 = vld [vmem:[%s5 + $0x8f0] sm:$0xff]
  %v5061 = vld [vmem:[%s5 + $0x8f8] sm:$0xf]
  %v5062 = vld [vmem:[%s5 + $0x8fc] sm:$0xff]
  %v5063 = vld [vmem:[%s5 + $0x904] sm:$0xff]
  %v5064 = vld [vmem:[%s5 + $0x90c] sm:$0xf]
  %v5065 = vld [vmem:[%s5 + $0x910] sm:$0xff]
  %v5066 = vld [vmem:[%s5 + $0x918] sm:$0xff]
  %v5067 = vld [vmem:[%s5 + $0x920] sm:$0xf]
  %v5068 = vld [vmem:[%s5 + $0x924] sm:$0xff]
  %v5069 = vld [vmem:[%s5 + $0x92c] sm:$0xff]
  %v5070 = vld [vmem:[%s5 + $0x934] sm:$0xf]
  %v5071 = vld [vmem:[%s5 + $0x938] sm:$0xff]
  %v5072 = vld [vmem:[%s5 + $0x940] sm:$0xff]
  %v5073 = vld [vmem:[%s5 + $0x948] sm:$0xf]
  %v5074 = vld [vmem:[%s5 + $0x94c] sm:$0xff]
  %v5075 = vld [vmem:[%s5 + $0x954] sm:$0xff]
  %v5076 = vld [vmem:[%s5 + $0x95c] sm:$0xf]
  %v5101 = vunpack.c.l.b16 %v5053
  %v5102 = vunpack.c.h.b16 %v5053
  %v5103 = vunpack.c.l.b16 %v5054
  %v5104 = vunpack.c.h.b16 %v5054
  %v5105 = vunpack.c.l.b16 %v5055
  %v5106 = vunpack.c.l.b16 %v5056
  %v5107 = vunpack.c.h.b16 %v5056
  %v5108 = vunpack.c.l.b16 %v5057
  %v5109 = vunpack.c.h.b16 %v5057
  %v5110 = vunpack.c.l.b16 %v5058
  %v5111 = vunpack.c.l.b16 %v5059
  %v5112 = vunpack.c.h.b16 %v5059
  %v5113 = vunpack.c.l.b16 %v5060
  %v5114 = vunpack.c.h.b16 %v5060
  %v5115 = vunpack.c.l.b16 %v5061
  %v5116 = vunpack.c.l.b16 %v5062
  %v5117 = vunpack.c.h.b16 %v5062
  %v5118 = vunpack.c.l.b16 %v5063
  %v5119 = vunpack.c.h.b16 %v5063
  %v5120 = vunpack.c.l.b16 %v5064
  %v5121 = vunpack.c.l.b16 %v5065
  %v5122 = vunpack.c.h.b16 %v5065
  %v5123 = vunpack.c.l.b16 %v5066
  %v5124 = vunpack.c.h.b16 %v5066
  %v5125 = vunpack.c.l.b16 %v5067
  %v5126 = vunpack.c.l.b16 %v5068
  %v5127 = vunpack.c.h.b16 %v5068
  %v5128 = vunpack.c.l.b16 %v5069
  %v5129 = vunpack.c.h.b16 %v5069
  %v5130 = vunpack.c.l.b16 %v5070
  %v5131 = vunpack.c.l.b16 %v5071
  %v5132 = vunpack.c.h.b16 %v5071
  %v5133 = vunpack.c.l.b16 %v5072
  %v5134 = vunpack.c.h.b16 %v5072
  %v5135 = vunpack.c.l.b16 %v5073
  %v5136 = vunpack.c.l.b16 %v5074
  %v5137 = vunpack.c.h.b16 %v5074
  %v5138 = vunpack.c.l.b16 %v5075
  %v5139 = vunpack.c.h.b16 %v5075
  %v5140 = vunpack.c.l.b16 %v5076
  %v5141 = vpack.c.b16 %v5106, %v5101
  %v5142 = vpack.c.b16 %v5107, %v5102
  %v5143 = vpack.c.b16 %v5108, %v5103
  %v5144 = vpack.c.b16 %v5109, %v5104
  %v5145 = vpack.c.b16 %v5110, %v5105
  %v5146 = vpack.c.b16 %v5116, %v5111
  %v5147 = vpack.c.b16 %v5117, %v5112
  %v5148 = vpack.c.b16 %v5118, %v5113
  %v5149 = vpack.c.b16 %v5119, %v5114
  %v5150 = vpack.c.b16 %v5120, %v5115
  %v5151 = vpack.c.b16 %v5126, %v5121
  %v5152 = vpack.c.b16 %v5127, %v5122
  %v5153 = vpack.c.b16 %v5128, %v5123
  %v5154 = vpack.c.b16 %v5129, %v5124
  %v5155 = vpack.c.b16 %v5130, %v5125
  %v5156 = vpack.c.b16 %v5136, %v5131
  %v5157 = vpack.c.b16 %v5137, %v5132
  %v5158 = vpack.c.b16 %v5138, %v5133
  %v5159 = vpack.c.b16 %v5139, %v5134
  %v5160 = vpack.c.b16 %v5140, %v5135
  %v5182 = vsel %vm304, %v5052, 0
  %5184 = vmatprep.subr.bf16.mxu0 %v5142
  %5185 = vmatpush1.bf16.msra.mxu0 %v5141
  %5186 = vmatprep.subr.bf16.mxu0 %v5147
  %5187 = vmatpush1.bf16.msra.mxu0 %v5146
  %5188 = vmatprep.subr.bf16.mxu0 %v5152
  %5189 = vmatpush1.bf16.msra.mxu0 %v5151
  %5190 = vmatprep.subr.bf16.mxu0 %v5157
  %5191 = vmatpush1.bf16.msra.mxu0 %v5156
  %5192 = vmatprep.subr.bf16.mxu0 0
  %5193 = vmatpush1.bf16.msra.mxu0 0
  %5194 = vmatprep.subr.bf16.mxu0 0
  %5195 = vmatpush1.bf16.msra.mxu0 0
  %5196 = vmatprep.subr.bf16.mxu0 0
  %5197 = vmatpush1.bf16.msra.mxu0 0
  %5198 = vmatprep.subr.bf16.mxu0 0
  %5199 = vmatpush1.bf16.msra.mxu0 0
  %5200 = vmatprep.subr.bf16.mxu0 0
  %5201 = vmatpush1.bf16.msra.mxu0 0
  %5202 = vmatprep.subr.bf16.mxu0 0
  %5203 = vmatpush1.bf16.msra.mxu0 0
  %5204 = vmatprep.subr.bf16.mxu0 0
  %5205 = vmatpush1.bf16.msra.mxu0 0
  %5206 = vmatprep.subr.bf16.mxu0 0
  %5207 = vmatpush1.bf16.msra.mxu0 0
  %5208 = vmatprep.subr.bf16.mxu0 0
  %5209 = vmatpush1.bf16.msra.mxu0 0
  %5210 = vmatprep.subr.bf16.mxu0 0
  %5211 = vmatpush1.bf16.msra.mxu0 0
  %5212 = vmatprep.subr.bf16.mxu0 0
  %5213 = vmatpush1.bf16.msra.mxu0 0
  %5214 = vmatprep.subr.bf16.mxu0 0
  %5215 = vmatpush1.bf16.msra.mxu0 0
  %5216 = vmatprep.mubr.bf16.mxu0 0
  %5217 = vmatmul.mubr.bf16.gmra.mrb[0].mxu0 %v5182
  %v5218 = vpop.f32.mrb[0].mxu0
  %v5219 = vadd.f32 0.0, %v5218
  %v5220 = vpop.f32.mrb[0].mxu0
  %v5221 = vadd.f32 0.0, %v5220
  %v5222 = vpop.f32.mrb[0].mxu0
  %v5223 = vpop.f32.mrb[0].mxu0
  %5224 = vdwg.mxu0
  %5225 = vmatprep.subr.bf16.mxu0 %v5144
  %5226 = vmatpush1.bf16.msra.mxu0 %v5143
  %5227 = vmatprep.subr.bf16.mxu0 %v5149
  %5228 = vmatpush1.bf16.msra.mxu0 %v5148
  %5229 = vmatprep.subr.bf16.mxu0 %v5154
  %5230 = vmatpush1.bf16.msra.mxu0 %v5153
  %5231 = vmatprep.subr.bf16.mxu0 %v5159
  %5232 = vmatpush1.bf16.msra.mxu0 %v5158
  %5233 = vmatprep.subr.bf16.mxu0 0
  %5234 = vmatpush1.bf16.msra.mxu0 0
  %5235 = vmatprep.subr.bf16.mxu0 0
  %5236 = vmatpush1.bf16.msra.mxu0 0
  %5237 = vmatprep.subr.bf16.mxu0 0
  %5238 = vmatpush1.bf16.msra.mxu0 0
  %5239 = vmatprep.subr.bf16.mxu0 0
  %5240 = vmatpush1.bf16.msra.mxu0 0
  %5241 = vmatprep.subr.bf16.mxu0 0
  %5242 = vmatpush1.bf16.msra.mxu0 0
  %5243 = vmatprep.subr.bf16.mxu0 0
  %5244 = vmatpush1.bf16.msra.mxu0 0
  %5245 = vmatprep.subr.bf16.mxu0 0
  %5246 = vmatpush1.bf16.msra.mxu0 0
  %5247 = vmatprep.subr.bf16.mxu0 0
  %5248 = vmatpush1.bf16.msra.mxu0 0
  %5249 = vmatprep.subr.bf16.mxu0 0
  %5250 = vmatpush1.bf16.msra.mxu0 0
  %5251 = vmatprep.subr.bf16.mxu0 0
  %5252 = vmatpush1.bf16.msra.mxu0 0
  %5253 = vmatprep.subr.bf16.mxu0 0
  %5254 = vmatpush1.bf16.msra.mxu0 0
  %5255 = vmatprep.subr.bf16.mxu0 0
  %5256 = vmatpush1.bf16.msra.mxu0 0
  %5257 = vmatprep.mubr.bf16.mxu0 0
  %5258 = vmatmul.mubr.bf16.gmra.mrb[0].mxu0 %v5182
  %v5259 = vpop.f32.mrb[0].mxu0
  %v5260 = vadd.f32 0.0, %v5259
  %v5261 = vpop.f32.mrb[0].mxu0
  %v5262 = vadd.f32 0.0, %v5261
  %v5263 = vpop.f32.mrb[0].mxu0
  %v5264 = vpop.f32.mrb[0].mxu0
  %5265 = vdwg.mxu0
  %5266 = vmatprep.subr.bf16.mxu0 0
  %5267 = vmatpush1.bf16.msra.mxu0 %v5145
  %5268 = vmatprep.subr.bf16.mxu0 0
  %5269 = vmatpush1.bf16.msra.mxu0 %v5150
  %5270 = vmatprep.subr.bf16.mxu0 0
  %5271 = vmatpush1.bf16.msra.mxu0 %v5155
  %5272 = vmatprep.subr.bf16.mxu0 0
  %5273 = vmatpush1.bf16.msra.mxu0 %v5160
  %5274 = vmatprep.subr.bf16.mxu0 0
  %5275 = vmatpush1.bf16.msra.mxu0 0
  %5276 = vmatprep.subr.bf16.mxu0 0
  %5277 = vmatpush1.bf16.msra.mxu0 0
  %5278 = vmatprep.subr.bf16.mxu0 0
  %5279 = vmatpush1.bf16.msra.mxu0 0
  %5280 = vmatprep.subr.bf16.mxu0 0
  %5281 = vmatpush1.bf16.msra.mxu0 0
  %5282 = vmatprep.subr.bf16.mxu0 0
  %5283 = vmatpush1.bf16.msra.mxu0 0
  %5284 = vmatprep.subr.bf16.mxu0 0
  %5285 = vmatpush1.bf16.msra.mxu0 0
  %5286 = vmatprep.subr.bf16.mxu0 0
  %5287 = vmatpush1.bf16.msra.mxu0 0
  %5288 = vmatprep.subr.bf16.mxu0 0
  %5289 = vmatpush1.bf16.msra.mxu0 0
  %5290 = vmatprep.subr.bf16.mxu0 0
  %5291 = vmatpush1.bf16.msra.mxu0 0
  %5292 = vmatprep.subr.bf16.mxu0 0
  %5293 = vmatpush1.bf16.msra.mxu0 0
  %5294 = vmatprep.subr.bf16.mxu0 0
  %5295 = vmatpush1.bf16.msra.mxu0 0
  %5296 = vmatprep.subr.bf16.mxu0 0
  %5297 = vmatpush1.bf16.msra.mxu0 0
  %5298 = vmatprep.mubr.bf16.mxu0 0
  %5299 = vmatmul.mubr.bf16.gmra.mrb[0].mxu0 %v5182
  %v5300 = vpop.f32.mrb[0].mxu0
  %v5301 = vadd.f32 0.0, %v5300
  %v5302 = vpop.f32.mrb[0].mxu0
  %v5303 = vpop.f32.mrb[0].mxu0
  %v5304 = vpop.f32.mrb[0].mxu0
  %5305 = vdwg.mxu0
  %v5306 = vadd.f32 %v5041, %v5219
  %v5307 = vadd.f32 %v5042, %v5221
  %v5308 = vadd.f32 %v5043, %v5260
  %v5309 = vadd.f32 %v5044, %v5262
  %v5310 = vadd.f32 %v5045, %v5301
  %v5311 = vld [vmem:[%s8 + $0xf] sm:$0x1]
  %v5312 = vld [vmem:[%s8 + $0x1f] sm:$0x1]
  %v5314 = vrot.slane %v5312, 7
  %v5316 = vsel %vm1350, %v5311, %v5314
  %v5317 = vpack.c.bf16 %v5316, %v5316
  %v5318 = vld [vmem:[%s5 + $0x960] sm:$0xff]
  %v5319 = vld [vmem:[%s5 + $0x968] sm:$0xff]
  %v5320 = vld [vmem:[%s5 + $0x970] sm:$0xf]
  %v5321 = vld [vmem:[%s5 + $0x974] sm:$0xff]
  %v5322 = vld [vmem:[%s5 + $0x97c] sm:$0xff]
  %v5323 = vld [vmem:[%s5 + $0x984] sm:$0xf]
  %v5324 = vld [vmem:[%s5 + $0x988] sm:$0xff]
  %v5325 = vld [vmem:[%s5 + $0x990] sm:$0xff]
  %v5326 = vld [vmem:[%s5 + $0x998] sm:$0xf]
  %v5327 = vld [vmem:[%s5 + $0x99c] sm:$0xff]
  %v5328 = vld [vmem:[%s5 + $0x9a4] sm:$0xff]
  %v5329 = vld [vmem:[%s5 + $0x9ac] sm:$0xf]
  %v5330 = vld [vmem:[%s5 + $0x9b0] sm:$0xff]
  %v5331 = vld [vmem:[%s5 + $0x9b8] sm:$0xff]
  %v5332 = vld [vmem:[%s5 + $0x9c0] sm:$0xf]
  %v5333 = vld [vmem:[%s5 + $0x9c4] sm:$0xff]
  %v5334 = vld [vmem:[%s5 + $0x9cc] sm:$0xff]
  %v5335 = vld [vmem:[%s5 + $0x9d4] sm:$0xf]
  %v5336 = vld [vmem:[%s5 + $0x9d8] sm:$0xff]
  %v5337 = vld [vmem:[%s5 + $0x9e0] sm:$0xff]
  %v5338 = vld [vmem:[%s5 + $0x9e8] sm:$0xf]
  %v5339 = vld [vmem:[%s5 + $0x9ec] sm:$0xff]
  %v5340 = vld [vmem:[%s5 + $0x9f4] sm:$0xff]
  %v5341 = vld [vmem:[%s5 + $0x9fc] sm:$0xf]
  %v5366 = vunpack.c.l.b16 %v5318
  %v5367 = vunpack.c.h.b16 %v5318
  %v5368 = vunpack.c.l.b16 %v5319
  %v5369 = vunpack.c.h.b16 %v5319
  %v5370 = vunpack.c.l.b16 %v5320
  %v5371 = vunpack.c.l.b16 %v5321
  %v5372 = vunpack.c.h.b16 %v5321
  %v5373 = vunpack.c.l.b16 %v5322
  %v5374 = vunpack.c.h.b16 %v5322
  %v5375 = vunpack.c.l.b16 %v5323
  %v5376 = vunpack.c.l.b16 %v5324
  %v5377 = vunpack.c.h.b16 %v5324
  %v5378 = vunpack.c.l.b16 %v5325
  %v5379 = vunpack.c.h.b16 %v5325
  %v5380 = vunpack.c.l.b16 %v5326
  %v5381 = vunpack.c.l.b16 %v5327
  %v5382 = vunpack.c.h.b16 %v5327
  %v5383 = vunpack.c.l.b16 %v5328
  %v5384 = vunpack.c.h.b16 %v5328
  %v5385 = vunpack.c.l.b16 %v5329
  %v5386 = vunpack.c.l.b16 %v5330
  %v5387 = vunpack.c.h.b16 %v5330
  %v5388 = vunpack.c.l.b16 %v5331
  %v5389 = vunpack.c.h.b16 %v5331
  %v5390 = vunpack.c.l.b16 %v5332
  %v5391 = vunpack.c.l.b16 %v5333
  %v5392 = vunpack.c.h.b16 %v5333
  %v5393 = vunpack.c.l.b16 %v5334
  %v5394 = vunpack.c.h.b16 %v5334
  %v5395 = vunpack.c.l.b16 %v5335
  %v5396 = vunpack.c.l.b16 %v5336
  %v5397 = vunpack.c.h.b16 %v5336
  %v5398 = vunpack.c.l.b16 %v5337
  %v5399 = vunpack.c.h.b16 %v5337
  %v5400 = vunpack.c.l.b16 %v5338
  %v5401 = vunpack.c.l.b16 %v5339
  %v5402 = vunpack.c.h.b16 %v5339
  %v5403 = vunpack.c.l.b16 %v5340
  %v5404 = vunpack.c.h.b16 %v5340
  %v5405 = vunpack.c.l.b16 %v5341
  %v5406 = vpack.c.b16 %v5371, %v5366
  %v5407 = vpack.c.b16 %v5372, %v5367
  %v5408 = vpack.c.b16 %v5373, %v5368
  %v5409 = vpack.c.b16 %v5374, %v5369
  %v5410 = vpack.c.b16 %v5375, %v5370
  %v5411 = vpack.c.b16 %v5381, %v5376
  %v5412 = vpack.c.b16 %v5382, %v5377
  %v5413 = vpack.c.b16 %v5383, %v5378
  %v5414 = vpack.c.b16 %v5384, %v5379
  %v5415 = vpack.c.b16 %v5385, %v5380
  %v5416 = vpack.c.b16 %v5391, %v5386
  %v5417 = vpack.c.b16 %v5392, %v5387
  %v5418 = vpack.c.b16 %v5393, %v5388
  %v5419 = vpack.c.b16 %v5394, %v5389
  %v5420 = vpack.c.b16 %v5395, %v5390
  %v5421 = vpack.c.b16 %v5401, %v5396
  %v5422 = vpack.c.b16 %v5402, %v5397
  %v5423 = vpack.c.b16 %v5403, %v5398
  %v5424 = vpack.c.b16 %v5404, %v5399
  %v5425 = vpack.c.b16 %v5405, %v5400
  %v5447 = vsel %vm304, %v5317, 0
  %5449 = vmatprep.subr.bf16.mxu0 %v5407
  %5450 = vmatpush1.bf16.msra.mxu0 %v5406
  %5451 = vmatprep.subr.bf16.mxu0 %v5412
  %5452 = vmatpush1.bf16.msra.mxu0 %v5411
  %5453 = vmatprep.subr.bf16.mxu0 %v5417
  %5454 = vmatpush1.bf16.msra.mxu0 %v5416
  %5455 = vmatprep.subr.bf16.mxu0 %v5422
  %5456 = vmatpush1.bf16.msra.mxu0 %v5421
  %5457 = vmatprep.subr.bf16.mxu0 0
  %5458 = vmatpush1.bf16.msra.mxu0 0
  %5459 = vmatprep.subr.bf16.mxu0 0
  %5460 = vmatpush1.bf16.msra.mxu0 0
  %5461 = vmatprep.subr.bf16.mxu0 0
  %5462 = vmatpush1.bf16.msra.mxu0 0
  %5463 = vmatprep.subr.bf16.mxu0 0
  %5464 = vmatpush1.bf16.msra.mxu0 0
  %5465 = vmatprep.subr.bf16.mxu0 0
  %5466 = vmatpush1.bf16.msra.mxu0 0
  %5467 = vmatprep.subr.bf16.mxu0 0
  %5468 = vmatpush1.bf16.msra.mxu0 0
  %5469 = vmatprep.subr.bf16.mxu0 0
  %5470 = vmatpush1.bf16.msra.mxu0 0
  %5471 = vmatprep.subr.bf16.mxu0 0
  %5472 = vmatpush1.bf16.msra.mxu0 0
  %5473 = vmatprep.subr.bf16.mxu0 0
  %5474 = vmatpush1.bf16.msra.mxu0 0
  %5475 = vmatprep.subr.bf16.mxu0 0
  %5476 = vmatpush1.bf16.msra.mxu0 0
  %5477 = vmatprep.subr.bf16.mxu0 0
  %5478 = vmatpush1.bf16.msra.mxu0 0
  %5479 = vmatprep.subr.bf16.mxu0 0
  %5480 = vmatpush1.bf16.msra.mxu0 0
  %5481 = vmatprep.mubr.bf16.mxu0 0
  %5482 = vmatmul.mubr.bf16.gmra.mrb[0].mxu0 %v5447
  %v5483 = vpop.f32.mrb[0].mxu0
  %v5484 = vadd.f32 0.0, %v5483
  %v5485 = vpop.f32.mrb[0].mxu0
  %v5486 = vadd.f32 0.0, %v5485
  %v5487 = vpop.f32.mrb[0].mxu0
  %v5488 = vpop.f32.mrb[0].mxu0
  %5489 = vdwg.mxu0
  %5490 = vmatprep.subr.bf16.mxu0 %v5409
  %5491 = vmatpush1.bf16.msra.mxu0 %v5408
  %5492 = vmatprep.subr.bf16.mxu0 %v5414
  %5493 = vmatpush1.bf16.msra.mxu0 %v5413
  %5494 = vmatprep.subr.bf16.mxu0 %v5419
  %5495 = vmatpush1.bf16.msra.mxu0 %v5418
  %5496 = vmatprep.subr.bf16.mxu0 %v5424
  %5497 = vmatpush1.bf16.msra.mxu0 %v5423
  %5498 = vmatprep.subr.bf16.mxu0 0
  %5499 = vmatpush1.bf16.msra.mxu0 0
  %5500 = vmatprep.subr.bf16.mxu0 0
  %5501 = vmatpush1.bf16.msra.mxu0 0
  %5502 = vmatprep.subr.bf16.mxu0 0
  %5503 = vmatpush1.bf16.msra.mxu0 0
  %5504 = vmatprep.subr.bf16.mxu0 0
  %5505 = vmatpush1.bf16.msra.mxu0 0
  %5506 = vmatprep.subr.bf16.mxu0 0
  %5507 = vmatpush1.bf16.msra.mxu0 0
  %5508 = vmatprep.subr.bf16.mxu0 0
  %5509 = vmatpush1.bf16.msra.mxu0 0
  %5510 = vmatprep.subr.bf16.mxu0 0
  %5511 = vmatpush1.bf16.msra.mxu0 0
  %5512 = vmatprep.subr.bf16.mxu0 0
  %5513 = vmatpush1.bf16.msra.mxu0 0
  %5514 = vmatprep.subr.bf16.mxu0 0
  %5515 = vmatpush1.bf16.msra.mxu0 0
  %5516 = vmatprep.subr.bf16.mxu0 0
  %5517 = vmatpush1.bf16.msra.mxu0 0
  %5518 = vmatprep.subr.bf16.mxu0 0
  %5519 = vmatpush1.bf16.msra.mxu0 0
  %5520 = vmatprep.subr.bf16.mxu0 0
  %5521 = vmatpush1.bf16.msra.mxu0 0
  %5522 = vmatprep.mubr.bf16.mxu0 0
  %5523 = vmatmul.mubr.bf16.gmra.mrb[0].mxu0 %v5447
  %v5524 = vpop.f32.mrb[0].mxu0
  %v5525 = vadd.f32 0.0, %v5524
  %v5526 = vpop.f32.mrb[0].mxu0
  %v5527 = vadd.f32 0.0, %v5526
  %v5528 = vpop.f32.mrb[0].mxu0
  %v5529 = vpop.f32.mrb[0].mxu0
  %5530 = vdwg.mxu0
  %5531 = vmatprep.subr.bf16.mxu0 0
  %5532 = vmatpush1.bf16.msra.mxu0 %v5410
  %5533 = vmatprep.subr.bf16.mxu0 0
  %5534 = vmatpush1.bf16.msra.mxu0 %v5415
  %5535 = vmatprep.subr.bf16.mxu0 0
  %5536 = vmatpush1.bf16.msra.mxu0 %v5420
  %5537 = vmatprep.subr.bf16.mxu0 0
  %5538 = vmatpush1.bf16.msra.mxu0 %v5425
  %5539 = vmatprep.subr.bf16.mxu0 0
  %5540 = vmatpush1.bf16.msra.mxu0 0
  %5541 = vmatprep.subr.bf16.mxu0 0
  %5542 = vmatpush1.bf16.msra.mxu0 0
  %5543 = vmatprep.subr.bf16.mxu0 0
  %5544 = vmatpush1.bf16.msra.mxu0 0
  %5545 = vmatprep.subr.bf16.mxu0 0
  %5546 = vmatpush1.bf16.msra.mxu0 0
  %5547 = vmatprep.subr.bf16.mxu0 0
  %5548 = vmatpush1.bf16.msra.mxu0 0
  %5549 = vmatprep.subr.bf16.mxu0 0
  %5550 = vmatpush1.bf16.msra.mxu0 0
  %5551 = vmatprep.subr.bf16.mxu0 0
  %5552 = vmatpush1.bf16.msra.mxu0 0
  %5553 = vmatprep.subr.bf16.mxu0 0
  %5554 = vmatpush1.bf16.msra.mxu0 0
  %5555 = vmatprep.subr.bf16.mxu0 0
  %5556 = vmatpush1.bf16.msra.mxu0 0
  %5557 = vmatprep.subr.bf16.mxu0 0
  %5558 = vmatpush1.bf16.msra.mxu0 0
  %5559 = vmatprep.subr.bf16.mxu0 0
  %5560 = vmatpush1.bf16.msra.mxu0 0
  %5561 = vmatprep.subr.bf16.mxu0 0
  %5562 = vmatpush1.bf16.msra.mxu0 0
  %5563 = vmatprep.mubr.bf16.mxu0 0
  %5564 = vmatmul.mubr.bf16.gmra.mrb[0].mxu0 %v5447
  %v5565 = vpop.f32.mrb[0].mxu0
  %v5566 = vadd.f32 0.0, %v5565
  %v5567 = vpop.f32.mrb[0].mxu0
  %v5568 = vpop.f32.mrb[0].mxu0
  %v5569 = vpop.f32.mrb[0].mxu0
  %5570 = vdwg.mxu0
  %v5571 = vadd.f32 %v5306, %v5484
  %v5572 = vadd.f32 %v5307, %v5486
  %v5573 = vadd.f32 %v5308, %v5525
  %v5574 = vadd.f32 %v5309, %v5527
  %v5575 = vadd.f32 %v5310, %v5566
  %v5576 = vld [vmem:[%s6] ss:$2 sm:$0x1f]
  %v5578 = vlaneseq
  %v5579 = vshrl.u32 %v5578, 7
  %v5580 = vsub.s32 0, %v5579
  %v5581 = vrot.slane %v5576, %v5580
  %v5582 = vlaneseq
  %v5583 = vshrl.u32 %v5582, 7
  %v5584 = vsub.s32 1, %v5583
  %v5585 = vrot.slane %v5576, %v5584
  %v5586 = vlaneseq
  %v5587 = vshrl.u32 %v5586, 7
  %v5588 = vsub.s32 2, %v5587
  %v5589 = vrot.slane %v5576, %v5588
  %v5590 = vlaneseq
  %v5591 = vshrl.u32 %v5590, 7
  %v5592 = vsub.s32 3, %v5591
  %v5593 = vrot.slane %v5576, %v5592
  %v5594 = vlaneseq
  %v5595 = vshrl.u32 %v5594, 7
  %v5596 = vsub.s32 4, %v5595
  %v5597 = vrot.slane %v5576, %v5596
  %v5603 = vmul.f32 %v5571, %v5581
  %v5604 = vmul.f32 %v5572, %v5585
  %v5605 = vmul.f32 %v5573, %v5589
  %v5606 = vmul.f32 %v5574, %v5593
  %v5607 = vmul.f32 %v5575, %v5597
  %s5608 = scalar_lea.vmem %s6, 1
  %v5609 = vld [vmem:[%s5608] ss:$2 sm:$0x1f]
  %v5611 = vlaneseq
  %v5612 = vshrl.u32 %v5611, 7
  %v5613 = vsub.s32 0, %v5612
  %v5614 = vrot.slane %v5609, %v5613
  %v5615 = vlaneseq
  %v5616 = vshrl.u32 %v5615, 7
  %v5617 = vsub.s32 1, %v5616
  %v5618 = vrot.slane %v5609, %v5617
  %v5619 = vlaneseq
  %v5620 = vshrl.u32 %v5619, 7
  %v5621 = vsub.s32 2, %v5620
  %v5622 = vrot.slane %v5609, %v5621
  %v5623 = vlaneseq
  %v5624 = vshrl.u32 %v5623, 7
  %v5625 = vsub.s32 3, %v5624
  %v5626 = vrot.slane %v5609, %v5625
  %v5627 = vlaneseq
  %v5628 = vshrl.u32 %v5627, 7
  %v5629 = vsub.s32 4, %v5628
  %v5630 = vrot.slane %v5609, %v5629
  %v5636 = vadd.f32 %v5603, %v5614
  %v5637 = vadd.f32 %v5604, %v5618
  %v5638 = vadd.f32 %v5605, %v5622
  %v5639 = vadd.f32 %v5606, %v5626
  %v5640 = vadd.f32 %v5607, %v5630
  %v5641 = vmax.f32 %v5636, 0.0
  %v5642 = vmax.f32 %v5637, 0.0
  %v5643 = vmax.f32 %v5638, 0.0
  %v5644 = vmax.f32 %v5639, 0.0
  %vm5645 = vcmask 517120
  %5646 = vst.msk [vmem:[%s9] sm:$0x3] %vm5645, %v5640
  %v5647 = vld [vmem:[%s4 + $0x6] sm:$0x1]
  %v5648 = vpack.c.bf16 %v5641, %v5641
  %v5649 = vpack.c.bf16 %v5642, %v5642
  %v5650 = vpack.c.bf16 %v5643, %v5643
  %v5651 = vpack.c.bf16 %v5644, %v5644
  %v5652 = vld [vmem:[%s7] sm:$0xf]
  %v5653 = vld [vmem:[%s7 + $0x4] sm:$0xf]
  %v5654 = vld [vmem:[%s7 + $0x8] sm:$0xf]
  %v5655 = vld [vmem:[%s7 + $0xc] sm:$0xf]
  %v5656 = vld [vmem:[%s7 + $0x10] sm:$0xf]
  %v5657 = vld [vmem:[%s7 + $0x14] sm:$0xf]
  %v5658 = vld [vmem:[%s7 + $0x18] sm:$0xf]
  %v5659 = vld [vmem:[%s7 + $0x1c] sm:$0xf]
  %v5660 = vld [vmem:[%s7 + $0x20] sm:$0xf]
  %v5661 = vld [vmem:[%s7 + $0x24] sm:$0xf]
  %v5662 = vld [vmem:[%s7 + $0x28] sm:$0xf]
  %v5663 = vld [vmem:[%s7 + $0x2c] sm:$0xf]
  %v5664 = vld [vmem:[%s7 + $0x30] sm:$0xf]
  %v5665 = vld [vmem:[%s7 + $0x34] sm:$0xf]
  %v5666 = vld [vmem:[%s7 + $0x38] sm:$0xf]
  %v5667 = vld [vmem:[%s7 + $0x3c] sm:$0xf]
  %v5668 = vld [vmem:[%s7 + $0x40] sm:$0xf]
  %v5669 = vld [vmem:[%s7 + $0x44] sm:$0xf]
  %v5670 = vld [vmem:[%s7 + $0x48] sm:$0xf]
  %v5671 = vld [vmem:[%s7 + $0x4c] sm:$0xf]
  %v5672 = vld [vmem:[%s7 + $0x50] sm:$0xf]
  %v5673 = vld [vmem:[%s7 + $0x54] sm:$0xf]
  %v5674 = vld [vmem:[%s7 + $0x58] sm:$0xf]
  %v5675 = vld [vmem:[%s7 + $0x5c] sm:$0xf]
  %v5676 = vld [vmem:[%s7 + $0x60] sm:$0xf]
  %v5677 = vld [vmem:[%s7 + $0x64] sm:$0xf]
  %v5678 = vld [vmem:[%s7 + $0x68] sm:$0xf]
  %v5679 = vld [vmem:[%s7 + $0x6c] sm:$0xf]
  %v5680 = vld [vmem:[%s7 + $0x70] sm:$0xf]
  %v5681 = vld [vmem:[%s7 + $0x74] sm:$0xf]
  %v5682 = vld [vmem:[%s7 + $0x78] sm:$0xf]
  %v5683 = vld [vmem:[%s7 + $0x7c] sm:$0xf]
  %v5684 = vld [vmem:[%s7 + $0x80] sm:$0xf]
  %v5685 = vld [vmem:[%s7 + $0x84] sm:$0xf]
  %v5686 = vld [vmem:[%s7 + $0x88] sm:$0xf]
  %v5687 = vld [vmem:[%s7 + $0x8c] sm:$0xf]
  %v5688 = vld [vmem:[%s7 + $0x90] sm:$0xf]
  %v5689 = vld [vmem:[%s7 + $0x94] sm:$0xf]
  %v5690 = vld [vmem:[%s7 + $0x98] sm:$0xf]
  %v5691 = vld [vmem:[%s7 + $0x9c] sm:$0xf]
  %v5692 = vld [vmem:[%s7 + $0xa0] sm:$0xf]
  %v5693 = vld [vmem:[%s7 + $0xa4] sm:$0xf]
  %v5694 = vld [vmem:[%s7 + $0xa8] sm:$0xf]
  %v5695 = vld [vmem:[%s7 + $0xac] sm:$0xf]
  %v5696 = vld [vmem:[%s7 + $0xb0] sm:$0xf]
  %v5697 = vld [vmem:[%s7 + $0xb4] sm:$0xf]
  %v5698 = vld [vmem:[%s7 + $0xb8] sm:$0xf]
  %v5699 = vld [vmem:[%s7 + $0xbc] sm:$0xf]
  %v5700 = vld [vmem:[%s7 + $0xc0] sm:$0xf]
  %v5701 = vld [vmem:[%s7 + $0xc4] sm:$0xf]
  %v5702 = vld [vmem:[%s7 + $0xc8] sm:$0xf]
  %v5703 = vld [vmem:[%s7 + $0xcc] sm:$0xf]
  %v5704 = vld [vmem:[%s7 + $0xd0] sm:$0xf]
  %v5705 = vld [vmem:[%s7 + $0xd4] sm:$0xf]
  %v5706 = vld [vmem:[%s7 + $0xd8] sm:$0xf]
  %v5707 = vld [vmem:[%s7 + $0xdc] sm:$0xf]
  %v5708 = vld [vmem:[%s7 + $0xe0] sm:$0xf]
  %v5709 = vld [vmem:[%s7 + $0xe4] sm:$0xf]
  %v5710 = vld [vmem:[%s7 + $0xe8] sm:$0xf]
  %v5711 = vld [vmem:[%s7 + $0xec] sm:$0xf]
  %v5712 = vld [vmem:[%s7 + $0xf0] sm:$0xf]
  %v5713 = vld [vmem:[%s7 + $0xf4] sm:$0xf]
  %v5714 = vld [vmem:[%s7 + $0xf8] sm:$0xf]
  %v5715 = vld [vmem:[%s7 + $0xfc] sm:$0xf]
  %v5716 = vlaneseq
  %v5717 = vshrl.u32 %v5716, 7
  %v5718 = vsub.s32 0, %v5717
  %v5719 = vrot.slane %v5647, %v5718
  %v5784 = vunpack.c.l.b16 %v5652
  %v5785 = vunpack.c.l.b16 %v5653
  %v5786 = vunpack.c.l.b16 %v5654
  %v5787 = vunpack.c.l.b16 %v5655
  %v5788 = vunpack.c.l.b16 %v5656
  %v5789 = vunpack.c.l.b16 %v5657
  %v5790 = vunpack.c.l.b16 %v5658
  %v5791 = vunpack.c.l.b16 %v5659
  %v5792 = vunpack.c.l.b16 %v5660
  %v5793 = vunpack.c.l.b16 %v5661
  %v5794 = vunpack.c.l.b16 %v5662
  %v5795 = vunpack.c.l.b16 %v5663
  %v5796 = vunpack.c.l.b16 %v5664
  %v5797 = vunpack.c.l.b16 %v5665
  %v5798 = vunpack.c.l.b16 %v5666
  %v5799 = vunpack.c.l.b16 %v5667
  %v5800 = vunpack.c.l.b16 %v5668
  %v5801 = vunpack.c.l.b16 %v5669
  %v5802 = vunpack.c.l.b16 %v5670
  %v5803 = vunpack.c.l.b16 %v5671
  %v5804 = vunpack.c.l.b16 %v5672
  %v5805 = vunpack.c.l.b16 %v5673
  %v5806 = vunpack.c.l.b16 %v5674
  %v5807 = vunpack.c.l.b16 %v5675
  %v5808 = vunpack.c.l.b16 %v5676
  %v5809 = vunpack.c.l.b16 %v5677
  %v5810 = vunpack.c.l.b16 %v5678
  %v5811 = vunpack.c.l.b16 %v5679
  %v5812 = vunpack.c.l.b16 %v5680
  %v5813 = vunpack.c.l.b16 %v5681
  %v5814 = vunpack.c.l.b16 %v5682
  %v5815 = vunpack.c.l.b16 %v5683
  %v5816 = vunpack.c.l.b16 %v5684
  %v5817 = vunpack.c.l.b16 %v5685
  %v5818 = vunpack.c.l.b16 %v5686
  %v5819 = vunpack.c.l.b16 %v5687
  %v5820 = vunpack.c.l.b16 %v5688
  %v5821 = vunpack.c.l.b16 %v5689
  %v5822 = vunpack.c.l.b16 %v5690
  %v5823 = vunpack.c.l.b16 %v5691
  %v5824 = vunpack.c.l.b16 %v5692
  %v5825 = vunpack.c.l.b16 %v5693
  %v5826 = vunpack.c.l.b16 %v5694
  %v5827 = vunpack.c.l.b16 %v5695
  %v5828 = vunpack.c.l.b16 %v5696
  %v5829 = vunpack.c.l.b16 %v5697
  %v5830 = vunpack.c.l.b16 %v5698
  %v5831 = vunpack.c.l.b16 %v5699
  %v5832 = vunpack.c.l.b16 %v5700
  %v5833 = vunpack.c.l.b16 %v5701
  %v5834 = vunpack.c.l.b16 %v5702
  %v5835 = vunpack.c.l.b16 %v5703
  %v5836 = vunpack.c.l.b16 %v5704
  %v5837 = vunpack.c.l.b16 %v5705
  %v5838 = vunpack.c.l.b16 %v5706
  %v5839 = vunpack.c.l.b16 %v5707
  %v5840 = vunpack.c.l.b16 %v5708
  %v5841 = vunpack.c.l.b16 %v5709
  %v5842 = vunpack.c.l.b16 %v5710
  %v5843 = vunpack.c.l.b16 %v5711
  %v5844 = vunpack.c.l.b16 %v5712
  %v5845 = vunpack.c.l.b16 %v5713
  %v5846 = vunpack.c.l.b16 %v5714
  %v5847 = vunpack.c.l.b16 %v5715
  %v5848 = vpack.c.b16 %v5785, %v5784
  %v5849 = vpack.c.b16 %v5787, %v5786
  %v5850 = vpack.c.b16 %v5789, %v5788
  %v5851 = vpack.c.b16 %v5791, %v5790
  %v5852 = vpack.c.b16 %v5793, %v5792
  %v5853 = vpack.c.b16 %v5795, %v5794
  %v5854 = vpack.c.b16 %v5797, %v5796
  %v5855 = vpack.c.b16 %v5799, %v5798
  %v5856 = vpack.c.b16 %v5801, %v5800
  %v5857 = vpack.c.b16 %v5803, %v5802
  %v5858 = vpack.c.b16 %v5805, %v5804
  %v5859 = vpack.c.b16 %v5807, %v5806
  %v5860 = vpack.c.b16 %v5809, %v5808
  %v5861 = vpack.c.b16 %v5811, %v5810
  %v5862 = vpack.c.b16 %v5813, %v5812
  %v5863 = vpack.c.b16 %v5815, %v5814
  %v5864 = vpack.c.b16 %v5817, %v5816
  %v5865 = vpack.c.b16 %v5819, %v5818
  %v5866 = vpack.c.b16 %v5821, %v5820
  %v5867 = vpack.c.b16 %v5823, %v5822
  %v5868 = vpack.c.b16 %v5825, %v5824
  %v5869 = vpack.c.b16 %v5827, %v5826
  %v5870 = vpack.c.b16 %v5829, %v5828
  %v5871 = vpack.c.b16 %v5831, %v5830
  %v5872 = vpack.c.b16 %v5833, %v5832
  %v5873 = vpack.c.b16 %v5835, %v5834
  %v5874 = vpack.c.b16 %v5837, %v5836
  %v5875 = vpack.c.b16 %v5839, %v5838
  %v5876 = vpack.c.b16 %v5841, %v5840
  %v5877 = vpack.c.b16 %v5843, %v5842
  %v5878 = vpack.c.b16 %v5845, %v5844
  %v5879 = vpack.c.b16 %v5847, %v5846
  %5912 = vmatprep.subr.bf16.mxu0 0
  %5913 = vmatpush1.bf16.msra.mxu0 %v5848
  %5914 = vmatprep.subr.bf16.mxu0 0
  %5915 = vmatpush1.bf16.msra.mxu0 %v5849
  %5916 = vmatprep.subr.bf16.mxu0 0
  %5917 = vmatpush1.bf16.msra.mxu0 %v5850
  %5918 = vmatprep.subr.bf16.mxu0 0
  %5919 = vmatpush1.bf16.msra.mxu0 %v5851
  %5920 = vmatprep.subr.bf16.mxu0 0
  %5921 = vmatpush1.bf16.msra.mxu0 %v5852
  %5922 = vmatprep.subr.bf16.mxu0 0
  %5923 = vmatpush1.bf16.msra.mxu0 %v5853
  %5924 = vmatprep.subr.bf16.mxu0 0
  %5925 = vmatpush1.bf16.msra.mxu0 %v5854
  %5926 = vmatprep.subr.bf16.mxu0 0
  %5927 = vmatpush1.bf16.msra.mxu0 %v5855
  %5928 = vmatprep.subr.bf16.mxu0 0
  %5929 = vmatpush1.bf16.msra.mxu0 %v5856
  %5930 = vmatprep.subr.bf16.mxu0 0
  %5931 = vmatpush1.bf16.msra.mxu0 %v5857
  %5932 = vmatprep.subr.bf16.mxu0 0
  %5933 = vmatpush1.bf16.msra.mxu0 %v5858
  %5934 = vmatprep.subr.bf16.mxu0 0
  %5935 = vmatpush1.bf16.msra.mxu0 %v5859
  %5936 = vmatprep.subr.bf16.mxu0 0
  %5937 = vmatpush1.bf16.msra.mxu0 %v5860
  %5938 = vmatprep.subr.bf16.mxu0 0
  %5939 = vmatpush1.bf16.msra.mxu0 %v5861
  %5940 = vmatprep.subr.bf16.mxu0 0
  %5941 = vmatpush1.bf16.msra.mxu0 %v5862
  %5942 = vmatprep.subr.bf16.mxu0 0
  %5943 = vmatpush1.bf16.msra.mxu0 %v5863
  %5944 = vmatprep.mubr.bf16.mxu0 %v5649
  %5945 = vmatmul.mubr.bf16.gmra.mrb[0].mxu0 %v5648
  %v5946 = vpop.f32.mrb[0].mxu0
  %v5947 = vadd.f32 %v5719, %v5946
  %v5948 = vpop.f32.mrb[0].mxu0
  %v5949 = vpop.f32.mrb[0].mxu0
  %v5950 = vpop.f32.mrb[0].mxu0
  %5951 = vdwg.mxu0
  %5952 = vmatprep.subr.bf16.mxu0 0
  %5953 = vmatpush1.bf16.msra.mxu0 %v5864
  %5954 = vmatprep.subr.bf16.mxu0 0
  %5955 = vmatpush1.bf16.msra.mxu0 %v5865
  %5956 = vmatprep.subr.bf16.mxu0 0
  %5957 = vmatpush1.bf16.msra.mxu0 %v5866
  %5958 = vmatprep.subr.bf16.mxu0 0
  %5959 = vmatpush1.bf16.msra.mxu0 %v5867
  %5960 = vmatprep.subr.bf16.mxu0 0
  %5961 = vmatpush1.bf16.msra.mxu0 %v5868
  %5962 = vmatprep.subr.bf16.mxu0 0
  %5963 = vmatpush1.bf16.msra.mxu0 %v5869
  %5964 = vmatprep.subr.bf16.mxu0 0
  %5965 = vmatpush1.bf16.msra.mxu0 %v5870
  %5966 = vmatprep.subr.bf16.mxu0 0
  %5967 = vmatpush1.bf16.msra.mxu0 %v5871
  %5968 = vmatprep.subr.bf16.mxu0 0
  %5969 = vmatpush1.bf16.msra.mxu0 %v5872
  %5970 = vmatprep.subr.bf16.mxu0 0
  %5971 = vmatpush1.bf16.msra.mxu0 %v5873
  %5972 = vmatprep.subr.bf16.mxu0 0
  %5973 = vmatpush1.bf16.msra.mxu0 %v5874
  %5974 = vmatprep.subr.bf16.mxu0 0
  %5975 = vmatpush1.bf16.msra.mxu0 %v5875
  %5976 = vmatprep.subr.bf16.mxu0 0
  %5977 = vmatpush1.bf16.msra.mxu0 %v5876
  %5978 = vmatprep.subr.bf16.mxu0 0
  %5979 = vmatpush1.bf16.msra.mxu0 %v5877
  %5980 = vmatprep.subr.bf16.mxu0 0
  %5981 = vmatpush1.bf16.msra.mxu0 %v5878
  %5982 = vmatprep.subr.bf16.mxu0 0
  %5983 = vmatpush1.bf16.msra.mxu0 %v5879
  %5984 = vmatprep.mubr.bf16.mxu0 %v5651
  %5985 = vmatmul.mubr.bf16.gmra.mrb[0].mxu0 %v5650
  %v5986 = vpop.f32.mrb[0].mxu0
  %v5987 = vadd.f32 %v5947, %v5986
  %v5988 = vpop.f32.mrb[0].mxu0
  %v5989 = vpop.f32.mrb[0].mxu0
  %v5990 = vpop.f32.mrb[0].mxu0
  %5991 = vdwg.mxu0
  %vm5992 = vcmask 123904
  %5993 = vst.msk [vmem:[%s10] sm:$0x3] %vm5992, %v5987
  // Predicated region
  $region34: #{tempcnn_wp2_forward.1} parent=0 // pred_check
    _
  $region35: #{tempcnn_wp2_forward.1} parent=0 // pred_check_branch
    %5995 = sbr.rel (0) target = $region37
  $region36: #{tempcnn_wp2_forward.1} parent=0 // pred_region
    _
  $region37: #{tempcnn_wp2_forward.1} parent=0 // pred_fallthru
    _
  // Predicated region
  $region38: #{tempcnn_wp2_forward.1} parent=0 // pred_check
    _
  $region39: #{tempcnn_wp2_forward.1} parent=0 // pred_check_branch
    %5997 = sbr.rel (0) target = $region41
  $region40: #{tempcnn_wp2_forward.1} parent=0 // pred_region
    _
  $region41: #{tempcnn_wp2_forward.1} parent=0 // pred_fallthru
    _
  // Predicated region
  $region42: #{tempcnn_wp2_forward.1} parent=0 // pred_check
    _
  $region43: #{tempcnn_wp2_forward.1} parent=0 // pred_check_branch
    %5999 = sbr.rel (0) target = $region45
  $region44: #{tempcnn_wp2_forward.1} parent=0 // pred_region
    _
  $region45: #{tempcnn_wp2_forward.1} parent=0 // pred_fallthru
    _
  // Predicated region
  $region46: #{tempcnn_wp2_forward.1} parent=0 // pred_check
    _
  $region47: #{tempcnn_wp2_forward.1} parent=0 // pred_check_branch
    %6001 = sbr.rel (0) target = $region49
  $region48: #{tempcnn_wp2_forward.1} parent=0 // pred_region
    _
  $region49: #{tempcnn_wp2_forward.1} parent=0 // pred_fallthru
    _
  // Predicated region
  $region50: #{tempcnn_wp2_forward.1} parent=0 // pred_check
    _
  $region51: #{tempcnn_wp2_forward.1} parent=0 // pred_check_branch
    %6003 = sbr.rel (0) target = $region53
  $region52: #{tempcnn_wp2_forward.1} parent=0 // pred_region
    _
  $region53: #{tempcnn_wp2_forward.1} parent=0 // pred_fallthru
    _
  // Predicated region
  $region54: #{tempcnn_wp2_forward.1} parent=0 // pred_check
    _
  $region55: #{tempcnn_wp2_forward.1} parent=0 // pred_check_branch
    %6005 = sbr.rel (0) target = $region57
  $region56: #{tempcnn_wp2_forward.1} parent=0 // pred_region
    _
  $region57: #{tempcnn_wp2_forward.1} parent=0 // pred_fallthru
    _

</llo_original>
